<compile_context>
chip_gen: v7x
topology: tpu7x:2x2x1
jax: 0.10.0
libtpu: 0.0.40
codegen_flags: <defaults>
</compile_context>

<pallas_src>
import math

import jax
import jax.numpy as jnp
from jax import lax
from jax.experimental import pallas as pl
from jax.experimental.pallas import tpu as pltpu


def encoder_kernel(emb_ref,
                   wih_f_ref, whh_f_ref, bias_f_ref, bhn_f_ref,
                   wih_b_ref, whh_b_ref, bias_b_ref, bhn_b_ref,
                   wfc_ref, bfc_ref,
                   out_ref, hid_ref,
                   gif_scr, gib_scr):
    S, B, _ = out_ref.shape          # out_ref: (S, B, 2H)
    H = whh_f_ref.shape[0]

    # ---- Hoisted input projections: one large MXU matmul per direction ----
    # bias_*_ref already contains b_ih + [b_hr, b_hz, 0] (folded in the wrapper);
    # only b_hn must stay inside r * (h @ W_hn + b_hn) per PyTorch GRU semantics.
    emb = emb_ref[...]                                           # (S*B, E)
    gif_scr[...] = (jnp.dot(emb, wih_f_ref[...],
                            preferred_element_type=jnp.float32) + bias_f_ref[...])
    gib_scr[...] = (jnp.dot(emb, wih_b_ref[...],
                            preferred_element_type=jnp.float32) + bias_b_ref[...])

    whh_f = whh_f_ref[...]
    whh_b = whh_b_ref[...]
    bhn_f = bhn_f_ref[...]
    bhn_b = bhn_b_ref[...]

    def gates(gi, gh, bhn, h):
        # PyTorch gate order in the stacked weights: (r, z, n).
        r = jax.nn.sigmoid(gi[:, 0:H] + gh[:, 0:H])
        z = jax.nn.sigmoid(gi[:, H:2 * H] + gh[:, H:2 * H])
        n = jnp.tanh(gi[:, 2 * H:3 * H] + r * (gh[:, 2 * H:3 * H] + bhn))
        return (1.0 - z) * n + z * h

    def body(i, carry):
        h_f, h_b = carry
        t_b = S - 1 - i
        # The two directions are independent: interleave them so two recurrent
        # MXU matmuls are in flight and one direction's EUP/VPU gate math hides
        # under the other's matmul.
        gh_f = jnp.dot(h_f, whh_f, preferred_element_type=jnp.float32)
        gh_b = jnp.dot(h_b, whh_b, preferred_element_type=jnp.float32)
        gi_f = gif_scr[pl.ds(i * B, B), :]
        gi_b = gib_scr[pl.ds(t_b * B, B), :]
        h_f = gates(gi_f, gh_f, bhn_f, h_f)
        h_b = gates(gi_b, gh_b, bhn_b, h_b)
        # Write each step's hidden straight into the output (no concat pass).
        out_ref[i, :, 0:H] = h_f
        out_ref[t_b, :, H:2 * H] = h_b
        return (h_f, h_b)

    h0 = jnp.zeros((B, H), jnp.float32)
    # S is small/static -> full unroll gives the scheduler cross-step visibility.
    h_f, h_b = lax.fori_loop(0, S, body, (h0, h0), unroll=True)

    # hidden = tanh(fc(concat(h_fwd_last, h_bwd_last)))
    wfc = wfc_ref[...]
    hid_ref[...] = jnp.tanh(
        jnp.dot(h_f, wfc[0:H, :], preferred_element_type=jnp.float32)
        + jnp.dot(h_b, wfc[H:2 * H, :], preferred_element_type=jnp.float32)
        + bfc_ref[...])


def encoder_forward(src, params):
    """src: (S, B) int32.  Returns (outputs (S,B,2H) f32, hidden (B,D) f32)."""
    # Embedding lookup (glue, plain JAX).
    # TODO(synk): nn.Dropout treated as identity (eval-mode); stochastic training
    # dropout not implemented.
    embedded = jnp.take(params["embedding"], src, axis=0).astype(jnp.float32)  # (S,B,E)

    S, B, E = embedded.shape
    H = params["whh_f"].shape[0]
    D = params["wfc"].shape[1]

    # Flatten (S, B, E) -> (S*B, E) outside the kernel (free metadata reshape)
    # so the kernel does one big input-projection matmul per direction.
    emb2d = embedded.reshape(S * B, E)

    # Fold b_ih + the r/z components of b_hh into a single hoisted bias; keep
    # the n-gate hidden bias separate (it lives inside r * (h @ W_hn + b_hn)).
    def fold(bih, bhh):
        bias = bih + bhh.at[:, 2 * H:].set(0.0)
        bhn = bhh[:, 2 * H:]
        return bias, bhn

    bias_f, bhn_f = fold(params["bih_f"], params["bhh_f"])
    bias_b, bhn_b = fold(params["bih_b"], params["bhh_b"])

    vmem = pl.BlockSpec(memory_space=pltpu.MemorySpace.VMEM)
    in_specs = [vmem] * 11
    out_specs = (pl.BlockSpec(memory_space=pltpu.MemorySpace.VMEM),
                 pl.BlockSpec(memory_space=pltpu.MemorySpace.VMEM))

    # TODO(synk): at production sizes (large S*B*E/H) add a batch grid with
    # BlockSpecs on emb/out and bf16 weights/activations to stay under the
    # v7x 64 MiB VMEM cap; everything fits comfortably at these shapes.
    outputs, hidden = pl.pallas_call(
        encoder_kernel,
        out_shape=(jax.ShapeDtypeStruct((S, B, 2 * H), jnp.float32),
                   jax.ShapeDtypeStruct((B, D), jnp.float32)),
        in_specs=in_specs,
        out_specs=out_specs,
        scratch_shapes=[pltpu.VMEM((S * B, 3 * H), jnp.float32),   # fwd input proj
                        pltpu.VMEM((S * B, 3 * H), jnp.float32)],  # bwd input proj
    )(emb2d,
      params["wih_f"], params["whh_f"], bias_f, bhn_f,
      params["wih_b"], params["whh_b"], bias_b, bhn_b,
      params["wfc"], params["bfc"])
    return outputs, hidden


def init_params(key, input_dim, emb_dim, enc_hid_dim, dec_hid_dim):
    ks = jax.random.split(key, 12)
    kh = 1.0 / math.sqrt(enc_hid_dim)
    kfc = 1.0 / math.sqrt(2 * enc_hid_dim)

    def u(k, shape, bound):
        return jax.random.uniform(k, shape, jnp.float32, -bound, bound)

    # Weights are stored transposed relative to PyTorch so the kernel does x @ W.
    return {
        "embedding": jax.random.normal(ks[0], (input_dim, emb_dim), jnp.float32),
        "wih_f": u(ks[1], (emb_dim, 3 * enc_hid_dim), kh),
        "whh_f": u(ks[2], (enc_hid_dim, 3 * enc_hid_dim), kh),
        "bih_f": u(ks[3], (1, 3 * enc_hid_dim), kh),
        "bhh_f": u(ks[4], (1, 3 * enc_hid_dim), kh),
        "wih_b": u(ks[5], (emb_dim, 3 * enc_hid_dim), kh),
        "whh_b": u(ks[6], (enc_hid_dim, 3 * enc_hid_dim), kh),
        "bih_b": u(ks[7], (1, 3 * enc_hid_dim), kh),
        "bhh_b": u(ks[8], (1, 3 * enc_hid_dim), kh),
        "wfc": u(ks[9], (2 * enc_hid_dim, dec_hid_dim), kfc),
        "bfc": u(ks[10], (1, dec_hid_dim), kfc),
    }


def encoder_reference(src, params):
    """Pure-JAX reference (mirrors torch semantics) for a correctness check."""
    embedded = jnp.take(params["embedding"], src, axis=0).astype(jnp.float32)
    S, B, _ = embedded.shape
    H = params["whh_f"].shape[0]

    def cell(h, x, wih, whh, bih, bhh):
        gi = x @ wih + bih
        gh = h @ whh + bhh
        i_r, i_z, i_n = jnp.split(gi, 3, axis=-1)
        h_r, h_z, h_n = jnp.split(gh, 3, axis=-1)
        r = jax.nn.sigmoid(i_r + h_r)
        z = jax.nn.sigmoid(i_z + h_z)
        n = jnp.tanh(i_n + r * h_n)
        return (1.0 - z) * n + z * h

    h0 = jnp.zeros((B, H), jnp.float32)

    def f_step(h, x):
        h2 = cell(h, x, params["wih_f"], params["whh_f"], params["bih_f"], params["bhh_f"])
        return h2, h2

    def b_step(h, x):
        h2 = cell(h, x, params["wih_b"], params["whh_b"], params["bih_b"], params["bhh_b"])
        return h2, h2

    hf_last, out_f = lax.scan(f_step, h0, embedded)
    hb_last, out_b_rev = lax.scan(b_step, h0, embedded[::-1])
    out_b = out_b_rev[::-1]
    outputs = jnp.concatenate([out_f, out_b], axis=-1)
    hidden = jnp.tanh(jnp.concatenate([hf_last, hb_last], axis=-1) @ params["wfc"]
                      + params["bfc"])
    return outputs, hidden


if __name__ == "__main__":
    INPUT_DIM = 16     # vocab size
    EMB_DIM = 32
    ENC_HID_DIM = 32
    DEC_HID_DIM = 32
    SEQ_LEN = 8
    BATCH = 2

    key = jax.random.PRNGKey(0)
    k_params, k_src = jax.random.split(key)
    params = init_params(k_params, INPUT_DIM, EMB_DIM, ENC_HID_DIM, DEC_HID_DIM)
    src = jax.random.randint(k_src, (SEQ_LEN, BATCH), 0, INPUT_DIM, dtype=jnp.int32)

    outputs, hidden = encoder_forward(src, params)
    jax.block_until_ready((outputs, hidden))

    ref_out, ref_hid = encoder_reference(src, params)
    assert outputs.shape == (SEQ_LEN, BATCH, 2 * ENC_HID_DIM)
    assert hidden.shape == (BATCH, DEC_HID_DIM)
    assert jnp.allclose(outputs, ref_out, rtol=1e-4, atol=1e-4)
    assert jnp.allclose(hidden, ref_hid, rtol=1e-4, atol=1e-4)

    print("KERNEL_OK")
</pallas_src>

<mosaic_0001>
module attributes {stable_mosaic.version = 11 : i64} {
  func.func @encoder_kernel(%arg0: memref<16x32xf32, #tpu.memory_space<vmem>>, %arg1: memref<32x96xf32, #tpu.memory_space<vmem>>, %arg2: memref<32x96xf32, #tpu.memory_space<vmem>>, %arg3: memref<1x96xf32, #tpu.memory_space<vmem>>, %arg4: memref<1x32xf32, #tpu.memory_space<vmem>>, %arg5: memref<32x96xf32, #tpu.memory_space<vmem>>, %arg6: memref<32x96xf32, #tpu.memory_space<vmem>>, %arg7: memref<1x96xf32, #tpu.memory_space<vmem>>, %arg8: memref<1x32xf32, #tpu.memory_space<vmem>>, %arg9: memref<64x32xf32, #tpu.memory_space<vmem>>, %arg10: memref<1x32xf32, #tpu.memory_space<vmem>>, %arg11: memref<8x2x64xf32, #tpu.memory_space<vmem>>, %arg12: memref<2x32xf32, #tpu.memory_space<vmem>>, %arg13: memref<16x96xf32, #tpu.memory_space<vmem>>, %arg14: memref<16x96xf32, #tpu.memory_space<vmem>>) attributes {dimension_semantics = [], scalar_prefetch = 0 : i64, scratch_operands = 2 : i64, tpu.core_type = #tpu.core_type<tc>} {
    %c0 = arith.constant 0 : index
    %c0_0 = arith.constant 0 : index
    %0 = vector.load %arg0[%c0, %c0_0] : memref<16x32xf32, #tpu.memory_space<vmem>>, vector<16x32xf32>
    %c0_1 = arith.constant 0 : index
    %c0_2 = arith.constant 0 : index
    %1 = vector.load %arg1[%c0_1, %c0_2] : memref<32x96xf32, #tpu.memory_space<vmem>>, vector<32x96xf32>
    %cst = arith.constant dense<0.000000e+00> : vector<16x96xf32>
    %2 = tpu.matmul %0, %1, %cst {dimension_numbers = #tpu.dot_dimension_numbers<[1], [0], [0], [1], [0, 0, 1, 1], [], []>} : vector<16x32xf32>, vector<32x96xf32>, vector<16x96xf32> -> vector<16x96xf32>
    %c0_3 = arith.constant 0 : index
    %c0_4 = arith.constant 0 : index
    %3 = vector.load %arg3[%c0_3, %c0_4] : memref<1x96xf32, #tpu.memory_space<vmem>>, vector<1x96xf32>
    %4 = vector.broadcast %3 : vector<1x96xf32> to vector<16x96xf32>
    %5 = arith.addf %2, %4 : vector<16x96xf32>
    %c0_5 = arith.constant 0 : index
    %c0_6 = arith.constant 0 : index
    %6 = vector.load %arg13[%c0_5, %c0_6] : memref<16x96xf32, #tpu.memory_space<vmem>>, vector<16x96xf32>
    tpu.vector_store %arg13[%c0_5, %c0_6], %5 {strides = array<i32>} : memref<16x96xf32, #tpu.memory_space<vmem>>, vector<16x96xf32>,
    %c0_7 = arith.constant 0 : index
    %c0_8 = arith.constant 0 : index
    %7 = vector.load %arg5[%c0_7, %c0_8] : memref<32x96xf32, #tpu.memory_space<vmem>>, vector<32x96xf32>
    %cst_9 = arith.constant dense<0.000000e+00> : vector<16x96xf32>
    %8 = tpu.matmul %0, %7, %cst_9 {dimension_numbers = #tpu.dot_dimension_numbers<[1], [0], [0], [1], [0, 0, 1, 1], [], []>} : vector<16x32xf32>, vector<32x96xf32>, vector<16x96xf32> -> vector<16x96xf32>
    %c0_10 = arith.constant 0 : index
    %c0_11 = arith.constant 0 : index
    %9 = vector.load %arg7[%c0_10, %c0_11] : memref<1x96xf32, #tpu.memory_space<vmem>>, vector<1x96xf32>
    %10 = vector.broadcast %9 : vector<1x96xf32> to vector<16x96xf32>
    %11 = arith.addf %8, %10 : vector<16x96xf32>
    %c0_12 = arith.constant 0 : index
    %c0_13 = arith.constant 0 : index
    %12 = vector.load %arg14[%c0_12, %c0_13] : memref<16x96xf32, #tpu.memory_space<vmem>>, vector<16x96xf32>
    tpu.vector_store %arg14[%c0_12, %c0_13], %11 {strides = array<i32>} : memref<16x96xf32, #tpu.memory_space<vmem>>, vector<16x96xf32>,
    %c0_14 = arith.constant 0 : index
    %c0_15 = arith.constant 0 : index
    %13 = vector.load %arg2[%c0_14, %c0_15] : memref<32x96xf32, #tpu.memory_space<vmem>>, vector<32x96xf32>
    %c0_16 = arith.constant 0 : index
    %c0_17 = arith.constant 0 : index
    %14 = vector.load %arg6[%c0_16, %c0_17] : memref<32x96xf32, #tpu.memory_space<vmem>>, vector<32x96xf32>
    %c0_18 = arith.constant 0 : index
    %c0_19 = arith.constant 0 : index
    %15 = vector.load %arg4[%c0_18, %c0_19] : memref<1x32xf32, #tpu.memory_space<vmem>>, vector<1x32xf32>
    %c0_20 = arith.constant 0 : index
    %c0_21 = arith.constant 0 : index
    %16 = vector.load %arg8[%c0_20, %c0_21] : memref<1x32xf32, #tpu.memory_space<vmem>>, vector<1x32xf32>
    %cst_22 = arith.constant 0.000000e+00 : f32
    %17 = vector.broadcast %cst_22 : f32 to vector<2x32xf32>
    %c0_i32 = arith.constant 0 : i32
    %c7_i32 = arith.constant 7 : i32
    %18 = arith.subi %c7_i32, %c0_i32 : i32
    %cst_23 = arith.constant dense<0.000000e+00> : vector<2x96xf32>
    %19 = tpu.matmul %17, %13, %cst_23 {dimension_numbers = #tpu.dot_dimension_numbers<[1], [0], [0], [1], [0, 0, 1, 1], [], []>} : vector<2x32xf32>, vector<32x96xf32>, vector<2x96xf32> -> vector<2x96xf32>
    %cst_24 = arith.constant dense<0.000000e+00> : vector<2x96xf32>
    %20 = tpu.matmul %17, %14, %cst_24 {dimension_numbers = #tpu.dot_dimension_numbers<[1], [0], [0], [1], [0, 0, 1, 1], [], []>} : vector<2x32xf32>, vector<32x96xf32>, vector<2x96xf32> -> vector<2x96xf32>
    %c2_i32 = arith.constant 2 : i32
    %21 = arith.muli %c0_i32, %c2_i32 : i32
    %22 = arith.index_cast %21 : i32 to index
    %c0_25 = arith.constant 0 : index
    %23 = vector.load %arg13[%22, %c0_25] : memref<16x96xf32, #tpu.memory_space<vmem>>, vector<2x96xf32>
    %c2_i32_26 = arith.constant 2 : i32
    %24 = arith.muli %18, %c2_i32_26 : i32
    %25 = arith.index_cast %24 : i32 to index
    %c0_27 = arith.constant 0 : index
    %26 = vector.load %arg14[%25, %c0_27] : memref<16x96xf32, #tpu.memory_space<vmem>>, vector<2x96xf32>
    %27 = vector.extract_strided_slice %23 {offsets = [0, 0], sizes = [2, 32], strides = [1, 1]} : vector<2x96xf32> to vector<2x32xf32>
    %28 = vector.extract_strided_slice %19 {offsets = [0, 0], sizes = [2, 32], strides = [1, 1]} : vector<2x96xf32> to vector<2x32xf32>
    %29 = arith.addf %27, %28 : vector<2x32xf32>
    %30 = arith.negf %29 : vector<2x32xf32>
    %31 = math.exp %30 : vector<2x32xf32>
    %cst_28 = arith.constant 1.000000e+00 : f32
    %32 = vector.broadcast %cst_28 : f32 to vector<2x32xf32>
    %33 = arith.addf %32, %31 : vector<2x32xf32>
    %34 = arith.divf %32, %33 : vector<2x32xf32>
    %35 = vector.extract_strided_slice %23 {offsets = [0, 32], sizes = [2, 32], strides = [1, 1]} : vector<2x96xf32> to vector<2x32xf32>
    %36 = vector.extract_strided_slice %19 {offsets = [0, 32], sizes = [2, 32], strides = [1, 1]} : vector<2x96xf32> to vector<2x32xf32>
    %37 = arith.addf %35, %36 : vector<2x32xf32>
    %38 = arith.negf %37 : vector<2x32xf32>
    %39 = math.exp %38 : vector<2x32xf32>
    %cst_29 = arith.constant 1.000000e+00 : f32
    %40 = vector.broadcast %cst_29 : f32 to vector<2x32xf32>
    %41 = arith.addf %40, %39 : vector<2x32xf32>
    %42 = arith.divf %40, %41 : vector<2x32xf32>
    %43 = vector.extract_strided_slice %23 {offsets = [0, 64], sizes = [2, 32], strides = [1, 1]} : vector<2x96xf32> to vector<2x32xf32>
    %44 = vector.extract_strided_slice %19 {offsets = [0, 64], sizes = [2, 32], strides = [1, 1]} : vector<2x96xf32> to vector<2x32xf32>
    %45 = vector.broadcast %15 : vector<1x32xf32> to vector<2x32xf32>
    %46 = arith.addf %44, %45 : vector<2x32xf32>
    %47 = arith.mulf %34, %46 : vector<2x32xf32>
    %48 = arith.addf %43, %47 : vector<2x32xf32>
    %49 = math.tanh %48 : vector<2x32xf32>
    %cst_30 = arith.constant 1.000000e+00 : f32
    %50 = vector.broadcast %cst_30 : f32 to vector<2x32xf32>
    %51 = arith.subf %50, %42 : vector<2x32xf32>
    %52 = arith.mulf %51, %49 : vector<2x32xf32>
    %53 = arith.mulf %42, %17 : vector<2x32xf32>
    %54 = arith.addf %52, %53 : vector<2x32xf32>
    %55 = vector.extract_strided_slice %26 {offsets = [0, 0], sizes = [2, 32], strides = [1, 1]} : vector<2x96xf32> to vector<2x32xf32>
    %56 = vector.extract_strided_slice %20 {offsets = [0, 0], sizes = [2, 32], strides = [1, 1]} : vector<2x96xf32> to vector<2x32xf32>
    %57 = arith.addf %55, %56 : vector<2x32xf32>
    %58 = arith.negf %57 : vector<2x32xf32>
    %59 = math.exp %58 : vector<2x32xf32>
    %cst_31 = arith.constant 1.000000e+00 : f32
    %60 = vector.broadcast %cst_31 : f32 to vector<2x32xf32>
    %61 = arith.addf %60, %59 : vector<2x32xf32>
    %62 = arith.divf %60, %61 : vector<2x32xf32>
    %63 = vector.extract_strided_slice %26 {offsets = [0, 32], sizes = [2, 32], strides = [1, 1]} : vector<2x96xf32> to vector<2x32xf32>
    %64 = vector.extract_strided_slice %20 {offsets = [0, 32], sizes = [2, 32], strides = [1, 1]} : vector<2x96xf32> to vector<2x32xf32>
    %65 = arith.addf %63, %64 : vector<2x32xf32>
    %66 = arith.negf %65 : vector<2x32xf32>
    %67 = math.exp %66 : vector<2x32xf32>
    %cst_32 = arith.constant 1.000000e+00 : f32
    %68 = vector.broadcast %cst_32 : f32 to vector<2x32xf32>
    %69 = arith.addf %68, %67 : vector<2x32xf32>
    %70 = arith.divf %68, %69 : vector<2x32xf32>
    %71 = vector.extract_strided_slice %26 {offsets = [0, 64], sizes = [2, 32], strides = [1, 1]} : vector<2x96xf32> to vector<2x32xf32>
    %72 = vector.extract_strided_slice %20 {offsets = [0, 64], sizes = [2, 32], strides = [1, 1]} : vector<2x96xf32> to vector<2x32xf32>
    %73 = vector.broadcast %16 : vector<1x32xf32> to vector<2x32xf32>
    %74 = arith.addf %72, %73 : vector<2x32xf32>
    %75 = arith.mulf %62, %74 : vector<2x32xf32>
    %76 = arith.addf %71, %75 : vector<2x32xf32>
    %77 = math.tanh %76 : vector<2x32xf32>
    %cst_33 = arith.constant 1.000000e+00 : f32
    %78 = vector.broadcast %cst_33 : f32 to vector<2x32xf32>
    %79 = arith.subf %78, %70 : vector<2x32xf32>
    %80 = arith.mulf %79, %77 : vector<2x32xf32>
    %81 = arith.mulf %70, %17 : vector<2x32xf32>
    %82 = arith.addf %80, %81 : vector<2x32xf32>
    %83 = arith.index_cast %c0_i32 : i32 to index
    %c0_34 = arith.constant 0 : index
    %c0_35 = arith.constant 0 : index
    %84 = vector.load %arg11[%83, %c0_34, %c0_35] : memref<8x2x64xf32, #tpu.memory_space<vmem>>, vector<1x2x32xf32>
    %85 = vector.shape_cast %84 : vector<1x2x32xf32> to vector<2x32xf32>
    %86 = vector.shape_cast %54 : vector<2x32xf32> to vector<1x2x32xf32>
    tpu.vector_store %arg11[%83, %c0_34, %c0_35], %86 {strides = array<i32>} : memref<8x2x64xf32, #tpu.memory_space<vmem>>, vector<1x2x32xf32>,
    %87 = arith.index_cast %18 : i32 to index
    %c0_36 = arith.constant 0 : index
    %c32 = arith.constant 32 : index
    %88 = vector.load %arg11[%87, %c0_36, %c32] : memref<8x2x64xf32, #tpu.memory_space<vmem>>, vector<1x2x32xf32>
    %89 = vector.shape_cast %88 : vector<1x2x32xf32> to vector<2x32xf32>
    %90 = vector.shape_cast %82 : vector<2x32xf32> to vector<1x2x32xf32>
    tpu.vector_store %arg11[%87, %c0_36, %c32], %90 {strides = array<i32>} : memref<8x2x64xf32, #tpu.memory_space<vmem>>, vector<1x2x32xf32>,
    %c1_i32 = arith.constant 1 : i32
    %c7_i32_37 = arith.constant 7 : i32
    %91 = arith.subi %c7_i32_37, %c1_i32 : i32
    %cst_38 = arith.constant dense<0.000000e+00> : vector<2x96xf32>
    %92 = tpu.matmul %54, %13, %cst_38 {dimension_numbers = #tpu.dot_dimension_numbers<[1], [0], [0], [1], [0, 0, 1, 1], [], []>} : vector<2x32xf32>, vector<32x96xf32>, vector<2x96xf32> -> vector<2x96xf32>
    %cst_39 = arith.constant dense<0.000000e+00> : vector<2x96xf32>
    %93 = tpu.matmul %82, %14, %cst_39 {dimension_numbers = #tpu.dot_dimension_numbers<[1], [0], [0], [1], [0, 0, 1, 1], [], []>} : vector<2x32xf32>, vector<32x96xf32>, vector<2x96xf32> -> vector<2x96xf32>
    %c2_i32_40 = arith.constant 2 : i32
    %94 = arith.muli %c1_i32, %c2_i32_40 : i32
    %95 = arith.index_cast %94 : i32 to index
    %c0_41 = arith.constant 0 : index
    %96 = vector.load %arg13[%95, %c0_41] : memref<16x96xf32, #tpu.memory_space<vmem>>, vector<2x96xf32>
    %c2_i32_42 = arith.constant 2 : i32
    %97 = arith.muli %91, %c2_i32_42 : i32
    %98 = arith.index_cast %97 : i32 to index
    %c0_43 = arith.constant 0 : index
    %99 = vector.load %arg14[%98, %c0_43] : memref<16x96xf32, #tpu.memory_space<vmem>>, vector<2x96xf32>
    %100 = vector.extract_strided_slice %96 {offsets = [0, 0], sizes = [2, 32], strides = [1, 1]} : vector<2x96xf32> to vector<2x32xf32>
    %101 = vector.extract_strided_slice %92 {offsets = [0, 0], sizes = [2, 32], strides = [1, 1]} : vector<2x96xf32> to vector<2x32xf32>
    %102 = arith.addf %100, %101 : vector<2x32xf32>
    %103 = arith.negf %102 : vector<2x32xf32>
    %104 = math.exp %103 : vector<2x32xf32>
    %cst_44 = arith.constant 1.000000e+00 : f32
    %105 = vector.broadcast %cst_44 : f32 to vector<2x32xf32>
    %106 = arith.addf %105, %104 : vector<2x32xf32>
    %107 = arith.divf %105, %106 : vector<2x32xf32>
    %108 = vector.extract_strided_slice %96 {offsets = [0, 32], sizes = [2, 32], strides = [1, 1]} : vector<2x96xf32> to vector<2x32xf32>
    %109 = vector.extract_strided_slice %92 {offsets = [0, 32], sizes = [2, 32], strides = [1, 1]} : vector<2x96xf32> to vector<2x32xf32>
    %110 = arith.addf %108, %109 : vector<2x32xf32>
    %111 = arith.negf %110 : vector<2x32xf32>
    %112 = math.exp %111 : vector<2x32xf32>
    %cst_45 = arith.constant 1.000000e+00 : f32
    %113 = vector.broadcast %cst_45 : f32 to vector<2x32xf32>
    %114 = arith.addf %113, %112 : vector<2x32xf32>
    %115 = arith.divf %113, %114 : vector<2x32xf32>
    %116 = vector.extract_strided_slice %96 {offsets = [0, 64], sizes = [2, 32], strides = [1, 1]} : vector<2x96xf32> to vector<2x32xf32>
    %117 = vector.extract_strided_slice %92 {offsets = [0, 64], sizes = [2, 32], strides = [1, 1]} : vector<2x96xf32> to vector<2x32xf32>
    %118 = vector.broadcast %15 : vector<1x32xf32> to vector<2x32xf32>
    %119 = arith.addf %117, %118 : vector<2x32xf32>
    %120 = arith.mulf %107, %119 : vector<2x32xf32>
    %121 = arith.addf %116, %120 : vector<2x32xf32>
    %122 = math.tanh %121 : vector<2x32xf32>
    %cst_46 = arith.constant 1.000000e+00 : f32
    %123 = vector.broadcast %cst_46 : f32 to vector<2x32xf32>
    %124 = arith.subf %123, %115 : vector<2x32xf32>
    %125 = arith.mulf %124, %122 : vector<2x32xf32>
    %126 = arith.mulf %115, %54 : vector<2x32xf32>
    %127 = arith.addf %125, %126 : vector<2x32xf32>
    %128 = vector.extract_strided_slice %99 {offsets = [0, 0], sizes = [2, 32], strides = [1, 1]} : vector<2x96xf32> to vector<2x32xf32>
    %129 = vector.extract_strided_slice %93 {offsets = [0, 0], sizes = [2, 32], strides = [1, 1]} : vector<2x96xf32> to vector<2x32xf32>
    %130 = arith.addf %128, %129 : vector<2x32xf32>
    %131 = arith.negf %130 : vector<2x32xf32>
    %132 = math.exp %131 : vector<2x32xf32>
    %cst_47 = arith.constant 1.000000e+00 : f32
    %133 = vector.broadcast %cst_47 : f32 to vector<2x32xf32>
    %134 = arith.addf %133, %132 : vector<2x32xf32>
    %135 = arith.divf %133, %134 : vector<2x32xf32>
    %136 = vector.extract_strided_slice %99 {offsets = [0, 32], sizes = [2, 32], strides = [1, 1]} : vector<2x96xf32> to vector<2x32xf32>
    %137 = vector.extract_strided_slice %93 {offsets = [0, 32], sizes = [2, 32], strides = [1, 1]} : vector<2x96xf32> to vector<2x32xf32>
    %138 = arith.addf %136, %137 : vector<2x32xf32>
    %139 = arith.negf %138 : vector<2x32xf32>
    %140 = math.exp %139 : vector<2x32xf32>
    %cst_48 = arith.constant 1.000000e+00 : f32
    %141 = vector.broadcast %cst_48 : f32 to vector<2x32xf32>
    %142 = arith.addf %141, %140 : vector<2x32xf32>
    %143 = arith.divf %141, %142 : vector<2x32xf32>
    %144 = vector.extract_strided_slice %99 {offsets = [0, 64], sizes = [2, 32], strides = [1, 1]} : vector<2x96xf32> to vector<2x32xf32>
    %145 = vector.extract_strided_slice %93 {offsets = [0, 64], sizes = [2, 32], strides = [1, 1]} : vector<2x96xf32> to vector<2x32xf32>
    %146 = vector.broadcast %16 : vector<1x32xf32> to vector<2x32xf32>
    %147 = arith.addf %145, %146 : vector<2x32xf32>
    %148 = arith.mulf %135, %147 : vector<2x32xf32>
    %149 = arith.addf %144, %148 : vector<2x32xf32>
    %150 = math.tanh %149 : vector<2x32xf32>
    %cst_49 = arith.constant 1.000000e+00 : f32
    %151 = vector.broadcast %cst_49 : f32 to vector<2x32xf32>
    %152 = arith.subf %151, %143 : vector<2x32xf32>
    %153 = arith.mulf %152, %150 : vector<2x32xf32>
    %154 = arith.mulf %143, %82 : vector<2x32xf32>
    %155 = arith.addf %153, %154 : vector<2x32xf32>
    %156 = arith.index_cast %c1_i32 : i32 to index
    %c0_50 = arith.constant 0 : index
    %c0_51 = arith.constant 0 : index
    %157 = vector.load %arg11[%156, %c0_50, %c0_51] : memref<8x2x64xf32, #tpu.memory_space<vmem>>, vector<1x2x32xf32>
    %158 = vector.shape_cast %157 : vector<1x2x32xf32> to vector<2x32xf32>
    %159 = vector.shape_cast %127 : vector<2x32xf32> to vector<1x2x32xf32>
    tpu.vector_store %arg11[%156, %c0_50, %c0_51], %159 {strides = array<i32>} : memref<8x2x64xf32, #tpu.memory_space<vmem>>, vector<1x2x32xf32>,
    %160 = arith.index_cast %91 : i32 to index
    %c0_52 = arith.constant 0 : index
    %c32_53 = arith.constant 32 : index
    %161 = vector.load %arg11[%160, %c0_52, %c32_53] : memref<8x2x64xf32, #tpu.memory_space<vmem>>, vector<1x2x32xf32>
    %162 = vector.shape_cast %161 : vector<1x2x32xf32> to vector<2x32xf32>
    %163 = vector.shape_cast %155 : vector<2x32xf32> to vector<1x2x32xf32>
    tpu.vector_store %arg11[%160, %c0_52, %c32_53], %163 {strides = array<i32>} : memref<8x2x64xf32, #tpu.memory_space<vmem>>, vector<1x2x32xf32>,
    %c2_i32_54 = arith.constant 2 : i32
    %c7_i32_55 = arith.constant 7 : i32
    %164 = arith.subi %c7_i32_55, %c2_i32_54 : i32
    %cst_56 = arith.constant dense<0.000000e+00> : vector<2x96xf32>
    %165 = tpu.matmul %127, %13, %cst_56 {dimension_numbers = #tpu.dot_dimension_numbers<[1], [0], [0], [1], [0, 0, 1, 1], [], []>} : vector<2x32xf32>, vector<32x96xf32>, vector<2x96xf32> -> vector<2x96xf32>
    %cst_57 = arith.constant dense<0.000000e+00> : vector<2x96xf32>
    %166 = tpu.matmul %155, %14, %cst_57 {dimension_numbers = #tpu.dot_dimension_numbers<[1], [0], [0], [1], [0, 0, 1, 1], [], []>} : vector<2x32xf32>, vector<32x96xf32>, vector<2x96xf32> -> vector<2x96xf32>
    %c2_i32_58 = arith.constant 2 : i32
    %167 = arith.muli %c2_i32_54, %c2_i32_58 : i32
    %168 = arith.index_cast %167 : i32 to index
    %c0_59 = arith.constant 0 : index
    %169 = vector.load %arg13[%168, %c0_59] : memref<16x96xf32, #tpu.memory_space<vmem>>, vector<2x96xf32>
    %c2_i32_60 = arith.constant 2 : i32
    %170 = arith.muli %164, %c2_i32_60 : i32
    %171 = arith.index_cast %170 : i32 to index
    %c0_61 = arith.constant 0 : index
    %172 = vector.load %arg14[%171, %c0_61] : memref<16x96xf32, #tpu.memory_space<vmem>>, vector<2x96xf32>
    %173 = vector.extract_strided_slice %169 {offsets = [0, 0], sizes = [2, 32], strides = [1, 1]} : vector<2x96xf32> to vector<2x32xf32>
    %174 = vector.extract_strided_slice %165 {offsets = [0, 0], sizes = [2, 32], strides = [1, 1]} : vector<2x96xf32> to vector<2x32xf32>
    %175 = arith.addf %173, %174 : vector<2x32xf32>
    %176 = arith.negf %175 : vector<2x32xf32>
    %177 = math.exp %176 : vector<2x32xf32>
    %cst_62 = arith.constant 1.000000e+00 : f32
    %178 = vector.broadcast %cst_62 : f32 to vector<2x32xf32>
    %179 = arith.addf %178, %177 : vector<2x32xf32>
    %180 = arith.divf %178, %179 : vector<2x32xf32>
    %181 = vector.extract_strided_slice %169 {offsets = [0, 32], sizes = [2, 32], strides = [1, 1]} : vector<2x96xf32> to vector<2x32xf32>
    %182 = vector.extract_strided_slice %165 {offsets = [0, 32], sizes = [2, 32], strides = [1, 1]} : vector<2x96xf32> to vector<2x32xf32>
    %183 = arith.addf %181, %182 : vector<2x32xf32>
    %184 = arith.negf %183 : vector<2x32xf32>
    %185 = math.exp %184 : vector<2x32xf32>
    %cst_63 = arith.constant 1.000000e+00 : f32
    %186 = vector.broadcast %cst_63 : f32 to vector<2x32xf32>
    %187 = arith.addf %186, %185 : vector<2x32xf32>
    %188 = arith.divf %186, %187 : vector<2x32xf32>
    %189 = vector.extract_strided_slice %169 {offsets = [0, 64], sizes = [2, 32], strides = [1, 1]} : vector<2x96xf32> to vector<2x32xf32>
    %190 = vector.extract_strided_slice %165 {offsets = [0, 64], sizes = [2, 32], strides = [1, 1]} : vector<2x96xf32> to vector<2x32xf32>
    %191 = vector.broadcast %15 : vector<1x32xf32> to vector<2x32xf32>
    %192 = arith.addf %190, %191 : vector<2x32xf32>
    %193 = arith.mulf %180, %192 : vector<2x32xf32>
    %194 = arith.addf %189, %193 : vector<2x32xf32>
    %195 = math.tanh %194 : vector<2x32xf32>
    %cst_64 = arith.constant 1.000000e+00 : f32
    %196 = vector.broadcast %cst_64 : f32 to vector<2x32xf32>
    %197 = arith.subf %196, %188 : vector<2x32xf32>
    %198 = arith.mulf %197, %195 : vector<2x32xf32>
    %199 = arith.mulf %188, %127 : vector<2x32xf32>
    %200 = arith.addf %198, %199 : vector<2x32xf32>
    %201 = vector.extract_strided_slice %172 {offsets = [0, 0], sizes = [2, 32], strides = [1, 1]} : vector<2x96xf32> to vector<2x32xf32>
    %202 = vector.extract_strided_slice %166 {offsets = [0, 0], sizes = [2, 32], strides = [1, 1]} : vector<2x96xf32> to vector<2x32xf32>
    %203 = arith.addf %201, %202 : vector<2x32xf32>
    %204 = arith.negf %203 : vector<2x32xf32>
    %205 = math.exp %204 : vector<2x32xf32>
    %cst_65 = arith.constant 1.000000e+00 : f32
    %206 = vector.broadcast %cst_65 : f32 to vector<2x32xf32>
    %207 = arith.addf %206, %205 : vector<2x32xf32>
    %208 = arith.divf %206, %207 : vector<2x32xf32>
    %209 = vector.extract_strided_slice %172 {offsets = [0, 32], sizes = [2, 32], strides = [1, 1]} : vector<2x96xf32> to vector<2x32xf32>
    %210 = vector.extract_strided_slice %166 {offsets = [0, 32], sizes = [2, 32], strides = [1, 1]} : vector<2x96xf32> to vector<2x32xf32>
    %211 = arith.addf %209, %210 : vector<2x32xf32>
    %212 = arith.negf %211 : vector<2x32xf32>
    %213 = math.exp %212 : vector<2x32xf32>
    %cst_66 = arith.constant 1.000000e+00 : f32
    %214 = vector.broadcast %cst_66 : f32 to vector<2x32xf32>
    %215 = arith.addf %214, %213 : vector<2x32xf32>
    %216 = arith.divf %214, %215 : vector<2x32xf32>
    %217 = vector.extract_strided_slice %172 {offsets = [0, 64], sizes = [2, 32], strides = [1, 1]} : vector<2x96xf32> to vector<2x32xf32>
    %218 = vector.extract_strided_slice %166 {offsets = [0, 64], sizes = [2, 32], strides = [1, 1]} : vector<2x96xf32> to vector<2x32xf32>
    %219 = vector.broadcast %16 : vector<1x32xf32> to vector<2x32xf32>
    %220 = arith.addf %218, %219 : vector<2x32xf32>
    %221 = arith.mulf %208, %220 : vector<2x32xf32>
    %222 = arith.addf %217, %221 : vector<2x32xf32>
    %223 = math.tanh %222 : vector<2x32xf32>
    %cst_67 = arith.constant 1.000000e+00 : f32
    %224 = vector.broadcast %cst_67 : f32 to vector<2x32xf32>
    %225 = arith.subf %224, %216 : vector<2x32xf32>
    %226 = arith.mulf %225, %223 : vector<2x32xf32>
    %227 = arith.mulf %216, %155 : vector<2x32xf32>
    %228 = arith.addf %226, %227 : vector<2x32xf32>
    %229 = arith.index_cast %c2_i32_54 : i32 to index
    %c0_68 = arith.constant 0 : index
    %c0_69 = arith.constant 0 : index
    %230 = vector.load %arg11[%229, %c0_68, %c0_69] : memref<8x2x64xf32, #tpu.memory_space<vmem>>, vector<1x2x32xf32>
    %231 = vector.shape_cast %230 : vector<1x2x32xf32> to vector<2x32xf32>
    %232 = vector.shape_cast %200 : vector<2x32xf32> to vector<1x2x32xf32>
    tpu.vector_store %arg11[%229, %c0_68, %c0_69], %232 {strides = array<i32>} : memref<8x2x64xf32, #tpu.memory_space<vmem>>, vector<1x2x32xf32>,
    %233 = arith.index_cast %164 : i32 to index
    %c0_70 = arith.constant 0 : index
    %c32_71 = arith.constant 32 : index
    %234 = vector.load %arg11[%233, %c0_70, %c32_71] : memref<8x2x64xf32, #tpu.memory_space<vmem>>, vector<1x2x32xf32>
    %235 = vector.shape_cast %234 : vector<1x2x32xf32> to vector<2x32xf32>
    %236 = vector.shape_cast %228 : vector<2x32xf32> to vector<1x2x32xf32>
    tpu.vector_store %arg11[%233, %c0_70, %c32_71], %236 {strides = array<i32>} : memref<8x2x64xf32, #tpu.memory_space<vmem>>, vector<1x2x32xf32>,
    %c3_i32 = arith.constant 3 : i32
    %c7_i32_72 = arith.constant 7 : i32
    %237 = arith.subi %c7_i32_72, %c3_i32 : i32
    %cst_73 = arith.constant dense<0.000000e+00> : vector<2x96xf32>
    %238 = tpu.matmul %200, %13, %cst_73 {dimension_numbers = #tpu.dot_dimension_numbers<[1], [0], [0], [1], [0, 0, 1, 1], [], []>} : vector<2x32xf32>, vector<32x96xf32>, vector<2x96xf32> -> vector<2x96xf32>
    %cst_74 = arith.constant dense<0.000000e+00> : vector<2x96xf32>
    %239 = tpu.matmul %228, %14, %cst_74 {dimension_numbers = #tpu.dot_dimension_numbers<[1], [0], [0], [1], [0, 0, 1, 1], [], []>} : vector<2x32xf32>, vector<32x96xf32>, vector<2x96xf32> -> vector<2x96xf32>
    %c2_i32_75 = arith.constant 2 : i32
    %240 = arith.muli %c3_i32, %c2_i32_75 : i32
    %241 = arith.index_cast %240 : i32 to index
    %c0_76 = arith.constant 0 : index
    %242 = vector.load %arg13[%241, %c0_76] : memref<16x96xf32, #tpu.memory_space<vmem>>, vector<2x96xf32>
    %c2_i32_77 = arith.constant 2 : i32
    %243 = arith.muli %237, %c2_i32_77 : i32
    %244 = arith.index_cast %243 : i32 to index
    %c0_78 = arith.constant 0 : index
    %245 = vector.load %arg14[%244, %c0_78] : memref<16x96xf32, #tpu.memory_space<vmem>>, vector<2x96xf32>
    %246 = vector.extract_strided_slice %242 {offsets = [0, 0], sizes = [2, 32], strides = [1, 1]} : vector<2x96xf32> to vector<2x32xf32>
    %247 = vector.extract_strided_slice %238 {offsets = [0, 0], sizes = [2, 32], strides = [1, 1]} : vector<2x96xf32> to vector<2x32xf32>
    %248 = arith.addf %246, %247 : vector<2x32xf32>
    %249 = arith.negf %248 : vector<2x32xf32>
    %250 = math.exp %249 : vector<2x32xf32>
    %cst_79 = arith.constant 1.000000e+00 : f32
    %251 = vector.broadcast %cst_79 : f32 to vector<2x32xf32>
    %252 = arith.addf %251, %250 : vector<2x32xf32>
    %253 = arith.divf %251, %252 : vector<2x32xf32>
    %254 = vector.extract_strided_slice %242 {offsets = [0, 32], sizes = [2, 32], strides = [1, 1]} : vector<2x96xf32> to vector<2x32xf32>
    %255 = vector.extract_strided_slice %238 {offsets = [0, 32], sizes = [2, 32], strides = [1, 1]} : vector<2x96xf32> to vector<2x32xf32>
    %256 = arith.addf %254, %255 : vector<2x32xf32>
    %257 = arith.negf %256 : vector<2x32xf32>
    %258 = math.exp %257 : vector<2x32xf32>
    %cst_80 = arith.constant 1.000000e+00 : f32
    %259 = vector.broadcast %cst_80 : f32 to vector<2x32xf32>
    %260 = arith.addf %259, %258 : vector<2x32xf32>
    %261 = arith.divf %259, %260 : vector<2x32xf32>
    %262 = vector.extract_strided_slice %242 {offsets = [0, 64], sizes = [2, 32], strides = [1, 1]} : vector<2x96xf32> to vector<2x32xf32>
    %263 = vector.extract_strided_slice %238 {offsets = [0, 64], sizes = [2, 32], strides = [1, 1]} : vector<2x96xf32> to vector<2x32xf32>
    %264 = vector.broadcast %15 : vector<1x32xf32> to vector<2x32xf32>
    %265 = arith.addf %263, %264 : vector<2x32xf32>
    %266 = arith.mulf %253, %265 : vector<2x32xf32>
    %267 = arith.addf %262, %266 : vector<2x32xf32>
    %268 = math.tanh %267 : vector<2x32xf32>
    %cst_81 = arith.constant 1.000000e+00 : f32
    %269 = vector.broadcast %cst_81 : f32 to vector<2x32xf32>
    %270 = arith.subf %269, %261 : vector<2x32xf32>
    %271 = arith.mulf %270, %268 : vector<2x32xf32>
    %272 = arith.mulf %261, %200 : vector<2x32xf32>
    %273 = arith.addf %271, %272 : vector<2x32xf32>
    %274 = vector.extract_strided_slice %245 {offsets = [0, 0], sizes = [2, 32], strides = [1, 1]} : vector<2x96xf32> to vector<2x32xf32>
    %275 = vector.extract_strided_slice %239 {offsets = [0, 0], sizes = [2, 32], strides = [1, 1]} : vector<2x96xf32> to vector<2x32xf32>
    %276 = arith.addf %274, %275 : vector<2x32xf32>
    %277 = arith.negf %276 : vector<2x32xf32>
    %278 = math.exp %277 : vector<2x32xf32>
    %cst_82 = arith.constant 1.000000e+00 : f32
    %279 = vector.broadcast %cst_82 : f32 to vector<2x32xf32>
    %280 = arith.addf %279, %278 : vector<2x32xf32>
    %281 = arith.divf %279, %280 : vector<2x32xf32>
    %282 = vector.extract_strided_slice %245 {offsets = [0, 32], sizes = [2, 32], strides = [1, 1]} : vector<2x96xf32> to vector<2x32xf32>
    %283 = vector.extract_strided_slice %239 {offsets = [0, 32], sizes = [2, 32], strides = [1, 1]} : vector<2x96xf32> to vector<2x32xf32>
    %284 = arith.addf %282, %283 : vector<2x32xf32>
    %285 = arith.negf %284 : vector<2x32xf32>
    %286 = math.exp %285 : vector<2x32xf32>
    %cst_83 = arith.constant 1.000000e+00 : f32
    %287 = vector.broadcast %cst_83 : f32 to vector<2x32xf32>
    %288 = arith.addf %287, %286 : vector<2x32xf32>
    %289 = arith.divf %287, %288 : vector<2x32xf32>
    %290 = vector.extract_strided_slice %245 {offsets = [0, 64], sizes = [2, 32], strides = [1, 1]} : vector<2x96xf32> to vector<2x32xf32>
    %291 = vector.extract_strided_slice %239 {offsets = [0, 64], sizes = [2, 32], strides = [1, 1]} : vector<2x96xf32> to vector<2x32xf32>
    %292 = vector.broadcast %16 : vector<1x32xf32> to vector<2x32xf32>
    %293 = arith.addf %291, %292 : vector<2x32xf32>
    %294 = arith.mulf %281, %293 : vector<2x32xf32>
    %295 = arith.addf %290, %294 : vector<2x32xf32>
    %296 = math.tanh %295 : vector<2x32xf32>
    %cst_84 = arith.constant 1.000000e+00 : f32
    %297 = vector.broadcast %cst_84 : f32 to vector<2x32xf32>
    %298 = arith.subf %297, %289 : vector<2x32xf32>
    %299 = arith.mulf %298, %296 : vector<2x32xf32>
    %300 = arith.mulf %289, %228 : vector<2x32xf32>
    %301 = arith.addf %299, %300 : vector<2x32xf32>
    %302 = arith.index_cast %c3_i32 : i32 to index
    %c0_85 = arith.constant 0 : index
    %c0_86 = arith.constant 0 : index
    %303 = vector.load %arg11[%302, %c0_85, %c0_86] : memref<8x2x64xf32, #tpu.memory_space<vmem>>, vector<1x2x32xf32>
    %304 = vector.shape_cast %303 : vector<1x2x32xf32> to vector<2x32xf32>
    %305 = vector.shape_cast %273 : vector<2x32xf32> to vector<1x2x32xf32>
    tpu.vector_store %arg11[%302, %c0_85, %c0_86], %305 {strides = array<i32>} : memref<8x2x64xf32, #tpu.memory_space<vmem>>, vector<1x2x32xf32>,
    %306 = arith.index_cast %237 : i32 to index
    %c0_87 = arith.constant 0 : index
    %c32_88 = arith.constant 32 : index
    %307 = vector.load %arg11[%306, %c0_87, %c32_88] : memref<8x2x64xf32, #tpu.memory_space<vmem>>, vector<1x2x32xf32>
    %308 = vector.shape_cast %307 : vector<1x2x32xf32> to vector<2x32xf32>
    %309 = vector.shape_cast %301 : vector<2x32xf32> to vector<1x2x32xf32>
    tpu.vector_store %arg11[%306, %c0_87, %c32_88], %309 {strides = array<i32>} : memref<8x2x64xf32, #tpu.memory_space<vmem>>, vector<1x2x32xf32>,
    %c4_i32 = arith.constant 4 : i32
    %c7_i32_89 = arith.constant 7 : i32
    %310 = arith.subi %c7_i32_89, %c4_i32 : i32
    %cst_90 = arith.constant dense<0.000000e+00> : vector<2x96xf32>
    %311 = tpu.matmul %273, %13, %cst_90 {dimension_numbers = #tpu.dot_dimension_numbers<[1], [0], [0], [1], [0, 0, 1, 1], [], []>} : vector<2x32xf32>, vector<32x96xf32>, vector<2x96xf32> -> vector<2x96xf32>
    %cst_91 = arith.constant dense<0.000000e+00> : vector<2x96xf32>
    %312 = tpu.matmul %301, %14, %cst_91 {dimension_numbers = #tpu.dot_dimension_numbers<[1], [0], [0], [1], [0, 0, 1, 1], [], []>} : vector<2x32xf32>, vector<32x96xf32>, vector<2x96xf32> -> vector<2x96xf32>
    %c2_i32_92 = arith.constant 2 : i32
    %313 = arith.muli %c4_i32, %c2_i32_92 : i32
    %314 = arith.index_cast %313 : i32 to index
    %c0_93 = arith.constant 0 : index
    %315 = vector.load %arg13[%314, %c0_93] : memref<16x96xf32, #tpu.memory_space<vmem>>, vector<2x96xf32>
    %c2_i32_94 = arith.constant 2 : i32
    %316 = arith.muli %310, %c2_i32_94 : i32
    %317 = arith.index_cast %316 : i32 to index
    %c0_95 = arith.constant 0 : index
    %318 = vector.load %arg14[%317, %c0_95] : memref<16x96xf32, #tpu.memory_space<vmem>>, vector<2x96xf32>
    %319 = vector.extract_strided_slice %315 {offsets = [0, 0], sizes = [2, 32], strides = [1, 1]} : vector<2x96xf32> to vector<2x32xf32>
    %320 = vector.extract_strided_slice %311 {offsets = [0, 0], sizes = [2, 32], strides = [1, 1]} : vector<2x96xf32> to vector<2x32xf32>
    %321 = arith.addf %319, %320 : vector<2x32xf32>
    %322 = arith.negf %321 : vector<2x32xf32>
    %323 = math.exp %322 : vector<2x32xf32>
    %cst_96 = arith.constant 1.000000e+00 : f32
    %324 = vector.broadcast %cst_96 : f32 to vector<2x32xf32>
    %325 = arith.addf %324, %323 : vector<2x32xf32>
    %326 = arith.divf %324, %325 : vector<2x32xf32>
    %327 = vector.extract_strided_slice %315 {offsets = [0, 32], sizes = [2, 32], strides = [1, 1]} : vector<2x96xf32> to vector<2x32xf32>
    %328 = vector.extract_strided_slice %311 {offsets = [0, 32], sizes = [2, 32], strides = [1, 1]} : vector<2x96xf32> to vector<2x32xf32>
    %329 = arith.addf %327, %328 : vector<2x32xf32>
    %330 = arith.negf %329 : vector<2x32xf32>
    %331 = math.exp %330 : vector<2x32xf32>
    %cst_97 = arith.constant 1.000000e+00 : f32
    %332 = vector.broadcast %cst_97 : f32 to vector<2x32xf32>
    %333 = arith.addf %332, %331 : vector<2x32xf32>
    %334 = arith.divf %332, %333 : vector<2x32xf32>
    %335 = vector.extract_strided_slice %315 {offsets = [0, 64], sizes = [2, 32], strides = [1, 1]} : vector<2x96xf32> to vector<2x32xf32>
    %336 = vector.extract_strided_slice %311 {offsets = [0, 64], sizes = [2, 32], strides = [1, 1]} : vector<2x96xf32> to vector<2x32xf32>
    %337 = vector.broadcast %15 : vector<1x32xf32> to vector<2x32xf32>
    %338 = arith.addf %336, %337 : vector<2x32xf32>
    %339 = arith.mulf %326, %338 : vector<2x32xf32>
    %340 = arith.addf %335, %339 : vector<2x32xf32>
    %341 = math.tanh %340 : vector<2x32xf32>
    %cst_98 = arith.constant 1.000000e+00 : f32
    %342 = vector.broadcast %cst_98 : f32 to vector<2x32xf32>
    %343 = arith.subf %342, %334 : vector<2x32xf32>
    %344 = arith.mulf %343, %341 : vector<2x32xf32>
    %345 = arith.mulf %334, %273 : vector<2x32xf32>
    %346 = arith.addf %344, %345 : vector<2x32xf32>
    %347 = vector.extract_strided_slice %318 {offsets = [0, 0], sizes = [2, 32], strides = [1, 1]} : vector<2x96xf32> to vector<2x32xf32>
    %348 = vector.extract_strided_slice %312 {offsets = [0, 0], sizes = [2, 32], strides = [1, 1]} : vector<2x96xf32> to vector<2x32xf32>
    %349 = arith.addf %347, %348 : vector<2x32xf32>
    %350 = arith.negf %349 : vector<2x32xf32>
    %351 = math.exp %350 : vector<2x32xf32>
    %cst_99 = arith.constant 1.000000e+00 : f32
    %352 = vector.broadcast %cst_99 : f32 to vector<2x32xf32>
    %353 = arith.addf %352, %351 : vector<2x32xf32>
    %354 = arith.divf %352, %353 : vector<2x32xf32>
    %355 = vector.extract_strided_slice %318 {offsets = [0, 32], sizes = [2, 32], strides = [1, 1]} : vector<2x96xf32> to vector<2x32xf32>
    %356 = vector.extract_strided_slice %312 {offsets = [0, 32], sizes = [2, 32], strides = [1, 1]} : vector<2x96xf32> to vector<2x32xf32>
    %357 = arith.addf %355, %356 : vector<2x32xf32>
    %358 = arith.negf %357 : vector<2x32xf32>
    %359 = math.exp %358 : vector<2x32xf32>
    %cst_100 = arith.constant 1.000000e+00 : f32
    %360 = vector.broadcast %cst_100 : f32 to vector<2x32xf32>
    %361 = arith.addf %360, %359 : vector<2x32xf32>
    %362 = arith.divf %360, %361 : vector<2x32xf32>
    %363 = vector.extract_strided_slice %318 {offsets = [0, 64], sizes = [2, 32], strides = [1, 1]} : vector<2x96xf32> to vector<2x32xf32>
    %364 = vector.extract_strided_slice %312 {offsets = [0, 64], sizes = [2, 32], strides = [1, 1]} : vector<2x96xf32> to vector<2x32xf32>
    %365 = vector.broadcast %16 : vector<1x32xf32> to vector<2x32xf32>
    %366 = arith.addf %364, %365 : vector<2x32xf32>
    %367 = arith.mulf %354, %366 : vector<2x32xf32>
    %368 = arith.addf %363, %367 : vector<2x32xf32>
    %369 = math.tanh %368 : vector<2x32xf32>
    %cst_101 = arith.constant 1.000000e+00 : f32
    %370 = vector.broadcast %cst_101 : f32 to vector<2x32xf32>
    %371 = arith.subf %370, %362 : vector<2x32xf32>
    %372 = arith.mulf %371, %369 : vector<2x32xf32>
    %373 = arith.mulf %362, %301 : vector<2x32xf32>
    %374 = arith.addf %372, %373 : vector<2x32xf32>
    %375 = arith.index_cast %c4_i32 : i32 to index
    %c0_102 = arith.constant 0 : index
    %c0_103 = arith.constant 0 : index
    %376 = vector.load %arg11[%375, %c0_102, %c0_103] : memref<8x2x64xf32, #tpu.memory_space<vmem>>, vector<1x2x32xf32>
    %377 = vector.shape_cast %376 : vector<1x2x32xf32> to vector<2x32xf32>
    %378 = vector.shape_cast %346 : vector<2x32xf32> to vector<1x2x32xf32>
    tpu.vector_store %arg11[%375, %c0_102, %c0_103], %378 {strides = array<i32>} : memref<8x2x64xf32, #tpu.memory_space<vmem>>, vector<1x2x32xf32>,
    %379 = arith.index_cast %310 : i32 to index
    %c0_104 = arith.constant 0 : index
    %c32_105 = arith.constant 32 : index
    %380 = vector.load %arg11[%379, %c0_104, %c32_105] : memref<8x2x64xf32, #tpu.memory_space<vmem>>, vector<1x2x32xf32>
    %381 = vector.shape_cast %380 : vector<1x2x32xf32> to vector<2x32xf32>
    %382 = vector.shape_cast %374 : vector<2x32xf32> to vector<1x2x32xf32>
    tpu.vector_store %arg11[%379, %c0_104, %c32_105], %382 {strides = array<i32>} : memref<8x2x64xf32, #tpu.memory_space<vmem>>, vector<1x2x32xf32>,
    %c5_i32 = arith.constant 5 : i32
    %c7_i32_106 = arith.constant 7 : i32
    %383 = arith.subi %c7_i32_106, %c5_i32 : i32
    %cst_107 = arith.constant dense<0.000000e+00> : vector<2x96xf32>
    %384 = tpu.matmul %346, %13, %cst_107 {dimension_numbers = #tpu.dot_dimension_numbers<[1], [0], [0], [1], [0, 0, 1, 1], [], []>} : vector<2x32xf32>, vector<32x96xf32>, vector<2x96xf32> -> vector<2x96xf32>
    %cst_108 = arith.constant dense<0.000000e+00> : vector<2x96xf32>
    %385 = tpu.matmul %374, %14, %cst_108 {dimension_numbers = #tpu.dot_dimension_numbers<[1], [0], [0], [1], [0, 0, 1, 1], [], []>} : vector<2x32xf32>, vector<32x96xf32>, vector<2x96xf32> -> vector<2x96xf32>
    %c2_i32_109 = arith.constant 2 : i32
    %386 = arith.muli %c5_i32, %c2_i32_109 : i32
    %387 = arith.index_cast %386 : i32 to index
    %c0_110 = arith.constant 0 : index
    %388 = vector.load %arg13[%387, %c0_110] : memref<16x96xf32, #tpu.memory_space<vmem>>, vector<2x96xf32>
    %c2_i32_111 = arith.constant 2 : i32
    %389 = arith.muli %383, %c2_i32_111 : i32
    %390 = arith.index_cast %389 : i32 to index
    %c0_112 = arith.constant 0 : index
    %391 = vector.load %arg14[%390, %c0_112] : memref<16x96xf32, #tpu.memory_space<vmem>>, vector<2x96xf32>
    %392 = vector.extract_strided_slice %388 {offsets = [0, 0], sizes = [2, 32], strides = [1, 1]} : vector<2x96xf32> to vector<2x32xf32>
    %393 = vector.extract_strided_slice %384 {offsets = [0, 0], sizes = [2, 32], strides = [1, 1]} : vector<2x96xf32> to vector<2x32xf32>
    %394 = arith.addf %392, %393 : vector<2x32xf32>
    %395 = arith.negf %394 : vector<2x32xf32>
    %396 = math.exp %395 : vector<2x32xf32>
    %cst_113 = arith.constant 1.000000e+00 : f32
    %397 = vector.broadcast %cst_113 : f32 to vector<2x32xf32>
    %398 = arith.addf %397, %396 : vector<2x32xf32>
    %399 = arith.divf %397, %398 : vector<2x32xf32>
    %400 = vector.extract_strided_slice %388 {offsets = [0, 32], sizes = [2, 32], strides = [1, 1]} : vector<2x96xf32> to vector<2x32xf32>
    %401 = vector.extract_strided_slice %384 {offsets = [0, 32], sizes = [2, 32], strides = [1, 1]} : vector<2x96xf32> to vector<2x32xf32>
    %402 = arith.addf %400, %401 : vector<2x32xf32>
    %403 = arith.negf %402 : vector<2x32xf32>
    %404 = math.exp %403 : vector<2x32xf32>
    %cst_114 = arith.constant 1.000000e+00 : f32
    %405 = vector.broadcast %cst_114 : f32 to vector<2x32xf32>
    %406 = arith.addf %405, %404 : vector<2x32xf32>
    %407 = arith.divf %405, %406 : vector<2x32xf32>
    %408 = vector.extract_strided_slice %388 {offsets = [0, 64], sizes = [2, 32], strides = [1, 1]} : vector<2x96xf32> to vector<2x32xf32>
    %409 = vector.extract_strided_slice %384 {offsets = [0, 64], sizes = [2, 32], strides = [1, 1]} : vector<2x96xf32> to vector<2x32xf32>
    %410 = vector.broadcast %15 : vector<1x32xf32> to vector<2x32xf32>
    %411 = arith.addf %409, %410 : vector<2x32xf32>
    %412 = arith.mulf %399, %411 : vector<2x32xf32>
    %413 = arith.addf %408, %412 : vector<2x32xf32>
    %414 = math.tanh %413 : vector<2x32xf32>
    %cst_115 = arith.constant 1.000000e+00 : f32
    %415 = vector.broadcast %cst_115 : f32 to vector<2x32xf32>
    %416 = arith.subf %415, %407 : vector<2x32xf32>
    %417 = arith.mulf %416, %414 : vector<2x32xf32>
    %418 = arith.mulf %407, %346 : vector<2x32xf32>
    %419 = arith.addf %417, %418 : vector<2x32xf32>
    %420 = vector.extract_strided_slice %391 {offsets = [0, 0], sizes = [2, 32], strides = [1, 1]} : vector<2x96xf32> to vector<2x32xf32>
    %421 = vector.extract_strided_slice %385 {offsets = [0, 0], sizes = [2, 32], strides = [1, 1]} : vector<2x96xf32> to vector<2x32xf32>
    %422 = arith.addf %420, %421 : vector<2x32xf32>
    %423 = arith.negf %422 : vector<2x32xf32>
    %424 = math.exp %423 : vector<2x32xf32>
    %cst_116 = arith.constant 1.000000e+00 : f32
    %425 = vector.broadcast %cst_116 : f32 to vector<2x32xf32>
    %426 = arith.addf %425, %424 : vector<2x32xf32>
    %427 = arith.divf %425, %426 : vector<2x32xf32>
    %428 = vector.extract_strided_slice %391 {offsets = [0, 32], sizes = [2, 32], strides = [1, 1]} : vector<2x96xf32> to vector<2x32xf32>
    %429 = vector.extract_strided_slice %385 {offsets = [0, 32], sizes = [2, 32], strides = [1, 1]} : vector<2x96xf32> to vector<2x32xf32>
    %430 = arith.addf %428, %429 : vector<2x32xf32>
    %431 = arith.negf %430 : vector<2x32xf32>
    %432 = math.exp %431 : vector<2x32xf32>
    %cst_117 = arith.constant 1.000000e+00 : f32
    %433 = vector.broadcast %cst_117 : f32 to vector<2x32xf32>
    %434 = arith.addf %433, %432 : vector<2x32xf32>
    %435 = arith.divf %433, %434 : vector<2x32xf32>
    %436 = vector.extract_strided_slice %391 {offsets = [0, 64], sizes = [2, 32], strides = [1, 1]} : vector<2x96xf32> to vector<2x32xf32>
    %437 = vector.extract_strided_slice %385 {offsets = [0, 64], sizes = [2, 32], strides = [1, 1]} : vector<2x96xf32> to vector<2x32xf32>
    %438 = vector.broadcast %16 : vector<1x32xf32> to vector<2x32xf32>
    %439 = arith.addf %437, %438 : vector<2x32xf32>
    %440 = arith.mulf %427, %439 : vector<2x32xf32>
    %441 = arith.addf %436, %440 : vector<2x32xf32>
    %442 = math.tanh %441 : vector<2x32xf32>
    %cst_118 = arith.constant 1.000000e+00 : f32
    %443 = vector.broadcast %cst_118 : f32 to vector<2x32xf32>
    %444 = arith.subf %443, %435 : vector<2x32xf32>
    %445 = arith.mulf %444, %442 : vector<2x32xf32>
    %446 = arith.mulf %435, %374 : vector<2x32xf32>
    %447 = arith.addf %445, %446 : vector<2x32xf32>
    %448 = arith.index_cast %c5_i32 : i32 to index
    %c0_119 = arith.constant 0 : index
    %c0_120 = arith.constant 0 : index
    %449 = vector.load %arg11[%448, %c0_119, %c0_120] : memref<8x2x64xf32, #tpu.memory_space<vmem>>, vector<1x2x32xf32>
    %450 = vector.shape_cast %449 : vector<1x2x32xf32> to vector<2x32xf32>
    %451 = vector.shape_cast %419 : vector<2x32xf32> to vector<1x2x32xf32>
    tpu.vector_store %arg11[%448, %c0_119, %c0_120], %451 {strides = array<i32>} : memref<8x2x64xf32, #tpu.memory_space<vmem>>, vector<1x2x32xf32>,
    %452 = arith.index_cast %383 : i32 to index
    %c0_121 = arith.constant 0 : index
    %c32_122 = arith.constant 32 : index
    %453 = vector.load %arg11[%452, %c0_121, %c32_122] : memref<8x2x64xf32, #tpu.memory_space<vmem>>, vector<1x2x32xf32>
    %454 = vector.shape_cast %453 : vector<1x2x32xf32> to vector<2x32xf32>
    %455 = vector.shape_cast %447 : vector<2x32xf32> to vector<1x2x32xf32>
    tpu.vector_store %arg11[%452, %c0_121, %c32_122], %455 {strides = array<i32>} : memref<8x2x64xf32, #tpu.memory_space<vmem>>, vector<1x2x32xf32>,
    %c6_i32 = arith.constant 6 : i32
    %c7_i32_123 = arith.constant 7 : i32
    %456 = arith.subi %c7_i32_123, %c6_i32 : i32
    %cst_124 = arith.constant dense<0.000000e+00> : vector<2x96xf32>
    %457 = tpu.matmul %419, %13, %cst_124 {dimension_numbers = #tpu.dot_dimension_numbers<[1], [0], [0], [1], [0, 0, 1, 1], [], []>} : vector<2x32xf32>, vector<32x96xf32>, vector<2x96xf32> -> vector<2x96xf32>
    %cst_125 = arith.constant dense<0.000000e+00> : vector<2x96xf32>
    %458 = tpu.matmul %447, %14, %cst_125 {dimension_numbers = #tpu.dot_dimension_numbers<[1], [0], [0], [1], [0, 0, 1, 1], [], []>} : vector<2x32xf32>, vector<32x96xf32>, vector<2x96xf32> -> vector<2x96xf32>
    %c2_i32_126 = arith.constant 2 : i32
    %459 = arith.muli %c6_i32, %c2_i32_126 : i32
    %460 = arith.index_cast %459 : i32 to index
    %c0_127 = arith.constant 0 : index
    %461 = vector.load %arg13[%460, %c0_127] : memref<16x96xf32, #tpu.memory_space<vmem>>, vector<2x96xf32>
    %c2_i32_128 = arith.constant 2 : i32
    %462 = arith.muli %456, %c2_i32_128 : i32
    %463 = arith.index_cast %462 : i32 to index
    %c0_129 = arith.constant 0 : index
    %464 = vector.load %arg14[%463, %c0_129] : memref<16x96xf32, #tpu.memory_space<vmem>>, vector<2x96xf32>
    %465 = vector.extract_strided_slice %461 {offsets = [0, 0], sizes = [2, 32], strides = [1, 1]} : vector<2x96xf32> to vector<2x32xf32>
    %466 = vector.extract_strided_slice %457 {offsets = [0, 0], sizes = [2, 32], strides = [1, 1]} : vector<2x96xf32> to vector<2x32xf32>
    %467 = arith.addf %465, %466 : vector<2x32xf32>
    %468 = arith.negf %467 : vector<2x32xf32>
    %469 = math.exp %468 : vector<2x32xf32>
    %cst_130 = arith.constant 1.000000e+00 : f32
    %470 = vector.broadcast %cst_130 : f32 to vector<2x32xf32>
    %471 = arith.addf %470, %469 : vector<2x32xf32>
    %472 = arith.divf %470, %471 : vector<2x32xf32>
    %473 = vector.extract_strided_slice %461 {offsets = [0, 32], sizes = [2, 32], strides = [1, 1]} : vector<2x96xf32> to vector<2x32xf32>
    %474 = vector.extract_strided_slice %457 {offsets = [0, 32], sizes = [2, 32], strides = [1, 1]} : vector<2x96xf32> to vector<2x32xf32>
    %475 = arith.addf %473, %474 : vector<2x32xf32>
    %476 = arith.negf %475 : vector<2x32xf32>
    %477 = math.exp %476 : vector<2x32xf32>
    %cst_131 = arith.constant 1.000000e+00 : f32
    %478 = vector.broadcast %cst_131 : f32 to vector<2x32xf32>
    %479 = arith.addf %478, %477 : vector<2x32xf32>
    %480 = arith.divf %478, %479 : vector<2x32xf32>
    %481 = vector.extract_strided_slice %461 {offsets = [0, 64], sizes = [2, 32], strides = [1, 1]} : vector<2x96xf32> to vector<2x32xf32>
    %482 = vector.extract_strided_slice %457 {offsets = [0, 64], sizes = [2, 32], strides = [1, 1]} : vector<2x96xf32> to vector<2x32xf32>
    %483 = vector.broadcast %15 : vector<1x32xf32> to vector<2x32xf32>
    %484 = arith.addf %482, %483 : vector<2x32xf32>
    %485 = arith.mulf %472, %484 : vector<2x32xf32>
    %486 = arith.addf %481, %485 : vector<2x32xf32>
    %487 = math.tanh %486 : vector<2x32xf32>
    %cst_132 = arith.constant 1.000000e+00 : f32
    %488 = vector.broadcast %cst_132 : f32 to vector<2x32xf32>
    %489 = arith.subf %488, %480 : vector<2x32xf32>
    %490 = arith.mulf %489, %487 : vector<2x32xf32>
    %491 = arith.mulf %480, %419 : vector<2x32xf32>
    %492 = arith.addf %490, %491 : vector<2x32xf32>
    %493 = vector.extract_strided_slice %464 {offsets = [0, 0], sizes = [2, 32], strides = [1, 1]} : vector<2x96xf32> to vector<2x32xf32>
    %494 = vector.extract_strided_slice %458 {offsets = [0, 0], sizes = [2, 32], strides = [1, 1]} : vector<2x96xf32> to vector<2x32xf32>
    %495 = arith.addf %493, %494 : vector<2x32xf32>
    %496 = arith.negf %495 : vector<2x32xf32>
    %497 = math.exp %496 : vector<2x32xf32>
    %cst_133 = arith.constant 1.000000e+00 : f32
    %498 = vector.broadcast %cst_133 : f32 to vector<2x32xf32>
    %499 = arith.addf %498, %497 : vector<2x32xf32>
    %500 = arith.divf %498, %499 : vector<2x32xf32>
    %501 = vector.extract_strided_slice %464 {offsets = [0, 32], sizes = [2, 32], strides = [1, 1]} : vector<2x96xf32> to vector<2x32xf32>
    %502 = vector.extract_strided_slice %458 {offsets = [0, 32], sizes = [2, 32], strides = [1, 1]} : vector<2x96xf32> to vector<2x32xf32>
    %503 = arith.addf %501, %502 : vector<2x32xf32>
    %504 = arith.negf %503 : vector<2x32xf32>
    %505 = math.exp %504 : vector<2x32xf32>
    %cst_134 = arith.constant 1.000000e+00 : f32
    %506 = vector.broadcast %cst_134 : f32 to vector<2x32xf32>
    %507 = arith.addf %506, %505 : vector<2x32xf32>
    %508 = arith.divf %506, %507 : vector<2x32xf32>
    %509 = vector.extract_strided_slice %464 {offsets = [0, 64], sizes = [2, 32], strides = [1, 1]} : vector<2x96xf32> to vector<2x32xf32>
    %510 = vector.extract_strided_slice %458 {offsets = [0, 64], sizes = [2, 32], strides = [1, 1]} : vector<2x96xf32> to vector<2x32xf32>
    %511 = vector.broadcast %16 : vector<1x32xf32> to vector<2x32xf32>
    %512 = arith.addf %510, %511 : vector<2x32xf32>
    %513 = arith.mulf %500, %512 : vector<2x32xf32>
    %514 = arith.addf %509, %513 : vector<2x32xf32>
    %515 = math.tanh %514 : vector<2x32xf32>
    %cst_135 = arith.constant 1.000000e+00 : f32
    %516 = vector.broadcast %cst_135 : f32 to vector<2x32xf32>
    %517 = arith.subf %516, %508 : vector<2x32xf32>
    %518 = arith.mulf %517, %515 : vector<2x32xf32>
    %519 = arith.mulf %508, %447 : vector<2x32xf32>
    %520 = arith.addf %518, %519 : vector<2x32xf32>
    %521 = arith.index_cast %c6_i32 : i32 to index
    %c0_136 = arith.constant 0 : index
    %c0_137 = arith.constant 0 : index
    %522 = vector.load %arg11[%521, %c0_136, %c0_137] : memref<8x2x64xf32, #tpu.memory_space<vmem>>, vector<1x2x32xf32>
    %523 = vector.shape_cast %522 : vector<1x2x32xf32> to vector<2x32xf32>
    %524 = vector.shape_cast %492 : vector<2x32xf32> to vector<1x2x32xf32>
    tpu.vector_store %arg11[%521, %c0_136, %c0_137], %524 {strides = array<i32>} : memref<8x2x64xf32, #tpu.memory_space<vmem>>, vector<1x2x32xf32>,
    %525 = arith.index_cast %456 : i32 to index
    %c0_138 = arith.constant 0 : index
    %c32_139 = arith.constant 32 : index
    %526 = vector.load %arg11[%525, %c0_138, %c32_139] : memref<8x2x64xf32, #tpu.memory_space<vmem>>, vector<1x2x32xf32>
    %527 = vector.shape_cast %526 : vector<1x2x32xf32> to vector<2x32xf32>
    %528 = vector.shape_cast %520 : vector<2x32xf32> to vector<1x2x32xf32>
    tpu.vector_store %arg11[%525, %c0_138, %c32_139], %528 {strides = array<i32>} : memref<8x2x64xf32, #tpu.memory_space<vmem>>, vector<1x2x32xf32>,
    %c7_i32_140 = arith.constant 7 : i32
    %c7_i32_141 = arith.constant 7 : i32
    %529 = arith.subi %c7_i32_141, %c7_i32_140 : i32
    %cst_142 = arith.constant dense<0.000000e+00> : vector<2x96xf32>
    %530 = tpu.matmul %492, %13, %cst_142 {dimension_numbers = #tpu.dot_dimension_numbers<[1], [0], [0], [1], [0, 0, 1, 1], [], []>} : vector<2x32xf32>, vector<32x96xf32>, vector<2x96xf32> -> vector<2x96xf32>
    %cst_143 = arith.constant dense<0.000000e+00> : vector<2x96xf32>
    %531 = tpu.matmul %520, %14, %cst_143 {dimension_numbers = #tpu.dot_dimension_numbers<[1], [0], [0], [1], [0, 0, 1, 1], [], []>} : vector<2x32xf32>, vector<32x96xf32>, vector<2x96xf32> -> vector<2x96xf32>
    %c2_i32_144 = arith.constant 2 : i32
    %532 = arith.muli %c7_i32_140, %c2_i32_144 : i32
    %533 = arith.index_cast %532 : i32 to index
    %c0_145 = arith.constant 0 : index
    %534 = vector.load %arg13[%533, %c0_145] : memref<16x96xf32, #tpu.memory_space<vmem>>, vector<2x96xf32>
    %c2_i32_146 = arith.constant 2 : i32
    %535 = arith.muli %529, %c2_i32_146 : i32
    %536 = arith.index_cast %535 : i32 to index
    %c0_147 = arith.constant 0 : index
    %537 = vector.load %arg14[%536, %c0_147] : memref<16x96xf32, #tpu.memory_space<vmem>>, vector<2x96xf32>
    %538 = vector.extract_strided_slice %534 {offsets = [0, 0], sizes = [2, 32], strides = [1, 1]} : vector<2x96xf32> to vector<2x32xf32>
    %539 = vector.extract_strided_slice %530 {offsets = [0, 0], sizes = [2, 32], strides = [1, 1]} : vector<2x96xf32> to vector<2x32xf32>
    %540 = arith.addf %538, %539 : vector<2x32xf32>
    %541 = arith.negf %540 : vector<2x32xf32>
    %542 = math.exp %541 : vector<2x32xf32>
    %cst_148 = arith.constant 1.000000e+00 : f32
    %543 = vector.broadcast %cst_148 : f32 to vector<2x32xf32>
    %544 = arith.addf %543, %542 : vector<2x32xf32>
    %545 = arith.divf %543, %544 : vector<2x32xf32>
    %546 = vector.extract_strided_slice %534 {offsets = [0, 32], sizes = [2, 32], strides = [1, 1]} : vector<2x96xf32> to vector<2x32xf32>
    %547 = vector.extract_strided_slice %530 {offsets = [0, 32], sizes = [2, 32], strides = [1, 1]} : vector<2x96xf32> to vector<2x32xf32>
    %548 = arith.addf %546, %547 : vector<2x32xf32>
    %549 = arith.negf %548 : vector<2x32xf32>
    %550 = math.exp %549 : vector<2x32xf32>
    %cst_149 = arith.constant 1.000000e+00 : f32
    %551 = vector.broadcast %cst_149 : f32 to vector<2x32xf32>
    %552 = arith.addf %551, %550 : vector<2x32xf32>
    %553 = arith.divf %551, %552 : vector<2x32xf32>
    %554 = vector.extract_strided_slice %534 {offsets = [0, 64], sizes = [2, 32], strides = [1, 1]} : vector<2x96xf32> to vector<2x32xf32>
    %555 = vector.extract_strided_slice %530 {offsets = [0, 64], sizes = [2, 32], strides = [1, 1]} : vector<2x96xf32> to vector<2x32xf32>
    %556 = vector.broadcast %15 : vector<1x32xf32> to vector<2x32xf32>
    %557 = arith.addf %555, %556 : vector<2x32xf32>
    %558 = arith.mulf %545, %557 : vector<2x32xf32>
    %559 = arith.addf %554, %558 : vector<2x32xf32>
    %560 = math.tanh %559 : vector<2x32xf32>
    %cst_150 = arith.constant 1.000000e+00 : f32
    %561 = vector.broadcast %cst_150 : f32 to vector<2x32xf32>
    %562 = arith.subf %561, %553 : vector<2x32xf32>
    %563 = arith.mulf %562, %560 : vector<2x32xf32>
    %564 = arith.mulf %553, %492 : vector<2x32xf32>
    %565 = arith.addf %563, %564 : vector<2x32xf32>
    %566 = vector.extract_strided_slice %537 {offsets = [0, 0], sizes = [2, 32], strides = [1, 1]} : vector<2x96xf32> to vector<2x32xf32>
    %567 = vector.extract_strided_slice %531 {offsets = [0, 0], sizes = [2, 32], strides = [1, 1]} : vector<2x96xf32> to vector<2x32xf32>
    %568 = arith.addf %566, %567 : vector<2x32xf32>
    %569 = arith.negf %568 : vector<2x32xf32>
    %570 = math.exp %569 : vector<2x32xf32>
    %cst_151 = arith.constant 1.000000e+00 : f32
    %571 = vector.broadcast %cst_151 : f32 to vector<2x32xf32>
    %572 = arith.addf %571, %570 : vector<2x32xf32>
    %573 = arith.divf %571, %572 : vector<2x32xf32>
    %574 = vector.extract_strided_slice %537 {offsets = [0, 32], sizes = [2, 32], strides = [1, 1]} : vector<2x96xf32> to vector<2x32xf32>
    %575 = vector.extract_strided_slice %531 {offsets = [0, 32], sizes = [2, 32], strides = [1, 1]} : vector<2x96xf32> to vector<2x32xf32>
    %576 = arith.addf %574, %575 : vector<2x32xf32>
    %577 = arith.negf %576 : vector<2x32xf32>
    %578 = math.exp %577 : vector<2x32xf32>
    %cst_152 = arith.constant 1.000000e+00 : f32
    %579 = vector.broadcast %cst_152 : f32 to vector<2x32xf32>
    %580 = arith.addf %579, %578 : vector<2x32xf32>
    %581 = arith.divf %579, %580 : vector<2x32xf32>
    %582 = vector.extract_strided_slice %537 {offsets = [0, 64], sizes = [2, 32], strides = [1, 1]} : vector<2x96xf32> to vector<2x32xf32>
    %583 = vector.extract_strided_slice %531 {offsets = [0, 64], sizes = [2, 32], strides = [1, 1]} : vector<2x96xf32> to vector<2x32xf32>
    %584 = vector.broadcast %16 : vector<1x32xf32> to vector<2x32xf32>
    %585 = arith.addf %583, %584 : vector<2x32xf32>
    %586 = arith.mulf %573, %585 : vector<2x32xf32>
    %587 = arith.addf %582, %586 : vector<2x32xf32>
    %588 = math.tanh %587 : vector<2x32xf32>
    %cst_153 = arith.constant 1.000000e+00 : f32
    %589 = vector.broadcast %cst_153 : f32 to vector<2x32xf32>
    %590 = arith.subf %589, %581 : vector<2x32xf32>
    %591 = arith.mulf %590, %588 : vector<2x32xf32>
    %592 = arith.mulf %581, %520 : vector<2x32xf32>
    %593 = arith.addf %591, %592 : vector<2x32xf32>
    %594 = arith.index_cast %c7_i32_140 : i32 to index
    %c0_154 = arith.constant 0 : index
    %c0_155 = arith.constant 0 : index
    %595 = vector.load %arg11[%594, %c0_154, %c0_155] : memref<8x2x64xf32, #tpu.memory_space<vmem>>, vector<1x2x32xf32>
    %596 = vector.shape_cast %595 : vector<1x2x32xf32> to vector<2x32xf32>
    %597 = vector.shape_cast %565 : vector<2x32xf32> to vector<1x2x32xf32>
    tpu.vector_store %arg11[%594, %c0_154, %c0_155], %597 {strides = array<i32>} : memref<8x2x64xf32, #tpu.memory_space<vmem>>, vector<1x2x32xf32>,
    %598 = arith.index_cast %529 : i32 to index
    %c0_156 = arith.constant 0 : index
    %c32_157 = arith.constant 32 : index
    %599 = vector.load %arg11[%598, %c0_156, %c32_157] : memref<8x2x64xf32, #tpu.memory_space<vmem>>, vector<1x2x32xf32>
    %600 = vector.shape_cast %599 : vector<1x2x32xf32> to vector<2x32xf32>
    %601 = vector.shape_cast %593 : vector<2x32xf32> to vector<1x2x32xf32>
    tpu.vector_store %arg11[%598, %c0_156, %c32_157], %601 {strides = array<i32>} : memref<8x2x64xf32, #tpu.memory_space<vmem>>, vector<1x2x32xf32>,
    %c8_i32 = arith.constant 8 : i32
    %c0_158 = arith.constant 0 : index
    %c0_159 = arith.constant 0 : index
    %602 = vector.load %arg9[%c0_158, %c0_159] : memref<64x32xf32, #tpu.memory_space<vmem>>, vector<64x32xf32>
    %603 = vector.extract_strided_slice %602 {offsets = [0, 0], sizes = [32, 32], strides = [1, 1]} : vector<64x32xf32> to vector<32x32xf32>
    %cst_160 = arith.constant dense<0.000000e+00> : vector<2x32xf32>
    %604 = tpu.matmul %565, %603, %cst_160 {dimension_numbers = #tpu.dot_dimension_numbers<[1], [0], [0], [1], [0, 0, 1, 1], [], []>} : vector<2x32xf32>, vector<32x32xf32>, vector<2x32xf32> -> vector<2x32xf32>
    %605 = vector.extract_strided_slice %602 {offsets = [32, 0], sizes = [32, 32], strides = [1, 1]} : vector<64x32xf32> to vector<32x32xf32>
    %cst_161 = arith.constant dense<0.000000e+00> : vector<2x32xf32>
    %606 = tpu.matmul %593, %605, %cst_161 {dimension_numbers = #tpu.dot_dimension_numbers<[1], [0], [0], [1], [0, 0, 1, 1], [], []>} : vector<2x32xf32>, vector<32x32xf32>, vector<2x32xf32> -> vector<2x32xf32>
    %607 = arith.addf %604, %606 : vector<2x32xf32>
    %c0_162 = arith.constant 0 : index
    %c0_163 = arith.constant 0 : index
    %608 = vector.load %arg10[%c0_162, %c0_163] : memref<1x32xf32, #tpu.memory_space<vmem>>, vector<1x32xf32>
    %609 = vector.broadcast %608 : vector<1x32xf32> to vector<2x32xf32>
    %610 = arith.addf %607, %609 : vector<2x32xf32>
    %611 = math.tanh %610 : vector<2x32xf32>
    %c0_164 = arith.constant 0 : index
    %c0_165 = arith.constant 0 : index
    %612 = vector.load %arg12[%c0_164, %c0_165] : memref<2x32xf32, #tpu.memory_space<vmem>>, vector<2x32xf32>
    tpu.vector_store %arg12[%c0_164, %c0_165], %611 {strides = array<i32>} : memref<2x32xf32, #tpu.memory_space<vmem>>, vector<2x32xf32>,
    return
  }
}

</mosaic_0001>

<llo_original>
// kernel: tpu_custom_call.1
$region0: #{tpu_custom_call.1}
  #allocation0 [shape = 'u32[]', space=smem, size = 0x4, offset = 0x4, fixed_abs, tag = 'smem constant byte address 0x4 - core index']
  #allocation1 [shape = 'u32[144,128]{1,0:T(1,128)}', space=vmem, size = 0x12000, scoped, tag = 'internal scratch']
  #allocation2 [shape = 'f32[16,96]{1,0:T(8,128)}', space=vmem, size = 0x2000, scoped, tag = 'scratch operand']
  #allocation3 [shape = 'f32[16,96]{1,0:T(8,128)}', space=vmem, size = 0x2000, scoped, tag = 'scratch operand']
  %s0 = inlined_call_operand.hbm [shape: f32[16,32], index: 0, kind: input, shape index: {}]
  %s1 = inlined_call_operand.vmem [shape: f32[32,96], index: 1, kind: input, shape index: {}]
  %s2 = inlined_call_operand.vmem [shape: f32[32,96], index: 2, kind: input, shape index: {}]
  %s3 = inlined_call_operand.vmem [shape: f32[1,96], index: 3, kind: input, shape index: {}]
  %s4 = inlined_call_operand.vmem [shape: f32[1,32], index: 4, kind: input, shape index: {}]
  %s5 = inlined_call_operand.vmem [shape: f32[32,96], index: 5, kind: input, shape index: {}]
  %s6 = inlined_call_operand.hbm [shape: f32[32,96], index: 6, kind: input, shape index: {}]
  %s7 = inlined_call_operand.hbm [shape: f32[1,96], index: 7, kind: input, shape index: {}]
  %s8 = inlined_call_operand.hbm [shape: f32[1,32], index: 8, kind: input, shape index: {}]
  %s9 = inlined_call_operand.vmem [shape: f32[64,32], index: 9, kind: input, shape index: {}]
  %s10 = inlined_call_operand.vmem [shape: f32[1,32], index: 10, kind: input, shape index: {}]
  %s11 = inlined_call_operand.hbm [shape: f32[8,2,64], index: 11, kind: output, shape index: {0}]
  %s12 = inlined_call_operand.hbm [shape: f32[2,32], index: 12, kind: output, shape index: {1}]
  %13 = xla_tuple %s11, %s12
  %s14 = sld [smem:[#allocation0]]
  $region78: #{tpu_custom_call.1} parent=0
    _
  %s16 = ssub.s32 1, %s14
  %s17 = scalar_select 0, %s16, %s14
  $region1: #{tpu_custom_call.1} parent=0
    #allocation4 [shape = 'u8[8192]{0}', space=vmem, size = 0x2000, scoped, tag = 'input window, operand 0, single buffered']
    #allocation5 [shape = 's32[1]{0}', space=sflag, size = 0x4, scoped, tag = 'scoped memory for tpu_custom_call.1']
    #allocation6 [shape = 's32[1]{0}', space=sflag, size = 0x4, scoped, tag = 'scoped memory for tpu_custom_call.1']
    #allocation7 [shape = 'u8[16384]{0}', space=vmem, size = 0x4000, scoped, tag = 'input window, operand 6, single buffered']
    #allocation8 [shape = 's32[1]{0}', space=sflag, size = 0x4, scoped, tag = 'scoped memory for tpu_custom_call.1']
    #allocation9 [shape = 'u8[512]{0}', space=vmem, size = 0x400, scoped, tag = 'input window, operand 7, single buffered']
    #allocation10 [shape = 'u8[512]{0}', space=vmem, size = 0x400, scoped, tag = 'input window, operand 8, single buffered']
    #allocation11 [shape = 's32[1]{0}', space=sflag, size = 0x4, scoped, tag = 'scoped memory for tpu_custom_call.1']
    #allocation12 [shape = 'u8[8192]{0}', space=vmem, size = 0x2000, scoped, tag = 'output window, operand 0, single buffered']
    #allocation13 [shape = 'u8[1024]{0}', space=vmem, size = 0x400, scoped, tag = 'output window, operand 1, single buffered']
    #allocation14 [shape = 's32[1]{0}', space=sflag, size = 0x4, scoped, tag = 'scoped memory for tpu_custom_call.1']
    %18 = vsyncpa [#allocation5], 0
    %19 = vsyncpa [#allocation8], 0
    %20 = vsyncpa [#allocation11], 0
    %21 = vsyncpa [#allocation6], 0
    %22 = vsyncpa [#allocation14], 0
    // Predicated region
    $region2: #{tpu_custom_call.1} parent=1 // pred_check
      _
    $region3: #{tpu_custom_call.1} parent=1 // pred_check_branch
      %24 = sbr.rel (0) target = $region5
    $region4: #{tpu_custom_call.1} parent=1 // pred_region
      %s26 = ssub.s32 256, 256
      %27 = vsyncadd [#allocation5], %s26
      %s28 = sshll.u32 [#allocation4], 4
      %s29 = int_to_ptr.vmem [resolvable:$true] %s28
      %34 = dma.hbm_to_vmem [thread:$0]  %s0, 256, %s29, [#allocation5], 128, 128, 8
    $region5: #{tpu_custom_call.1} parent=1 // pred_fallthru
      _
    // Predicated region
    $region6: #{tpu_custom_call.1} parent=1 // pred_check
      _
    $region7: #{tpu_custom_call.1} parent=1 // pred_check_branch
      %36 = sbr.rel (0) target = $region9
    $region8: #{tpu_custom_call.1} parent=1 // pred_region
      _
    $region9: #{tpu_custom_call.1} parent=1 // pred_fallthru
      _
    // Predicated region
    $region10: #{tpu_custom_call.1} parent=1 // pred_check
      _
    $region11: #{tpu_custom_call.1} parent=1 // pred_check_branch
      %38 = sbr.rel (0) target = $region13
    $region12: #{tpu_custom_call.1} parent=1 // pred_region
      _
    $region13: #{tpu_custom_call.1} parent=1 // pred_fallthru
      _
    // Predicated region
    $region14: #{tpu_custom_call.1} parent=1 // pred_check
      _
    $region15: #{tpu_custom_call.1} parent=1 // pred_check_branch
      %40 = sbr.rel (0) target = $region17
    $region16: #{tpu_custom_call.1} parent=1 // pred_region
      _
    $region17: #{tpu_custom_call.1} parent=1 // pred_fallthru
      _
    // Predicated region
    $region18: #{tpu_custom_call.1} parent=1 // pred_check
      _
    $region19: #{tpu_custom_call.1} parent=1 // pred_check_branch
      %42 = sbr.rel (0) target = $region21
    $region20: #{tpu_custom_call.1} parent=1 // pred_region
      _
    $region21: #{tpu_custom_call.1} parent=1 // pred_fallthru
      _
    // Predicated region
    $region22: #{tpu_custom_call.1} parent=1 // pred_check
      _
    $region23: #{tpu_custom_call.1} parent=1 // pred_check_branch
      %44 = sbr.rel (0) target = $region25
    $region24: #{tpu_custom_call.1} parent=1 // pred_region
      _
    $region25: #{tpu_custom_call.1} parent=1 // pred_fallthru
      _
    // Predicated region
    $region26: #{tpu_custom_call.1} parent=1 // pred_check
      _
    $region27: #{tpu_custom_call.1} parent=1 // pred_check_branch
      %46 = sbr.rel (0) target = $region29
    $region28: #{tpu_custom_call.1} parent=1 // pred_region
      %s48 = ssub.s32 512, 512
      %49 = vsyncadd [#allocation8], %s48
      %s50 = sshll.u32 [#allocation7], 4
      %s51 = int_to_ptr.vmem [resolvable:$true] %s50
      %56 = dma.hbm_to_vmem [thread:$0]  %s6, 512, %s51, [#allocation8], 128, 128, 8
    $region29: #{tpu_custom_call.1} parent=1 // pred_fallthru
      _
    // Predicated region
    $region30: #{tpu_custom_call.1} parent=1 // pred_check
      _
    $region31: #{tpu_custom_call.1} parent=1 // pred_check_branch
      %58 = sbr.rel (0) target = $region33
    $region32: #{tpu_custom_call.1} parent=1 // pred_region
      %s60 = ssub.s32 16, 16
      %61 = vsyncadd [#allocation8], %s60
      %s63 = sshll.u32 [#allocation9], 4
      %s64 = int_to_ptr.vmem [resolvable:$true] %s63
      %66 = dma.hbm_to_vmem [thread:$0]  %s7, 16, %s64, [#allocation8]
    $region33: #{tpu_custom_call.1} parent=1 // pred_fallthru
      _
    // Predicated region
    $region34: #{tpu_custom_call.1} parent=1 // pred_check
      _
    $region35: #{tpu_custom_call.1} parent=1 // pred_check_branch
      %68 = sbr.rel (0) target = $region37
    $region36: #{tpu_custom_call.1} parent=1 // pred_region
      %s70 = ssub.s32 16, 16
      %71 = vsyncadd [#allocation11], %s70
      %s73 = sshll.u32 [#allocation10], 4
      %s74 = int_to_ptr.vmem [resolvable:$true] %s73
      %76 = dma.hbm_to_vmem [thread:$0]  %s8, 16, %s74, [#allocation11]
    $region37: #{tpu_custom_call.1} parent=1 // pred_fallthru
      _
    // Predicated region
    $region38: #{tpu_custom_call.1} parent=1 // pred_check
      _
    $region39: #{tpu_custom_call.1} parent=1 // pred_check_branch
      %78 = sbr.rel (0) target = $region41
    $region40: #{tpu_custom_call.1} parent=1 // pred_region
      _
    $region41: #{tpu_custom_call.1} parent=1 // pred_fallthru
      _
    // Predicated region
    $region42: #{tpu_custom_call.1} parent=1 // pred_check
      _
    $region43: #{tpu_custom_call.1} parent=1 // pred_check_branch
      %80 = sbr.rel (0) target = $region45
    $region44: #{tpu_custom_call.1} parent=1 // pred_region
      _
    $region45: #{tpu_custom_call.1} parent=1 // pred_fallthru
      _
    // Predicated region
    $region46: #{tpu_custom_call.1} parent=1 // pred_check
      _
    $region47: #{tpu_custom_call.1} parent=1 // pred_check_branch
      %82 = sbr.rel (0) target = $region49
    $region48: #{tpu_custom_call.1} parent=1 // pred_region
      %83 = dma.done [#allocation5], 256
    $region49: #{tpu_custom_call.1} parent=1 // pred_fallthru
      _
    // Predicated region
    $region50: #{tpu_custom_call.1} parent=1 // pred_check
      _
    $region51: #{tpu_custom_call.1} parent=1 // pred_check_branch
      %85 = sbr.rel (0) target = $region53
    $region52: #{tpu_custom_call.1} parent=1 // pred_region
      %86 = dma.done [#allocation8], 512
    $region53: #{tpu_custom_call.1} parent=1 // pred_fallthru
      _
    // Predicated region
    $region54: #{tpu_custom_call.1} parent=1 // pred_check
      _
    $region55: #{tpu_custom_call.1} parent=1 // pred_check_branch
      %88 = sbr.rel (0) target = $region57
    $region56: #{tpu_custom_call.1} parent=1 // pred_region
      %89 = dma.done [#allocation8], 16
    $region57: #{tpu_custom_call.1} parent=1 // pred_fallthru
      _
    // Predicated region
    $region58: #{tpu_custom_call.1} parent=1 // pred_check
      _
    $region59: #{tpu_custom_call.1} parent=1 // pred_check_branch
      %91 = sbr.rel (0) target = $region61
    $region60: #{tpu_custom_call.1} parent=1 // pred_region
      %92 = dma.done [#allocation11], 16
    $region61: #{tpu_custom_call.1} parent=1 // pred_fallthru
      _
    %v93 = vld [vmem:[#allocation4] sm:$0xff]
    %v94 = vld [vmem:[#allocation4 + $0x8] sm:$0xff]
    %v95 = vld [vmem:[%s1] sm:$0xff]
    %v96 = vld [vmem:[%s1 + $0x8] sm:$0xff]
    %v97 = vld [vmem:[%s1 + $0x10] sm:$0xff]
    %v98 = vld [vmem:[%s1 + $0x18] sm:$0xff]
    %v99 = vld [vmem:[%s3] sm:$0x1]
    %v101 = vlaneseq
    %v102 = vshrl.u32 %v101, 7
    %v103 = vsub.s32 0, %v102
    %v104 = vrot.slane %v99, %v103
    %vm106 = vcmask 261120
    %v108 = vsel %vm106, %v93, 0
    %v111 = vsel %vm106, %v94, 0
    %113 = vmatprep.subr.mxu0 0.0
    %114 = vmatpush1.msra.mxu0 %v95
    %115 = vmatprep.subr.mxu0 0.0
    %116 = vmatpush1.msra.mxu0 %v96
    %117 = vmatprep.subr.mxu0 0.0
    %118 = vmatpush1.msra.mxu0 %v97
    %119 = vmatprep.subr.mxu0 0.0
    %120 = vmatpush1.msra.mxu0 %v98
    %121 = vmatprep.subr.mxu0 0.0
    %122 = vmatpush1.msra.mxu0 0.0
    %123 = vmatprep.subr.mxu0 0.0
    %124 = vmatpush1.msra.mxu0 0.0
    %125 = vmatprep.subr.mxu0 0.0
    %126 = vmatpush1.msra.mxu0 0.0
    %127 = vmatprep.subr.mxu0 0.0
    %128 = vmatpush1.msra.mxu0 0.0
    %129 = vmatprep.subr.mxu0 0.0
    %130 = vmatpush1.msra.mxu0 0.0
    %131 = vmatprep.subr.mxu0 0.0
    %132 = vmatpush1.msra.mxu0 0.0
    %133 = vmatprep.subr.mxu0 0.0
    %134 = vmatpush1.msra.mxu0 0.0
    %135 = vmatprep.subr.mxu0 0.0
    %136 = vmatpush1.msra.mxu0 0.0
    %137 = vmatprep.subr.mxu0 0.0
    %138 = vmatpush1.msra.mxu0 0.0
    %139 = vmatprep.subr.mxu0 0.0
    %140 = vmatpush1.msra.mxu0 0.0
    %141 = vmatprep.subr.mxu0 0.0
    %142 = vmatpush1.msra.mxu0 0.0
    %143 = vmatprep.subr.mxu0 0.0
    %144 = vmatpush1.msra.mxu0 0.0
    %145 = vmatprep.subr.mxu0 0.0
    %146 = vmatpush1.msra.mxu0 0.0
    %147 = vmatprep.subr.mxu0 0.0
    %148 = vmatpush1.msra.mxu0 0.0
    %149 = vmatprep.subr.mxu0 0.0
    %150 = vmatpush1.msra.mxu0 0.0
    %151 = vmatprep.subr.mxu0 0.0
    %152 = vmatpush1.msra.mxu0 0.0
    %153 = vmatprep.subr.mxu0 0.0
    %154 = vmatpush1.msra.mxu0 0.0
    %155 = vmatprep.subr.mxu0 0.0
    %156 = vmatpush1.msra.mxu0 0.0
    %157 = vmatprep.subr.mxu0 0.0
    %158 = vmatpush1.msra.mxu0 0.0
    %159 = vmatprep.subr.mxu0 0.0
    %160 = vmatpush1.msra.mxu0 0.0
    %161 = vmatprep.subr.mxu0 0.0
    %162 = vmatpush1.msra.mxu0 0.0
    %163 = vmatprep.subr.mxu0 0.0
    %164 = vmatpush1.msra.mxu0 0.0
    %165 = vmatprep.subr.mxu0 0.0
    %166 = vmatpush1.msra.mxu0 0.0
    %167 = vmatprep.subr.mxu0 0.0
    %168 = vmatpush1.msra.mxu0 0.0
    %169 = vmatprep.subr.mxu0 0.0
    %170 = vmatpush1.msra.mxu0 0.0
    %171 = vmatprep.subr.mxu0 0.0
    %172 = vmatpush1.msra.mxu0 0.0
    %173 = vmatprep.subr.mxu0 0.0
    %174 = vmatpush1.msra.mxu0 0.0
    %175 = vmatprep.subr.mxu0 0.0
    %176 = vmatpush1.msra.mxu0 0.0
    %177 = vmatprep.mubr.f32.mxu0 0.0
    %178 = vmatmul.mubr.f32.gmra.mrb[0].mxu0 %v108
    %v179 = vpop.f32.mrb[0].mxu0
    %v180 = vadd.f32 %v104, %v179
    %v181 = vpop.f32.mrb[0].mxu0
    %182 = vmatprep.mubr.f32.mxu0 0.0
    %183 = vmatmul.mubr.f32.gmra.mrb[0].mxu0 %v111
    %v184 = vpop.f32.mrb[0].mxu0
    %v185 = vadd.f32 %v104, %v184
    %v186 = vpop.f32.mrb[0].mxu0
    %187 = vdwg.mxu0
    %vm188 = vcmask 785408
    %189 = vst.msk [vmem:[#allocation2] sm:$0xff] %vm188, %v180
    %190 = vst.msk [vmem:[#allocation2 + $0x8] sm:$0xff] %vm188, %v185
    %v191 = vld [vmem:[%s5] sm:$0xff]
    %v192 = vld [vmem:[%s5 + $0x8] sm:$0xff]
    %v193 = vld [vmem:[%s5 + $0x10] sm:$0xff]
    %v194 = vld [vmem:[%s5 + $0x18] sm:$0xff]
    %v195 = vld [vmem:[#allocation9] sm:$0x1]
    %v197 = vlaneseq
    %v198 = vshrl.u32 %v197, 7
    %v199 = vsub.s32 0, %v198
    %v200 = vrot.slane %v195, %v199
    %202 = vmatprep.subr.mxu0 0.0
    %203 = vmatpush1.msra.mxu0 %v191
    %204 = vmatprep.subr.mxu0 0.0
    %205 = vmatpush1.msra.mxu0 %v192
    %206 = vmatprep.subr.mxu0 0.0
    %207 = vmatpush1.msra.mxu0 %v193
    %208 = vmatprep.subr.mxu0 0.0
    %209 = vmatpush1.msra.mxu0 %v194
    %210 = vmatprep.subr.mxu0 0.0
    %211 = vmatpush1.msra.mxu0 0.0
    %212 = vmatprep.subr.mxu0 0.0
    %213 = vmatpush1.msra.mxu0 0.0
    %214 = vmatprep.subr.mxu0 0.0
    %215 = vmatpush1.msra.mxu0 0.0
    %216 = vmatprep.subr.mxu0 0.0
    %217 = vmatpush1.msra.mxu0 0.0
    %218 = vmatprep.subr.mxu0 0.0
    %219 = vmatpush1.msra.mxu0 0.0
    %220 = vmatprep.subr.mxu0 0.0
    %221 = vmatpush1.msra.mxu0 0.0
    %222 = vmatprep.subr.mxu0 0.0
    %223 = vmatpush1.msra.mxu0 0.0
    %224 = vmatprep.subr.mxu0 0.0
    %225 = vmatpush1.msra.mxu0 0.0
    %226 = vmatprep.subr.mxu0 0.0
    %227 = vmatpush1.msra.mxu0 0.0
    %228 = vmatprep.subr.mxu0 0.0
    %229 = vmatpush1.msra.mxu0 0.0
    %230 = vmatprep.subr.mxu0 0.0
    %231 = vmatpush1.msra.mxu0 0.0
    %232 = vmatprep.subr.mxu0 0.0
    %233 = vmatpush1.msra.mxu0 0.0
    %234 = vmatprep.subr.mxu0 0.0
    %235 = vmatpush1.msra.mxu0 0.0
    %236 = vmatprep.subr.mxu0 0.0
    %237 = vmatpush1.msra.mxu0 0.0
    %238 = vmatprep.subr.mxu0 0.0
    %239 = vmatpush1.msra.mxu0 0.0
    %240 = vmatprep.subr.mxu0 0.0
    %241 = vmatpush1.msra.mxu0 0.0
    %242 = vmatprep.subr.mxu0 0.0
    %243 = vmatpush1.msra.mxu0 0.0
    %244 = vmatprep.subr.mxu0 0.0
    %245 = vmatpush1.msra.mxu0 0.0
    %246 = vmatprep.subr.mxu0 0.0
    %247 = vmatpush1.msra.mxu0 0.0
    %248 = vmatprep.subr.mxu0 0.0
    %249 = vmatpush1.msra.mxu0 0.0
    %250 = vmatprep.subr.mxu0 0.0
    %251 = vmatpush1.msra.mxu0 0.0
    %252 = vmatprep.subr.mxu0 0.0
    %253 = vmatpush1.msra.mxu0 0.0
    %254 = vmatprep.subr.mxu0 0.0
    %255 = vmatpush1.msra.mxu0 0.0
    %256 = vmatprep.subr.mxu0 0.0
    %257 = vmatpush1.msra.mxu0 0.0
    %258 = vmatprep.subr.mxu0 0.0
    %259 = vmatpush1.msra.mxu0 0.0
    %260 = vmatprep.subr.mxu0 0.0
    %261 = vmatpush1.msra.mxu0 0.0
    %262 = vmatprep.subr.mxu0 0.0
    %263 = vmatpush1.msra.mxu0 0.0
    %264 = vmatprep.subr.mxu0 0.0
    %265 = vmatpush1.msra.mxu0 0.0
    %266 = vmatprep.mubr.f32.mxu0 0.0
    %267 = vmatmul.mubr.f32.gmra.mrb[0].mxu0 %v108
    %v268 = vpop.f32.mrb[0].mxu0
    %v269 = vadd.f32 %v200, %v268
    %v270 = vpop.f32.mrb[0].mxu0
    %271 = vmatprep.mubr.f32.mxu0 0.0
    %272 = vmatmul.mubr.f32.gmra.mrb[0].mxu0 %v111
    %v273 = vpop.f32.mrb[0].mxu0
    %v274 = vadd.f32 %v200, %v273
    %v275 = vpop.f32.mrb[0].mxu0
    %276 = vdwg.mxu0
    %277 = vst.msk [vmem:[#allocation3] sm:$0xff] %vm188, %v269
    %278 = vst.msk [vmem:[#allocation3 + $0x8] sm:$0xff] %vm188, %v274
    %v279 = vld [vmem:[%s2] sm:$0xff]
    %v280 = vld [vmem:[%s2 + $0x8] sm:$0xff]
    %v281 = vld [vmem:[%s2 + $0x10] sm:$0xff]
    %v282 = vld [vmem:[%s2 + $0x18] sm:$0xff]
    %v283 = vld [vmem:[#allocation7] sm:$0xff]
    %v284 = vld [vmem:[#allocation7 + $0x8] sm:$0xff]
    %v285 = vld [vmem:[#allocation7 + $0x10] sm:$0xff]
    %v286 = vld [vmem:[#allocation7 + $0x18] sm:$0xff]
    %v287 = vld [vmem:[%s4] sm:$0x1]
    %v288 = vld [vmem:[#allocation10] sm:$0x1]
    %v290 = vsel %vm106, 0.0, 0
    %292 = vmatprep.subr.mxu0 0.0
    %293 = vmatpush1.msra.mxu0 %v279
    %294 = vmatprep.subr.mxu0 0.0
    %295 = vmatpush1.msra.mxu0 %v280
    %296 = vmatprep.subr.mxu0 0.0
    %297 = vmatpush1.msra.mxu0 %v281
    %298 = vmatprep.subr.mxu0 0.0
    %299 = vmatpush1.msra.mxu0 %v282
    %300 = vmatprep.subr.mxu0 0.0
    %301 = vmatpush1.msra.mxu0 0.0
    %302 = vmatprep.subr.mxu0 0.0
    %303 = vmatpush1.msra.mxu0 0.0
    %304 = vmatprep.subr.mxu0 0.0
    %305 = vmatpush1.msra.mxu0 0.0
    %306 = vmatprep.subr.mxu0 0.0
    %307 = vmatpush1.msra.mxu0 0.0
    %308 = vmatprep.subr.mxu0 0.0
    %309 = vmatpush1.msra.mxu0 0.0
    %310 = vmatprep.subr.mxu0 0.0
    %311 = vmatpush1.msra.mxu0 0.0
    %312 = vmatprep.subr.mxu0 0.0
    %313 = vmatpush1.msra.mxu0 0.0
    %314 = vmatprep.subr.mxu0 0.0
    %315 = vmatpush1.msra.mxu0 0.0
    %316 = vmatprep.subr.mxu0 0.0
    %317 = vmatpush1.msra.mxu0 0.0
    %318 = vmatprep.subr.mxu0 0.0
    %319 = vmatpush1.msra.mxu0 0.0
    %320 = vmatprep.subr.mxu0 0.0
    %321 = vmatpush1.msra.mxu0 0.0
    %322 = vmatprep.subr.mxu0 0.0
    %323 = vmatpush1.msra.mxu0 0.0
    %324 = vmatprep.subr.mxu0 0.0
    %325 = vmatpush1.msra.mxu0 0.0
    %326 = vmatprep.subr.mxu0 0.0
    %327 = vmatpush1.msra.mxu0 0.0
    %328 = vmatprep.subr.mxu0 0.0
    %329 = vmatpush1.msra.mxu0 0.0
    %330 = vmatprep.subr.mxu0 0.0
    %331 = vmatpush1.msra.mxu0 0.0
    %332 = vmatprep.subr.mxu0 0.0
    %333 = vmatpush1.msra.mxu0 0.0
    %334 = vmatprep.subr.mxu0 0.0
    %335 = vmatpush1.msra.mxu0 0.0
    %336 = vmatprep.subr.mxu0 0.0
    %337 = vmatpush1.msra.mxu0 0.0
    %338 = vmatprep.subr.mxu0 0.0
    %339 = vmatpush1.msra.mxu0 0.0
    %340 = vmatprep.subr.mxu0 0.0
    %341 = vmatpush1.msra.mxu0 0.0
    %342 = vmatprep.subr.mxu0 0.0
    %343 = vmatpush1.msra.mxu0 0.0
    %344 = vmatprep.subr.mxu0 0.0
    %345 = vmatpush1.msra.mxu0 0.0
    %346 = vmatprep.subr.mxu0 0.0
    %347 = vmatpush1.msra.mxu0 0.0
    %348 = vmatprep.subr.mxu0 0.0
    %349 = vmatpush1.msra.mxu0 0.0
    %350 = vmatprep.subr.mxu0 0.0
    %351 = vmatpush1.msra.mxu0 0.0
    %352 = vmatprep.subr.mxu0 0.0
    %353 = vmatpush1.msra.mxu0 0.0
    %354 = vmatprep.subr.mxu0 0.0
    %355 = vmatpush1.msra.mxu0 0.0
    %356 = vmatprep.mubr.f32.mxu0 0.0
    %357 = vmatmul.mubr.f32.gmra.mrb[0].mxu0 %v290
    %v358 = vpop.f32.mrb[0].mxu0
    %v359 = vadd.f32 0.0, %v358
    %v360 = vpop.f32.mrb[0].mxu0
    %361 = vdwg.mxu0
    %362 = vmatprep.subr.mxu0 0.0
    %363 = vmatpush1.msra.mxu0 %v283
    %364 = vmatprep.subr.mxu0 0.0
    %365 = vmatpush1.msra.mxu0 %v284
    %366 = vmatprep.subr.mxu0 0.0
    %367 = vmatpush1.msra.mxu0 %v285
    %368 = vmatprep.subr.mxu0 0.0
    %369 = vmatpush1.msra.mxu0 %v286
    %370 = vmatprep.subr.mxu0 0.0
    %371 = vmatpush1.msra.mxu0 0.0
    %372 = vmatprep.subr.mxu0 0.0
    %373 = vmatpush1.msra.mxu0 0.0
    %374 = vmatprep.subr.mxu0 0.0
    %375 = vmatpush1.msra.mxu0 0.0
    %376 = vmatprep.subr.mxu0 0.0
    %377 = vmatpush1.msra.mxu0 0.0
    %378 = vmatprep.subr.mxu0 0.0
    %379 = vmatpush1.msra.mxu0 0.0
    %380 = vmatprep.subr.mxu0 0.0
    %381 = vmatpush1.msra.mxu0 0.0
    %382 = vmatprep.subr.mxu0 0.0
    %383 = vmatpush1.msra.mxu0 0.0
    %384 = vmatprep.subr.mxu0 0.0
    %385 = vmatpush1.msra.mxu0 0.0
    %386 = vmatprep.subr.mxu0 0.0
    %387 = vmatpush1.msra.mxu0 0.0
    %388 = vmatprep.subr.mxu0 0.0
    %389 = vmatpush1.msra.mxu0 0.0
    %390 = vmatprep.subr.mxu0 0.0
    %391 = vmatpush1.msra.mxu0 0.0
    %392 = vmatprep.subr.mxu0 0.0
    %393 = vmatpush1.msra.mxu0 0.0
    %394 = vmatprep.subr.mxu0 0.0
    %395 = vmatpush1.msra.mxu0 0.0
    %396 = vmatprep.subr.mxu0 0.0
    %397 = vmatpush1.msra.mxu0 0.0
    %398 = vmatprep.subr.mxu0 0.0
    %399 = vmatpush1.msra.mxu0 0.0
    %400 = vmatprep.subr.mxu0 0.0
    %401 = vmatpush1.msra.mxu0 0.0
    %402 = vmatprep.subr.mxu0 0.0
    %403 = vmatpush1.msra.mxu0 0.0
    %404 = vmatprep.subr.mxu0 0.0
    %405 = vmatpush1.msra.mxu0 0.0
    %406 = vmatprep.subr.mxu0 0.0
    %407 = vmatpush1.msra.mxu0 0.0
    %408 = vmatprep.subr.mxu0 0.0
    %409 = vmatpush1.msra.mxu0 0.0
    %410 = vmatprep.subr.mxu0 0.0
    %411 = vmatpush1.msra.mxu0 0.0
    %412 = vmatprep.subr.mxu0 0.0
    %413 = vmatpush1.msra.mxu0 0.0
    %414 = vmatprep.subr.mxu0 0.0
    %415 = vmatpush1.msra.mxu0 0.0
    %416 = vmatprep.subr.mxu0 0.0
    %417 = vmatpush1.msra.mxu0 0.0
    %418 = vmatprep.subr.mxu0 0.0
    %419 = vmatpush1.msra.mxu0 0.0
    %420 = vmatprep.subr.mxu0 0.0
    %421 = vmatpush1.msra.mxu0 0.0
    %422 = vmatprep.subr.mxu0 0.0
    %423 = vmatpush1.msra.mxu0 0.0
    %424 = vmatprep.subr.mxu0 0.0
    %425 = vmatpush1.msra.mxu0 0.0
    %426 = vmatprep.mubr.f32.mxu0 0.0
    %427 = vmatmul.mubr.f32.gmra.mrb[0].mxu0 %v290
    %v428 = vpop.f32.mrb[0].mxu0
    %v429 = vadd.f32 0.0, %v428
    %v430 = vpop.f32.mrb[0].mxu0
    %431 = vdwg.mxu0
    %v432 = vld [vmem:[#allocation2] sm:$0x3]
    %v433 = vld [vmem:[#allocation3 + $0xe] sm:$0x3]
    %v434 = vadd.f32 %v432, %v359
    %v435 = vxor.u32 %v434, 2147483648
    %v436 = vmul.f32 %v435, 1.442695
    %v437 = vpow.pop %v436
    %v438 = vadd.f32 %v437, 1.0
    %v439 = vrcp.pop %v438
    %v440 = vmul.f32 1.0, %v439
    %v442 = vlaneseq
    %v443 = vshrl.u32 %v442, 7
    %v444 = vsub.s32 0, %v443
    %v445 = vrot.slane %v287, %v444
    %446 = vrot.lane.b32.xlu0 %v445, 64
    %v447 = vpop.permute.xlu0 %446
    %v449 = vadd.f32 %v359, %v447
    %451 = vrot.lane.b32.xlu0 %v449, 64
    %v452 = vpop.permute.xlu0 %451
    %v454 = vmul.f32 %v440, %v452
    %456 = vrot.lane.b32.xlu0 %v454, 64
    %v457 = vpop.permute.xlu0 %456
    %v459 = vadd.f32 %v432, %v457
    %v460 = vtanh.pop %v459
    %v461 = vsub.f32 1.0, %v440
    %463 = vrot.lane.b32.xlu0 %v460, 96
    %v464 = vpop.permute.xlu0 %463
    %v466 = vmul.f32 %v461, %v464
    %v467 = vmul.f32 %v440, 0.0
    %v468 = vadd.f32 %v466, %v467
    %v469 = vadd.f32 %v433, %v429
    %v470 = vxor.u32 %v469, 2147483648
    %v471 = vmul.f32 %v470, 1.442695
    %v472 = vpow.pop %v471
    %v473 = vadd.f32 %v472, 1.0
    %v474 = vrcp.pop %v473
    %v475 = vmul.f32 1.0, %v474
    %v477 = vlaneseq
    %v478 = vshrl.u32 %v477, 7
    %v479 = vsub.s32 0, %v478
    %v480 = vrot.slane %v288, %v479
    %481 = vrot.lane.b32.xlu0 %v480, 64
    %v482 = vpop.permute.xlu0 %481
    %v484 = vadd.f32 %v429, %v482
    %486 = vrot.lane.b32.xlu0 %v484, 64
    %v487 = vpop.permute.xlu0 %486
    %v489 = vmul.f32 %v475, %v487
    %491 = vrot.lane.b32.xlu0 %v489, 64
    %v492 = vpop.permute.xlu0 %491
    %v494 = vadd.f32 %v433, %v492
    %v495 = vtanh.pop %v494
    %v496 = vsub.f32 1.0, %v475
    %498 = vrot.lane.b32.xlu0 %v495, 96
    %v499 = vpop.permute.xlu0 %498
    %v501 = vmul.f32 %v496, %v499
    %v502 = vmul.f32 %v475, 0.0
    %v503 = vadd.f32 %v501, %v502
    %505 = vrot.lane.b32.xlu0 %v468, 96
    %v506 = vpop.permute.xlu0 %505
    %vm508 = vcmask 254976
    %509 = vst.msk [vmem:[#allocation12] sm:$0x3] %vm508, %v506
    %s510 = scalar_lea.vmem [#allocation12], 14
    %vm511 = vcmask 517376
    %512 = vst.msk [vmem:[%s510] sm:$0x3] %vm511, %v503
    %v513 = vsel %vm106, %v506, 0
    %515 = vmatprep.subr.mxu0 0.0
    %516 = vmatpush1.msra.mxu0 %v279
    %517 = vmatprep.subr.mxu0 0.0
    %518 = vmatpush1.msra.mxu0 %v280
    %519 = vmatprep.subr.mxu0 0.0
    %520 = vmatpush1.msra.mxu0 %v281
    %521 = vmatprep.subr.mxu0 0.0
    %522 = vmatpush1.msra.mxu0 %v282
    %523 = vmatprep.subr.mxu0 0.0
    %524 = vmatpush1.msra.mxu0 0.0
    %525 = vmatprep.subr.mxu0 0.0
    %526 = vmatpush1.msra.mxu0 0.0
    %527 = vmatprep.subr.mxu0 0.0
    %528 = vmatpush1.msra.mxu0 0.0
    %529 = vmatprep.subr.mxu0 0.0
    %530 = vmatpush1.msra.mxu0 0.0
    %531 = vmatprep.subr.mxu0 0.0
    %532 = vmatpush1.msra.mxu0 0.0
    %533 = vmatprep.subr.mxu0 0.0
    %534 = vmatpush1.msra.mxu0 0.0
    %535 = vmatprep.subr.mxu0 0.0
    %536 = vmatpush1.msra.mxu0 0.0
    %537 = vmatprep.subr.mxu0 0.0
    %538 = vmatpush1.msra.mxu0 0.0
    %539 = vmatprep.subr.mxu0 0.0
    %540 = vmatpush1.msra.mxu0 0.0
    %541 = vmatprep.subr.mxu0 0.0
    %542 = vmatpush1.msra.mxu0 0.0
    %543 = vmatprep.subr.mxu0 0.0
    %544 = vmatpush1.msra.mxu0 0.0
    %545 = vmatprep.subr.mxu0 0.0
    %546 = vmatpush1.msra.mxu0 0.0
    %547 = vmatprep.subr.mxu0 0.0
    %548 = vmatpush1.msra.mxu0 0.0
    %549 = vmatprep.subr.mxu0 0.0
    %550 = vmatpush1.msra.mxu0 0.0
    %551 = vmatprep.subr.mxu0 0.0
    %552 = vmatpush1.msra.mxu0 0.0
    %553 = vmatprep.subr.mxu0 0.0
    %554 = vmatpush1.msra.mxu0 0.0
    %555 = vmatprep.subr.mxu0 0.0
    %556 = vmatpush1.msra.mxu0 0.0
    %557 = vmatprep.subr.mxu0 0.0
    %558 = vmatpush1.msra.mxu0 0.0
    %559 = vmatprep.subr.mxu0 0.0
    %560 = vmatpush1.msra.mxu0 0.0
    %561 = vmatprep.subr.mxu0 0.0
    %562 = vmatpush1.msra.mxu0 0.0
    %563 = vmatprep.subr.mxu0 0.0
    %564 = vmatpush1.msra.mxu0 0.0
    %565 = vmatprep.subr.mxu0 0.0
    %566 = vmatpush1.msra.mxu0 0.0
    %567 = vmatprep.subr.mxu0 0.0
    %568 = vmatpush1.msra.mxu0 0.0
    %569 = vmatprep.subr.mxu0 0.0
    %570 = vmatpush1.msra.mxu0 0.0
    %571 = vmatprep.subr.mxu0 0.0
    %572 = vmatpush1.msra.mxu0 0.0
    %573 = vmatprep.subr.mxu0 0.0
    %574 = vmatpush1.msra.mxu0 0.0
    %575 = vmatprep.subr.mxu0 0.0
    %576 = vmatpush1.msra.mxu0 0.0
    %577 = vmatprep.subr.mxu0 0.0
    %578 = vmatpush1.msra.mxu0 0.0
    %579 = vmatprep.mubr.f32.mxu0 0.0
    %580 = vmatmul.mubr.f32.gmra.mrb[0].mxu0 %v513
    %v581 = vpop.f32.mrb[0].mxu0
    %v582 = vadd.f32 0.0, %v581
    %v583 = vpop.f32.mrb[0].mxu0
    %584 = vdwg.mxu0
    %586 = vrot.lane.b32.xlu0 %v503, 96
    %v587 = vpop.permute.xlu0 %586
    %v588 = vsel %vm106, %v587, 0
    %590 = vmatprep.subr.mxu0 0.0
    %591 = vmatpush1.msra.mxu0 %v283
    %592 = vmatprep.subr.mxu0 0.0
    %593 = vmatpush1.msra.mxu0 %v284
    %594 = vmatprep.subr.mxu0 0.0
    %595 = vmatpush1.msra.mxu0 %v285
    %596 = vmatprep.subr.mxu0 0.0
    %597 = vmatpush1.msra.mxu0 %v286
    %598 = vmatprep.subr.mxu0 0.0
    %599 = vmatpush1.msra.mxu0 0.0
    %600 = vmatprep.subr.mxu0 0.0
    %601 = vmatpush1.msra.mxu0 0.0
    %602 = vmatprep.subr.mxu0 0.0
    %603 = vmatpush1.msra.mxu0 0.0
    %604 = vmatprep.subr.mxu0 0.0
    %605 = vmatpush1.msra.mxu0 0.0
    %606 = vmatprep.subr.mxu0 0.0
    %607 = vmatpush1.msra.mxu0 0.0
    %608 = vmatprep.subr.mxu0 0.0
    %609 = vmatpush1.msra.mxu0 0.0
    %610 = vmatprep.subr.mxu0 0.0
    %611 = vmatpush1.msra.mxu0 0.0
    %612 = vmatprep.subr.mxu0 0.0
    %613 = vmatpush1.msra.mxu0 0.0
    %614 = vmatprep.subr.mxu0 0.0
    %615 = vmatpush1.msra.mxu0 0.0
    %616 = vmatprep.subr.mxu0 0.0
    %617 = vmatpush1.msra.mxu0 0.0
    %618 = vmatprep.subr.mxu0 0.0
    %619 = vmatpush1.msra.mxu0 0.0
    %620 = vmatprep.subr.mxu0 0.0
    %621 = vmatpush1.msra.mxu0 0.0
    %622 = vmatprep.subr.mxu0 0.0
    %623 = vmatpush1.msra.mxu0 0.0
    %624 = vmatprep.subr.mxu0 0.0
    %625 = vmatpush1.msra.mxu0 0.0
    %626 = vmatprep.subr.mxu0 0.0
    %627 = vmatpush1.msra.mxu0 0.0
    %628 = vmatprep.subr.mxu0 0.0
    %629 = vmatpush1.msra.mxu0 0.0
    %630 = vmatprep.subr.mxu0 0.0
    %631 = vmatpush1.msra.mxu0 0.0
    %632 = vmatprep.subr.mxu0 0.0
    %633 = vmatpush1.msra.mxu0 0.0
    %634 = vmatprep.subr.mxu0 0.0
    %635 = vmatpush1.msra.mxu0 0.0
    %636 = vmatprep.subr.mxu0 0.0
    %637 = vmatpush1.msra.mxu0 0.0
    %638 = vmatprep.subr.mxu0 0.0
    %639 = vmatpush1.msra.mxu0 0.0
    %640 = vmatprep.subr.mxu0 0.0
    %641 = vmatpush1.msra.mxu0 0.0
    %642 = vmatprep.subr.mxu0 0.0
    %643 = vmatpush1.msra.mxu0 0.0
    %644 = vmatprep.subr.mxu0 0.0
    %645 = vmatpush1.msra.mxu0 0.0
    %646 = vmatprep.subr.mxu0 0.0
    %647 = vmatpush1.msra.mxu0 0.0
    %648 = vmatprep.subr.mxu0 0.0
    %649 = vmatpush1.msra.mxu0 0.0
    %650 = vmatprep.subr.mxu0 0.0
    %651 = vmatpush1.msra.mxu0 0.0
    %652 = vmatprep.subr.mxu0 0.0
    %653 = vmatpush1.msra.mxu0 0.0
    %654 = vmatprep.mubr.f32.mxu0 0.0
    %655 = vmatmul.mubr.f32.gmra.mrb[0].mxu0 %v588
    %v656 = vpop.f32.mrb[0].mxu0
    %v657 = vadd.f32 0.0, %v656
    %v658 = vpop.f32.mrb[0].mxu0
    %659 = vdwg.mxu0
    %v660 = vld [vmem:[#allocation2 + $0x2] sm:$0x3]
    %v661 = vld [vmem:[#allocation3 + $0xc] sm:$0x3]
    %v662 = vadd.f32 %v660, %v582
    %v663 = vxor.u32 %v662, 2147483648
    %v664 = vmul.f32 %v663, 1.442695
    %v665 = vpow.pop %v664
    %v666 = vadd.f32 %v665, 1.0
    %v667 = vrcp.pop %v666
    %v668 = vmul.f32 1.0, %v667
    %v669 = vadd.f32 %v582, %v447
    %671 = vrot.lane.b32.xlu0 %v669, 64
    %v672 = vpop.permute.xlu0 %671
    %v674 = vmul.f32 %v668, %v672
    %676 = vrot.lane.b32.xlu0 %v674, 64
    %v677 = vpop.permute.xlu0 %676
    %v679 = vadd.f32 %v660, %v677
    %v680 = vtanh.pop %v679
    %v681 = vsub.f32 1.0, %v668
    %683 = vrot.lane.b32.xlu0 %v680, 96
    %v684 = vpop.permute.xlu0 %683
    %v686 = vmul.f32 %v681, %v684
    %v687 = vmul.f32 %v668, %v468
    %v688 = vadd.f32 %v686, %v687
    %v689 = vadd.f32 %v661, %v657
    %v690 = vxor.u32 %v689, 2147483648
    %v691 = vmul.f32 %v690, 1.442695
    %v692 = vpow.pop %v691
    %v693 = vadd.f32 %v692, 1.0
    %v694 = vrcp.pop %v693
    %v695 = vmul.f32 1.0, %v694
    %v696 = vadd.f32 %v657, %v482
    %698 = vrot.lane.b32.xlu0 %v696, 64
    %v699 = vpop.permute.xlu0 %698
    %v701 = vmul.f32 %v695, %v699
    %703 = vrot.lane.b32.xlu0 %v701, 64
    %v704 = vpop.permute.xlu0 %703
    %v706 = vadd.f32 %v661, %v704
    %v707 = vtanh.pop %v706
    %v708 = vsub.f32 1.0, %v695
    %710 = vrot.lane.b32.xlu0 %v707, 96
    %v711 = vpop.permute.xlu0 %710
    %v713 = vmul.f32 %v708, %v711
    %v714 = vmul.f32 %v695, %v503
    %v715 = vadd.f32 %v713, %v714
    %717 = vrot.lane.b32.xlu0 %v688, 96
    %v718 = vpop.permute.xlu0 %717
    %s720 = scalar_lea.vmem [#allocation12], 2
    %721 = vst.msk [vmem:[%s720] sm:$0x3] %vm508, %v718
    %s722 = scalar_lea.vmem [#allocation12], 12
    %723 = vst.msk [vmem:[%s722] sm:$0x3] %vm511, %v715
    %v724 = vsel %vm106, %v718, 0
    %726 = vmatprep.subr.mxu0 0.0
    %727 = vmatpush1.msra.mxu0 %v279
    %728 = vmatprep.subr.mxu0 0.0
    %729 = vmatpush1.msra.mxu0 %v280
    %730 = vmatprep.subr.mxu0 0.0
    %731 = vmatpush1.msra.mxu0 %v281
    %732 = vmatprep.subr.mxu0 0.0
    %733 = vmatpush1.msra.mxu0 %v282
    %734 = vmatprep.subr.mxu0 0.0
    %735 = vmatpush1.msra.mxu0 0.0
    %736 = vmatprep.subr.mxu0 0.0
    %737 = vmatpush1.msra.mxu0 0.0
    %738 = vmatprep.subr.mxu0 0.0
    %739 = vmatpush1.msra.mxu0 0.0
    %740 = vmatprep.subr.mxu0 0.0
    %741 = vmatpush1.msra.mxu0 0.0
    %742 = vmatprep.subr.mxu0 0.0
    %743 = vmatpush1.msra.mxu0 0.0
    %744 = vmatprep.subr.mxu0 0.0
    %745 = vmatpush1.msra.mxu0 0.0
    %746 = vmatprep.subr.mxu0 0.0
    %747 = vmatpush1.msra.mxu0 0.0
    %748 = vmatprep.subr.mxu0 0.0
    %749 = vmatpush1.msra.mxu0 0.0
    %750 = vmatprep.subr.mxu0 0.0
    %751 = vmatpush1.msra.mxu0 0.0
    %752 = vmatprep.subr.mxu0 0.0
    %753 = vmatpush1.msra.mxu0 0.0
    %754 = vmatprep.subr.mxu0 0.0
    %755 = vmatpush1.msra.mxu0 0.0
    %756 = vmatprep.subr.mxu0 0.0
    %757 = vmatpush1.msra.mxu0 0.0
    %758 = vmatprep.subr.mxu0 0.0
    %759 = vmatpush1.msra.mxu0 0.0
    %760 = vmatprep.subr.mxu0 0.0
    %761 = vmatpush1.msra.mxu0 0.0
    %762 = vmatprep.subr.mxu0 0.0
    %763 = vmatpush1.msra.mxu0 0.0
    %764 = vmatprep.subr.mxu0 0.0
    %765 = vmatpush1.msra.mxu0 0.0
    %766 = vmatprep.subr.mxu0 0.0
    %767 = vmatpush1.msra.mxu0 0.0
    %768 = vmatprep.subr.mxu0 0.0
    %769 = vmatpush1.msra.mxu0 0.0
    %770 = vmatprep.subr.mxu0 0.0
    %771 = vmatpush1.msra.mxu0 0.0
    %772 = vmatprep.subr.mxu0 0.0
    %773 = vmatpush1.msra.mxu0 0.0
    %774 = vmatprep.subr.mxu0 0.0
    %775 = vmatpush1.msra.mxu0 0.0
    %776 = vmatprep.subr.mxu0 0.0
    %777 = vmatpush1.msra.mxu0 0.0
    %778 = vmatprep.subr.mxu0 0.0
    %779 = vmatpush1.msra.mxu0 0.0
    %780 = vmatprep.subr.mxu0 0.0
    %781 = vmatpush1.msra.mxu0 0.0
    %782 = vmatprep.subr.mxu0 0.0
    %783 = vmatpush1.msra.mxu0 0.0
    %784 = vmatprep.subr.mxu0 0.0
    %785 = vmatpush1.msra.mxu0 0.0
    %786 = vmatprep.subr.mxu0 0.0
    %787 = vmatpush1.msra.mxu0 0.0
    %788 = vmatprep.subr.mxu0 0.0
    %789 = vmatpush1.msra.mxu0 0.0
    %790 = vmatprep.mubr.f32.mxu0 0.0
    %791 = vmatmul.mubr.f32.gmra.mrb[0].mxu0 %v724
    %v792 = vpop.f32.mrb[0].mxu0
    %v793 = vadd.f32 0.0, %v792
    %v794 = vpop.f32.mrb[0].mxu0
    %795 = vdwg.mxu0
    %797 = vrot.lane.b32.xlu0 %v715, 96
    %v798 = vpop.permute.xlu0 %797
    %v799 = vsel %vm106, %v798, 0
    %801 = vmatprep.subr.mxu0 0.0
    %802 = vmatpush1.msra.mxu0 %v283
    %803 = vmatprep.subr.mxu0 0.0
    %804 = vmatpush1.msra.mxu0 %v284
    %805 = vmatprep.subr.mxu0 0.0
    %806 = vmatpush1.msra.mxu0 %v285
    %807 = vmatprep.subr.mxu0 0.0
    %808 = vmatpush1.msra.mxu0 %v286
    %809 = vmatprep.subr.mxu0 0.0
    %810 = vmatpush1.msra.mxu0 0.0
    %811 = vmatprep.subr.mxu0 0.0
    %812 = vmatpush1.msra.mxu0 0.0
    %813 = vmatprep.subr.mxu0 0.0
    %814 = vmatpush1.msra.mxu0 0.0
    %815 = vmatprep.subr.mxu0 0.0
    %816 = vmatpush1.msra.mxu0 0.0
    %817 = vmatprep.subr.mxu0 0.0
    %818 = vmatpush1.msra.mxu0 0.0
    %819 = vmatprep.subr.mxu0 0.0
    %820 = vmatpush1.msra.mxu0 0.0
    %821 = vmatprep.subr.mxu0 0.0
    %822 = vmatpush1.msra.mxu0 0.0
    %823 = vmatprep.subr.mxu0 0.0
    %824 = vmatpush1.msra.mxu0 0.0
    %825 = vmatprep.subr.mxu0 0.0
    %826 = vmatpush1.msra.mxu0 0.0
    %827 = vmatprep.subr.mxu0 0.0
    %828 = vmatpush1.msra.mxu0 0.0
    %829 = vmatprep.subr.mxu0 0.0
    %830 = vmatpush1.msra.mxu0 0.0
    %831 = vmatprep.subr.mxu0 0.0
    %832 = vmatpush1.msra.mxu0 0.0
    %833 = vmatprep.subr.mxu0 0.0
    %834 = vmatpush1.msra.mxu0 0.0
    %835 = vmatprep.subr.mxu0 0.0
    %836 = vmatpush1.msra.mxu0 0.0
    %837 = vmatprep.subr.mxu0 0.0
    %838 = vmatpush1.msra.mxu0 0.0
    %839 = vmatprep.subr.mxu0 0.0
    %840 = vmatpush1.msra.mxu0 0.0
    %841 = vmatprep.subr.mxu0 0.0
    %842 = vmatpush1.msra.mxu0 0.0
    %843 = vmatprep.subr.mxu0 0.0
    %844 = vmatpush1.msra.mxu0 0.0
    %845 = vmatprep.subr.mxu0 0.0
    %846 = vmatpush1.msra.mxu0 0.0
    %847 = vmatprep.subr.mxu0 0.0
    %848 = vmatpush1.msra.mxu0 0.0
    %849 = vmatprep.subr.mxu0 0.0
    %850 = vmatpush1.msra.mxu0 0.0
    %851 = vmatprep.subr.mxu0 0.0
    %852 = vmatpush1.msra.mxu0 0.0
    %853 = vmatprep.subr.mxu0 0.0
    %854 = vmatpush1.msra.mxu0 0.0
    %855 = vmatprep.subr.mxu0 0.0
    %856 = vmatpush1.msra.mxu0 0.0
    %857 = vmatprep.subr.mxu0 0.0
    %858 = vmatpush1.msra.mxu0 0.0
    %859 = vmatprep.subr.mxu0 0.0
    %860 = vmatpush1.msra.mxu0 0.0
    %861 = vmatprep.subr.mxu0 0.0
    %862 = vmatpush1.msra.mxu0 0.0
    %863 = vmatprep.subr.mxu0 0.0
    %864 = vmatpush1.msra.mxu0 0.0
    %865 = vmatprep.mubr.f32.mxu0 0.0
    %866 = vmatmul.mubr.f32.gmra.mrb[0].mxu0 %v799
    %v867 = vpop.f32.mrb[0].mxu0
    %v868 = vadd.f32 0.0, %v867
    %v869 = vpop.f32.mrb[0].mxu0
    %870 = vdwg.mxu0
    %v871 = vld [vmem:[#allocation2 + $0x4] sm:$0x3]
    %v872 = vld [vmem:[#allocation3 + $0xa] sm:$0x3]
    %v873 = vadd.f32 %v871, %v793
    %v874 = vxor.u32 %v873, 2147483648
    %v875 = vmul.f32 %v874, 1.442695
    %v876 = vpow.pop %v875
    %v877 = vadd.f32 %v876, 1.0
    %v878 = vrcp.pop %v877
    %v879 = vmul.f32 1.0, %v878
    %v880 = vadd.f32 %v793, %v447
    %882 = vrot.lane.b32.xlu0 %v880, 64
    %v883 = vpop.permute.xlu0 %882
    %v885 = vmul.f32 %v879, %v883
    %887 = vrot.lane.b32.xlu0 %v885, 64
    %v888 = vpop.permute.xlu0 %887
    %v890 = vadd.f32 %v871, %v888
    %v891 = vtanh.pop %v890
    %v892 = vsub.f32 1.0, %v879
    %894 = vrot.lane.b32.xlu0 %v891, 96
    %v895 = vpop.permute.xlu0 %894
    %v897 = vmul.f32 %v892, %v895
    %v898 = vmul.f32 %v879, %v688
    %v899 = vadd.f32 %v897, %v898
    %v900 = vadd.f32 %v872, %v868
    %v901 = vxor.u32 %v900, 2147483648
    %v902 = vmul.f32 %v901, 1.442695
    %v903 = vpow.pop %v902
    %v904 = vadd.f32 %v903, 1.0
    %v905 = vrcp.pop %v904
    %v906 = vmul.f32 1.0, %v905
    %v907 = vadd.f32 %v868, %v482
    %909 = vrot.lane.b32.xlu0 %v907, 64
    %v910 = vpop.permute.xlu0 %909
    %v912 = vmul.f32 %v906, %v910
    %914 = vrot.lane.b32.xlu0 %v912, 64
    %v915 = vpop.permute.xlu0 %914
    %v917 = vadd.f32 %v872, %v915
    %v918 = vtanh.pop %v917
    %v919 = vsub.f32 1.0, %v906
    %921 = vrot.lane.b32.xlu0 %v918, 96
    %v922 = vpop.permute.xlu0 %921
    %v924 = vmul.f32 %v919, %v922
    %v925 = vmul.f32 %v906, %v715
    %v926 = vadd.f32 %v924, %v925
    %928 = vrot.lane.b32.xlu0 %v899, 96
    %v929 = vpop.permute.xlu0 %928
    %s931 = scalar_lea.vmem [#allocation12], 4
    %932 = vst.msk [vmem:[%s931] sm:$0x3] %vm508, %v929
    %s933 = scalar_lea.vmem [#allocation12], 10
    %934 = vst.msk [vmem:[%s933] sm:$0x3] %vm511, %v926
    %v935 = vsel %vm106, %v929, 0
    %937 = vmatprep.subr.mxu0 0.0
    %938 = vmatpush1.msra.mxu0 %v279
    %939 = vmatprep.subr.mxu0 0.0
    %940 = vmatpush1.msra.mxu0 %v280
    %941 = vmatprep.subr.mxu0 0.0
    %942 = vmatpush1.msra.mxu0 %v281
    %943 = vmatprep.subr.mxu0 0.0
    %944 = vmatpush1.msra.mxu0 %v282
    %945 = vmatprep.subr.mxu0 0.0
    %946 = vmatpush1.msra.mxu0 0.0
    %947 = vmatprep.subr.mxu0 0.0
    %948 = vmatpush1.msra.mxu0 0.0
    %949 = vmatprep.subr.mxu0 0.0
    %950 = vmatpush1.msra.mxu0 0.0
    %951 = vmatprep.subr.mxu0 0.0
    %952 = vmatpush1.msra.mxu0 0.0
    %953 = vmatprep.subr.mxu0 0.0
    %954 = vmatpush1.msra.mxu0 0.0
    %955 = vmatprep.subr.mxu0 0.0
    %956 = vmatpush1.msra.mxu0 0.0
    %957 = vmatprep.subr.mxu0 0.0
    %958 = vmatpush1.msra.mxu0 0.0
    %959 = vmatprep.subr.mxu0 0.0
    %960 = vmatpush1.msra.mxu0 0.0
    %961 = vmatprep.subr.mxu0 0.0
    %962 = vmatpush1.msra.mxu0 0.0
    %963 = vmatprep.subr.mxu0 0.0
    %964 = vmatpush1.msra.mxu0 0.0
    %965 = vmatprep.subr.mxu0 0.0
    %966 = vmatpush1.msra.mxu0 0.0
    %967 = vmatprep.subr.mxu0 0.0
    %968 = vmatpush1.msra.mxu0 0.0
    %969 = vmatprep.subr.mxu0 0.0
    %970 = vmatpush1.msra.mxu0 0.0
    %971 = vmatprep.subr.mxu0 0.0
    %972 = vmatpush1.msra.mxu0 0.0
    %973 = vmatprep.subr.mxu0 0.0
    %974 = vmatpush1.msra.mxu0 0.0
    %975 = vmatprep.subr.mxu0 0.0
    %976 = vmatpush1.msra.mxu0 0.0
    %977 = vmatprep.subr.mxu0 0.0
    %978 = vmatpush1.msra.mxu0 0.0
    %979 = vmatprep.subr.mxu0 0.0
    %980 = vmatpush1.msra.mxu0 0.0
    %981 = vmatprep.subr.mxu0 0.0
    %982 = vmatpush1.msra.mxu0 0.0
    %983 = vmatprep.subr.mxu0 0.0
    %984 = vmatpush1.msra.mxu0 0.0
    %985 = vmatprep.subr.mxu0 0.0
    %986 = vmatpush1.msra.mxu0 0.0
    %987 = vmatprep.subr.mxu0 0.0
    %988 = vmatpush1.msra.mxu0 0.0
    %989 = vmatprep.subr.mxu0 0.0
    %990 = vmatpush1.msra.mxu0 0.0
    %991 = vmatprep.subr.mxu0 0.0
    %992 = vmatpush1.msra.mxu0 0.0
    %993 = vmatprep.subr.mxu0 0.0
    %994 = vmatpush1.msra.mxu0 0.0
    %995 = vmatprep.subr.mxu0 0.0
    %996 = vmatpush1.msra.mxu0 0.0
    %997 = vmatprep.subr.mxu0 0.0
    %998 = vmatpush1.msra.mxu0 0.0
    %999 = vmatprep.subr.mxu0 0.0
    %1000 = vmatpush1.msra.mxu0 0.0
    %1001 = vmatprep.mubr.f32.mxu0 0.0
    %1002 = vmatmul.mubr.f32.gmra.mrb[0].mxu0 %v935
    %v1003 = vpop.f32.mrb[0].mxu0
    %v1004 = vadd.f32 0.0, %v1003
    %v1005 = vpop.f32.mrb[0].mxu0
    %1006 = vdwg.mxu0
    %1008 = vrot.lane.b32.xlu0 %v926, 96
    %v1009 = vpop.permute.xlu0 %1008
    %v1010 = vsel %vm106, %v1009, 0
    %1012 = vmatprep.subr.mxu0 0.0
    %1013 = vmatpush1.msra.mxu0 %v283
    %1014 = vmatprep.subr.mxu0 0.0
    %1015 = vmatpush1.msra.mxu0 %v284
    %1016 = vmatprep.subr.mxu0 0.0
    %1017 = vmatpush1.msra.mxu0 %v285
    %1018 = vmatprep.subr.mxu0 0.0
    %1019 = vmatpush1.msra.mxu0 %v286
    %1020 = vmatprep.subr.mxu0 0.0
    %1021 = vmatpush1.msra.mxu0 0.0
    %1022 = vmatprep.subr.mxu0 0.0
    %1023 = vmatpush1.msra.mxu0 0.0
    %1024 = vmatprep.subr.mxu0 0.0
    %1025 = vmatpush1.msra.mxu0 0.0
    %1026 = vmatprep.subr.mxu0 0.0
    %1027 = vmatpush1.msra.mxu0 0.0
    %1028 = vmatprep.subr.mxu0 0.0
    %1029 = vmatpush1.msra.mxu0 0.0
    %1030 = vmatprep.subr.mxu0 0.0
    %1031 = vmatpush1.msra.mxu0 0.0
    %1032 = vmatprep.subr.mxu0 0.0
    %1033 = vmatpush1.msra.mxu0 0.0
    %1034 = vmatprep.subr.mxu0 0.0
    %1035 = vmatpush1.msra.mxu0 0.0
    %1036 = vmatprep.subr.mxu0 0.0
    %1037 = vmatpush1.msra.mxu0 0.0
    %1038 = vmatprep.subr.mxu0 0.0
    %1039 = vmatpush1.msra.mxu0 0.0
    %1040 = vmatprep.subr.mxu0 0.0
    %1041 = vmatpush1.msra.mxu0 0.0
    %1042 = vmatprep.subr.mxu0 0.0
    %1043 = vmatpush1.msra.mxu0 0.0
    %1044 = vmatprep.subr.mxu0 0.0
    %1045 = vmatpush1.msra.mxu0 0.0
    %1046 = vmatprep.subr.mxu0 0.0
    %1047 = vmatpush1.msra.mxu0 0.0
    %1048 = vmatprep.subr.mxu0 0.0
    %1049 = vmatpush1.msra.mxu0 0.0
    %1050 = vmatprep.subr.mxu0 0.0
    %1051 = vmatpush1.msra.mxu0 0.0
    %1052 = vmatprep.subr.mxu0 0.0
    %1053 = vmatpush1.msra.mxu0 0.0
    %1054 = vmatprep.subr.mxu0 0.0
    %1055 = vmatpush1.msra.mxu0 0.0
    %1056 = vmatprep.subr.mxu0 0.0
    %1057 = vmatpush1.msra.mxu0 0.0
    %1058 = vmatprep.subr.mxu0 0.0
    %1059 = vmatpush1.msra.mxu0 0.0
    %1060 = vmatprep.subr.mxu0 0.0
    %1061 = vmatpush1.msra.mxu0 0.0
    %1062 = vmatprep.subr.mxu0 0.0
    %1063 = vmatpush1.msra.mxu0 0.0
    %1064 = vmatprep.subr.mxu0 0.0
    %1065 = vmatpush1.msra.mxu0 0.0
    %1066 = vmatprep.subr.mxu0 0.0
    %1067 = vmatpush1.msra.mxu0 0.0
    %1068 = vmatprep.subr.mxu0 0.0
    %1069 = vmatpush1.msra.mxu0 0.0
    %1070 = vmatprep.subr.mxu0 0.0
    %1071 = vmatpush1.msra.mxu0 0.0
    %1072 = vmatprep.subr.mxu0 0.0
    %1073 = vmatpush1.msra.mxu0 0.0
    %1074 = vmatprep.subr.mxu0 0.0
    %1075 = vmatpush1.msra.mxu0 0.0
    %1076 = vmatprep.mubr.f32.mxu0 0.0
    %1077 = vmatmul.mubr.f32.gmra.mrb[0].mxu0 %v1010
    %v1078 = vpop.f32.mrb[0].mxu0
    %v1079 = vadd.f32 0.0, %v1078
    %v1080 = vpop.f32.mrb[0].mxu0
    %1081 = vdwg.mxu0
    %v1082 = vld [vmem:[#allocation2 + $0x6] sm:$0x3]
    %v1083 = vld [vmem:[#allocation3 + $0x8] sm:$0x3]
    %v1084 = vadd.f32 %v1082, %v1004
    %v1085 = vxor.u32 %v1084, 2147483648
    %v1086 = vmul.f32 %v1085, 1.442695
    %v1087 = vpow.pop %v1086
    %v1088 = vadd.f32 %v1087, 1.0
    %v1089 = vrcp.pop %v1088
    %v1090 = vmul.f32 1.0, %v1089
    %v1091 = vadd.f32 %v1004, %v447
    %1093 = vrot.lane.b32.xlu0 %v1091, 64
    %v1094 = vpop.permute.xlu0 %1093
    %v1096 = vmul.f32 %v1090, %v1094
    %1098 = vrot.lane.b32.xlu0 %v1096, 64
    %v1099 = vpop.permute.xlu0 %1098
    %v1101 = vadd.f32 %v1082, %v1099
    %v1102 = vtanh.pop %v1101
    %v1103 = vsub.f32 1.0, %v1090
    %1105 = vrot.lane.b32.xlu0 %v1102, 96
    %v1106 = vpop.permute.xlu0 %1105
    %v1108 = vmul.f32 %v1103, %v1106
    %v1109 = vmul.f32 %v1090, %v899
    %v1110 = vadd.f32 %v1108, %v1109
    %v1111 = vadd.f32 %v1083, %v1079
    %v1112 = vxor.u32 %v1111, 2147483648
    %v1113 = vmul.f32 %v1112, 1.442695
    %v1114 = vpow.pop %v1113
    %v1115 = vadd.f32 %v1114, 1.0
    %v1116 = vrcp.pop %v1115
    %v1117 = vmul.f32 1.0, %v1116
    %v1118 = vadd.f32 %v1079, %v482
    %1120 = vrot.lane.b32.xlu0 %v1118, 64
    %v1121 = vpop.permute.xlu0 %1120
    %v1123 = vmul.f32 %v1117, %v1121
    %1125 = vrot.lane.b32.xlu0 %v1123, 64
    %v1126 = vpop.permute.xlu0 %1125
    %v1128 = vadd.f32 %v1083, %v1126
    %v1129 = vtanh.pop %v1128
    %v1130 = vsub.f32 1.0, %v1117
    %1132 = vrot.lane.b32.xlu0 %v1129, 96
    %v1133 = vpop.permute.xlu0 %1132
    %v1135 = vmul.f32 %v1130, %v1133
    %v1136 = vmul.f32 %v1117, %v926
    %v1137 = vadd.f32 %v1135, %v1136
    %1139 = vrot.lane.b32.xlu0 %v1110, 96
    %v1140 = vpop.permute.xlu0 %1139
    %s1142 = scalar_lea.vmem [#allocation12], 6
    %1143 = vst.msk [vmem:[%s1142] sm:$0x3] %vm508, %v1140
    %s1144 = scalar_lea.vmem [#allocation12], 8
    %1145 = vst.msk [vmem:[%s1144] sm:$0x3] %vm511, %v1137
    %v1146 = vsel %vm106, %v1140, 0
    %1148 = vmatprep.subr.mxu0 0.0
    %1149 = vmatpush1.msra.mxu0 %v279
    %1150 = vmatprep.subr.mxu0 0.0
    %1151 = vmatpush1.msra.mxu0 %v280
    %1152 = vmatprep.subr.mxu0 0.0
    %1153 = vmatpush1.msra.mxu0 %v281
    %1154 = vmatprep.subr.mxu0 0.0
    %1155 = vmatpush1.msra.mxu0 %v282
    %1156 = vmatprep.subr.mxu0 0.0
    %1157 = vmatpush1.msra.mxu0 0.0
    %1158 = vmatprep.subr.mxu0 0.0
    %1159 = vmatpush1.msra.mxu0 0.0
    %1160 = vmatprep.subr.mxu0 0.0
    %1161 = vmatpush1.msra.mxu0 0.0
    %1162 = vmatprep.subr.mxu0 0.0
    %1163 = vmatpush1.msra.mxu0 0.0
    %1164 = vmatprep.subr.mxu0 0.0
    %1165 = vmatpush1.msra.mxu0 0.0
    %1166 = vmatprep.subr.mxu0 0.0
    %1167 = vmatpush1.msra.mxu0 0.0
    %1168 = vmatprep.subr.mxu0 0.0
    %1169 = vmatpush1.msra.mxu0 0.0
    %1170 = vmatprep.subr.mxu0 0.0
    %1171 = vmatpush1.msra.mxu0 0.0
    %1172 = vmatprep.subr.mxu0 0.0
    %1173 = vmatpush1.msra.mxu0 0.0
    %1174 = vmatprep.subr.mxu0 0.0
    %1175 = vmatpush1.msra.mxu0 0.0
    %1176 = vmatprep.subr.mxu0 0.0
    %1177 = vmatpush1.msra.mxu0 0.0
    %1178 = vmatprep.subr.mxu0 0.0
    %1179 = vmatpush1.msra.mxu0 0.0
    %1180 = vmatprep.subr.mxu0 0.0
    %1181 = vmatpush1.msra.mxu0 0.0
    %1182 = vmatprep.subr.mxu0 0.0
    %1183 = vmatpush1.msra.mxu0 0.0
    %1184 = vmatprep.subr.mxu0 0.0
    %1185 = vmatpush1.msra.mxu0 0.0
    %1186 = vmatprep.subr.mxu0 0.0
    %1187 = vmatpush1.msra.mxu0 0.0
    %1188 = vmatprep.subr.mxu0 0.0
    %1189 = vmatpush1.msra.mxu0 0.0
    %1190 = vmatprep.subr.mxu0 0.0
    %1191 = vmatpush1.msra.mxu0 0.0
    %1192 = vmatprep.subr.mxu0 0.0
    %1193 = vmatpush1.msra.mxu0 0.0
    %1194 = vmatprep.subr.mxu0 0.0
    %1195 = vmatpush1.msra.mxu0 0.0
    %1196 = vmatprep.subr.mxu0 0.0
    %1197 = vmatpush1.msra.mxu0 0.0
    %1198 = vmatprep.subr.mxu0 0.0
    %1199 = vmatpush1.msra.mxu0 0.0
    %1200 = vmatprep.subr.mxu0 0.0
    %1201 = vmatpush1.msra.mxu0 0.0
    %1202 = vmatprep.subr.mxu0 0.0
    %1203 = vmatpush1.msra.mxu0 0.0
    %1204 = vmatprep.subr.mxu0 0.0
    %1205 = vmatpush1.msra.mxu0 0.0
    %1206 = vmatprep.subr.mxu0 0.0
    %1207 = vmatpush1.msra.mxu0 0.0
    %1208 = vmatprep.subr.mxu0 0.0
    %1209 = vmatpush1.msra.mxu0 0.0
    %1210 = vmatprep.subr.mxu0 0.0
    %1211 = vmatpush1.msra.mxu0 0.0
    %1212 = vmatprep.mubr.f32.mxu0 0.0
    %1213 = vmatmul.mubr.f32.gmra.mrb[0].mxu0 %v1146
    %v1214 = vpop.f32.mrb[0].mxu0
    %v1215 = vadd.f32 0.0, %v1214
    %v1216 = vpop.f32.mrb[0].mxu0
    %1217 = vdwg.mxu0
    %1219 = vrot.lane.b32.xlu0 %v1137, 96
    %v1220 = vpop.permute.xlu0 %1219
    %v1221 = vsel %vm106, %v1220, 0
    %1223 = vmatprep.subr.mxu0 0.0
    %1224 = vmatpush1.msra.mxu0 %v283
    %1225 = vmatprep.subr.mxu0 0.0
    %1226 = vmatpush1.msra.mxu0 %v284
    %1227 = vmatprep.subr.mxu0 0.0
    %1228 = vmatpush1.msra.mxu0 %v285
    %1229 = vmatprep.subr.mxu0 0.0
    %1230 = vmatpush1.msra.mxu0 %v286
    %1231 = vmatprep.subr.mxu0 0.0
    %1232 = vmatpush1.msra.mxu0 0.0
    %1233 = vmatprep.subr.mxu0 0.0
    %1234 = vmatpush1.msra.mxu0 0.0
    %1235 = vmatprep.subr.mxu0 0.0
    %1236 = vmatpush1.msra.mxu0 0.0
    %1237 = vmatprep.subr.mxu0 0.0
    %1238 = vmatpush1.msra.mxu0 0.0
    %1239 = vmatprep.subr.mxu0 0.0
    %1240 = vmatpush1.msra.mxu0 0.0
    %1241 = vmatprep.subr.mxu0 0.0
    %1242 = vmatpush1.msra.mxu0 0.0
    %1243 = vmatprep.subr.mxu0 0.0
    %1244 = vmatpush1.msra.mxu0 0.0
    %1245 = vmatprep.subr.mxu0 0.0
    %1246 = vmatpush1.msra.mxu0 0.0
    %1247 = vmatprep.subr.mxu0 0.0
    %1248 = vmatpush1.msra.mxu0 0.0
    %1249 = vmatprep.subr.mxu0 0.0
    %1250 = vmatpush1.msra.mxu0 0.0
    %1251 = vmatprep.subr.mxu0 0.0
    %1252 = vmatpush1.msra.mxu0 0.0
    %1253 = vmatprep.subr.mxu0 0.0
    %1254 = vmatpush1.msra.mxu0 0.0
    %1255 = vmatprep.subr.mxu0 0.0
    %1256 = vmatpush1.msra.mxu0 0.0
    %1257 = vmatprep.subr.mxu0 0.0
    %1258 = vmatpush1.msra.mxu0 0.0
    %1259 = vmatprep.subr.mxu0 0.0
    %1260 = vmatpush1.msra.mxu0 0.0
    %1261 = vmatprep.subr.mxu0 0.0
    %1262 = vmatpush1.msra.mxu0 0.0
    %1263 = vmatprep.subr.mxu0 0.0
    %1264 = vmatpush1.msra.mxu0 0.0
    %1265 = vmatprep.subr.mxu0 0.0
    %1266 = vmatpush1.msra.mxu0 0.0
    %1267 = vmatprep.subr.mxu0 0.0
    %1268 = vmatpush1.msra.mxu0 0.0
    %1269 = vmatprep.subr.mxu0 0.0
    %1270 = vmatpush1.msra.mxu0 0.0
    %1271 = vmatprep.subr.mxu0 0.0
    %1272 = vmatpush1.msra.mxu0 0.0
    %1273 = vmatprep.subr.mxu0 0.0
    %1274 = vmatpush1.msra.mxu0 0.0
    %1275 = vmatprep.subr.mxu0 0.0
    %1276 = vmatpush1.msra.mxu0 0.0
    %1277 = vmatprep.subr.mxu0 0.0
    %1278 = vmatpush1.msra.mxu0 0.0
    %1279 = vmatprep.subr.mxu0 0.0
    %1280 = vmatpush1.msra.mxu0 0.0
    %1281 = vmatprep.subr.mxu0 0.0
    %1282 = vmatpush1.msra.mxu0 0.0
    %1283 = vmatprep.subr.mxu0 0.0
    %1284 = vmatpush1.msra.mxu0 0.0
    %1285 = vmatprep.subr.mxu0 0.0
    %1286 = vmatpush1.msra.mxu0 0.0
    %1287 = vmatprep.mubr.f32.mxu0 0.0
    %1288 = vmatmul.mubr.f32.gmra.mrb[0].mxu0 %v1221
    %v1289 = vpop.f32.mrb[0].mxu0
    %v1290 = vadd.f32 0.0, %v1289
    %v1291 = vpop.f32.mrb[0].mxu0
    %1292 = vdwg.mxu0
    %v1293 = vld [vmem:[#allocation2 + $0x8] sm:$0x3]
    %v1294 = vld [vmem:[#allocation3 + $0x6] sm:$0x3]
    %v1295 = vadd.f32 %v1293, %v1215
    %v1296 = vxor.u32 %v1295, 2147483648
    %v1297 = vmul.f32 %v1296, 1.442695
    %v1298 = vpow.pop %v1297
    %v1299 = vadd.f32 %v1298, 1.0
    %v1300 = vrcp.pop %v1299
    %v1301 = vmul.f32 1.0, %v1300
    %v1302 = vadd.f32 %v1215, %v447
    %1304 = vrot.lane.b32.xlu0 %v1302, 64
    %v1305 = vpop.permute.xlu0 %1304
    %v1307 = vmul.f32 %v1301, %v1305
    %1309 = vrot.lane.b32.xlu0 %v1307, 64
    %v1310 = vpop.permute.xlu0 %1309
    %v1312 = vadd.f32 %v1293, %v1310
    %v1313 = vtanh.pop %v1312
    %v1314 = vsub.f32 1.0, %v1301
    %1316 = vrot.lane.b32.xlu0 %v1313, 96
    %v1317 = vpop.permute.xlu0 %1316
    %v1319 = vmul.f32 %v1314, %v1317
    %v1320 = vmul.f32 %v1301, %v1110
    %v1321 = vadd.f32 %v1319, %v1320
    %v1322 = vadd.f32 %v1294, %v1290
    %v1323 = vxor.u32 %v1322, 2147483648
    %v1324 = vmul.f32 %v1323, 1.442695
    %v1325 = vpow.pop %v1324
    %v1326 = vadd.f32 %v1325, 1.0
    %v1327 = vrcp.pop %v1326
    %v1328 = vmul.f32 1.0, %v1327
    %v1329 = vadd.f32 %v1290, %v482
    %1331 = vrot.lane.b32.xlu0 %v1329, 64
    %v1332 = vpop.permute.xlu0 %1331
    %v1334 = vmul.f32 %v1328, %v1332
    %1336 = vrot.lane.b32.xlu0 %v1334, 64
    %v1337 = vpop.permute.xlu0 %1336
    %v1339 = vadd.f32 %v1294, %v1337
    %v1340 = vtanh.pop %v1339
    %v1341 = vsub.f32 1.0, %v1328
    %1343 = vrot.lane.b32.xlu0 %v1340, 96
    %v1344 = vpop.permute.xlu0 %1343
    %v1346 = vmul.f32 %v1341, %v1344
    %v1347 = vmul.f32 %v1328, %v1137
    %v1348 = vadd.f32 %v1346, %v1347
    %1350 = vrot.lane.b32.xlu0 %v1321, 96
    %v1351 = vpop.permute.xlu0 %1350
    %1353 = vst.msk [vmem:[%s1144] sm:$0x3] %vm508, %v1351
    %1354 = vst.msk [vmem:[%s1142] sm:$0x3] %vm511, %v1348
    %v1355 = vsel %vm106, %v1351, 0
    %1357 = vmatprep.subr.mxu0 0.0
    %1358 = vmatpush1.msra.mxu0 %v279
    %1359 = vmatprep.subr.mxu0 0.0
    %1360 = vmatpush1.msra.mxu0 %v280
    %1361 = vmatprep.subr.mxu0 0.0
    %1362 = vmatpush1.msra.mxu0 %v281
    %1363 = vmatprep.subr.mxu0 0.0
    %1364 = vmatpush1.msra.mxu0 %v282
    %1365 = vmatprep.subr.mxu0 0.0
    %1366 = vmatpush1.msra.mxu0 0.0
    %1367 = vmatprep.subr.mxu0 0.0
    %1368 = vmatpush1.msra.mxu0 0.0
    %1369 = vmatprep.subr.mxu0 0.0
    %1370 = vmatpush1.msra.mxu0 0.0
    %1371 = vmatprep.subr.mxu0 0.0
    %1372 = vmatpush1.msra.mxu0 0.0
    %1373 = vmatprep.subr.mxu0 0.0
    %1374 = vmatpush1.msra.mxu0 0.0
    %1375 = vmatprep.subr.mxu0 0.0
    %1376 = vmatpush1.msra.mxu0 0.0
    %1377 = vmatprep.subr.mxu0 0.0
    %1378 = vmatpush1.msra.mxu0 0.0
    %1379 = vmatprep.subr.mxu0 0.0
    %1380 = vmatpush1.msra.mxu0 0.0
    %1381 = vmatprep.subr.mxu0 0.0
    %1382 = vmatpush1.msra.mxu0 0.0
    %1383 = vmatprep.subr.mxu0 0.0
    %1384 = vmatpush1.msra.mxu0 0.0
    %1385 = vmatprep.subr.mxu0 0.0
    %1386 = vmatpush1.msra.mxu0 0.0
    %1387 = vmatprep.subr.mxu0 0.0
    %1388 = vmatpush1.msra.mxu0 0.0
    %1389 = vmatprep.subr.mxu0 0.0
    %1390 = vmatpush1.msra.mxu0 0.0
    %1391 = vmatprep.subr.mxu0 0.0
    %1392 = vmatpush1.msra.mxu0 0.0
    %1393 = vmatprep.subr.mxu0 0.0
    %1394 = vmatpush1.msra.mxu0 0.0
    %1395 = vmatprep.subr.mxu0 0.0
    %1396 = vmatpush1.msra.mxu0 0.0
    %1397 = vmatprep.subr.mxu0 0.0
    %1398 = vmatpush1.msra.mxu0 0.0
    %1399 = vmatprep.subr.mxu0 0.0
    %1400 = vmatpush1.msra.mxu0 0.0
    %1401 = vmatprep.subr.mxu0 0.0
    %1402 = vmatpush1.msra.mxu0 0.0
    %1403 = vmatprep.subr.mxu0 0.0
    %1404 = vmatpush1.msra.mxu0 0.0
    %1405 = vmatprep.subr.mxu0 0.0
    %1406 = vmatpush1.msra.mxu0 0.0
    %1407 = vmatprep.subr.mxu0 0.0
    %1408 = vmatpush1.msra.mxu0 0.0
    %1409 = vmatprep.subr.mxu0 0.0
    %1410 = vmatpush1.msra.mxu0 0.0
    %1411 = vmatprep.subr.mxu0 0.0
    %1412 = vmatpush1.msra.mxu0 0.0
    %1413 = vmatprep.subr.mxu0 0.0
    %1414 = vmatpush1.msra.mxu0 0.0
    %1415 = vmatprep.subr.mxu0 0.0
    %1416 = vmatpush1.msra.mxu0 0.0
    %1417 = vmatprep.subr.mxu0 0.0
    %1418 = vmatpush1.msra.mxu0 0.0
    %1419 = vmatprep.subr.mxu0 0.0
    %1420 = vmatpush1.msra.mxu0 0.0
    %1421 = vmatprep.mubr.f32.mxu0 0.0
    %1422 = vmatmul.mubr.f32.gmra.mrb[0].mxu0 %v1355
    %v1423 = vpop.f32.mrb[0].mxu0
    %v1424 = vadd.f32 0.0, %v1423
    %v1425 = vpop.f32.mrb[0].mxu0
    %1426 = vdwg.mxu0
    %1428 = vrot.lane.b32.xlu0 %v1348, 96
    %v1429 = vpop.permute.xlu0 %1428
    %v1430 = vsel %vm106, %v1429, 0
    %1432 = vmatprep.subr.mxu0 0.0
    %1433 = vmatpush1.msra.mxu0 %v283
    %1434 = vmatprep.subr.mxu0 0.0
    %1435 = vmatpush1.msra.mxu0 %v284
    %1436 = vmatprep.subr.mxu0 0.0
    %1437 = vmatpush1.msra.mxu0 %v285
    %1438 = vmatprep.subr.mxu0 0.0
    %1439 = vmatpush1.msra.mxu0 %v286
    %1440 = vmatprep.subr.mxu0 0.0
    %1441 = vmatpush1.msra.mxu0 0.0
    %1442 = vmatprep.subr.mxu0 0.0
    %1443 = vmatpush1.msra.mxu0 0.0
    %1444 = vmatprep.subr.mxu0 0.0
    %1445 = vmatpush1.msra.mxu0 0.0
    %1446 = vmatprep.subr.mxu0 0.0
    %1447 = vmatpush1.msra.mxu0 0.0
    %1448 = vmatprep.subr.mxu0 0.0
    %1449 = vmatpush1.msra.mxu0 0.0
    %1450 = vmatprep.subr.mxu0 0.0
    %1451 = vmatpush1.msra.mxu0 0.0
    %1452 = vmatprep.subr.mxu0 0.0
    %1453 = vmatpush1.msra.mxu0 0.0
    %1454 = vmatprep.subr.mxu0 0.0
    %1455 = vmatpush1.msra.mxu0 0.0
    %1456 = vmatprep.subr.mxu0 0.0
    %1457 = vmatpush1.msra.mxu0 0.0
    %1458 = vmatprep.subr.mxu0 0.0
    %1459 = vmatpush1.msra.mxu0 0.0
    %1460 = vmatprep.subr.mxu0 0.0
    %1461 = vmatpush1.msra.mxu0 0.0
    %1462 = vmatprep.subr.mxu0 0.0
    %1463 = vmatpush1.msra.mxu0 0.0
    %1464 = vmatprep.subr.mxu0 0.0
    %1465 = vmatpush1.msra.mxu0 0.0
    %1466 = vmatprep.subr.mxu0 0.0
    %1467 = vmatpush1.msra.mxu0 0.0
    %1468 = vmatprep.subr.mxu0 0.0
    %1469 = vmatpush1.msra.mxu0 0.0
    %1470 = vmatprep.subr.mxu0 0.0
    %1471 = vmatpush1.msra.mxu0 0.0
    %1472 = vmatprep.subr.mxu0 0.0
    %1473 = vmatpush1.msra.mxu0 0.0
    %1474 = vmatprep.subr.mxu0 0.0
    %1475 = vmatpush1.msra.mxu0 0.0
    %1476 = vmatprep.subr.mxu0 0.0
    %1477 = vmatpush1.msra.mxu0 0.0
    %1478 = vmatprep.subr.mxu0 0.0
    %1479 = vmatpush1.msra.mxu0 0.0
    %1480 = vmatprep.subr.mxu0 0.0
    %1481 = vmatpush1.msra.mxu0 0.0
    %1482 = vmatprep.subr.mxu0 0.0
    %1483 = vmatpush1.msra.mxu0 0.0
    %1484 = vmatprep.subr.mxu0 0.0
    %1485 = vmatpush1.msra.mxu0 0.0
    %1486 = vmatprep.subr.mxu0 0.0
    %1487 = vmatpush1.msra.mxu0 0.0
    %1488 = vmatprep.subr.mxu0 0.0
    %1489 = vmatpush1.msra.mxu0 0.0
    %1490 = vmatprep.subr.mxu0 0.0
    %1491 = vmatpush1.msra.mxu0 0.0
    %1492 = vmatprep.subr.mxu0 0.0
    %1493 = vmatpush1.msra.mxu0 0.0
    %1494 = vmatprep.subr.mxu0 0.0
    %1495 = vmatpush1.msra.mxu0 0.0
    %1496 = vmatprep.mubr.f32.mxu0 0.0
    %1497 = vmatmul.mubr.f32.gmra.mrb[0].mxu0 %v1430
    %v1498 = vpop.f32.mrb[0].mxu0
    %v1499 = vadd.f32 0.0, %v1498
    %v1500 = vpop.f32.mrb[0].mxu0
    %1501 = vdwg.mxu0
    %v1502 = vld [vmem:[#allocation2 + $0xa] sm:$0x3]
    %v1503 = vld [vmem:[#allocation3 + $0x4] sm:$0x3]
    %v1504 = vadd.f32 %v1502, %v1424
    %v1505 = vxor.u32 %v1504, 2147483648
    %v1506 = vmul.f32 %v1505, 1.442695
    %v1507 = vpow.pop %v1506
    %v1508 = vadd.f32 %v1507, 1.0
    %v1509 = vrcp.pop %v1508
    %v1510 = vmul.f32 1.0, %v1509
    %v1511 = vadd.f32 %v1424, %v447
    %1513 = vrot.lane.b32.xlu0 %v1511, 64
    %v1514 = vpop.permute.xlu0 %1513
    %v1516 = vmul.f32 %v1510, %v1514
    %1518 = vrot.lane.b32.xlu0 %v1516, 64
    %v1519 = vpop.permute.xlu0 %1518
    %v1521 = vadd.f32 %v1502, %v1519
    %v1522 = vtanh.pop %v1521
    %v1523 = vsub.f32 1.0, %v1510
    %1525 = vrot.lane.b32.xlu0 %v1522, 96
    %v1526 = vpop.permute.xlu0 %1525
    %v1528 = vmul.f32 %v1523, %v1526
    %v1529 = vmul.f32 %v1510, %v1321
    %v1530 = vadd.f32 %v1528, %v1529
    %v1531 = vadd.f32 %v1503, %v1499
    %v1532 = vxor.u32 %v1531, 2147483648
    %v1533 = vmul.f32 %v1532, 1.442695
    %v1534 = vpow.pop %v1533
    %v1535 = vadd.f32 %v1534, 1.0
    %v1536 = vrcp.pop %v1535
    %v1537 = vmul.f32 1.0, %v1536
    %v1538 = vadd.f32 %v1499, %v482
    %1540 = vrot.lane.b32.xlu0 %v1538, 64
    %v1541 = vpop.permute.xlu0 %1540
    %v1543 = vmul.f32 %v1537, %v1541
    %1545 = vrot.lane.b32.xlu0 %v1543, 64
    %v1546 = vpop.permute.xlu0 %1545
    %v1548 = vadd.f32 %v1503, %v1546
    %v1549 = vtanh.pop %v1548
    %v1550 = vsub.f32 1.0, %v1537
    %1552 = vrot.lane.b32.xlu0 %v1549, 96
    %v1553 = vpop.permute.xlu0 %1552
    %v1555 = vmul.f32 %v1550, %v1553
    %v1556 = vmul.f32 %v1537, %v1348
    %v1557 = vadd.f32 %v1555, %v1556
    %1559 = vrot.lane.b32.xlu0 %v1530, 96
    %v1560 = vpop.permute.xlu0 %1559
    %1562 = vst.msk [vmem:[%s933] sm:$0x3] %vm508, %v1560
    %1563 = vst.msk [vmem:[%s931] sm:$0x3] %vm511, %v1557
    %v1564 = vsel %vm106, %v1560, 0
    %1566 = vmatprep.subr.mxu0 0.0
    %1567 = vmatpush1.msra.mxu0 %v279
    %1568 = vmatprep.subr.mxu0 0.0
    %1569 = vmatpush1.msra.mxu0 %v280
    %1570 = vmatprep.subr.mxu0 0.0
    %1571 = vmatpush1.msra.mxu0 %v281
    %1572 = vmatprep.subr.mxu0 0.0
    %1573 = vmatpush1.msra.mxu0 %v282
    %1574 = vmatprep.subr.mxu0 0.0
    %1575 = vmatpush1.msra.mxu0 0.0
    %1576 = vmatprep.subr.mxu0 0.0
    %1577 = vmatpush1.msra.mxu0 0.0
    %1578 = vmatprep.subr.mxu0 0.0
    %1579 = vmatpush1.msra.mxu0 0.0
    %1580 = vmatprep.subr.mxu0 0.0
    %1581 = vmatpush1.msra.mxu0 0.0
    %1582 = vmatprep.subr.mxu0 0.0
    %1583 = vmatpush1.msra.mxu0 0.0
    %1584 = vmatprep.subr.mxu0 0.0
    %1585 = vmatpush1.msra.mxu0 0.0
    %1586 = vmatprep.subr.mxu0 0.0
    %1587 = vmatpush1.msra.mxu0 0.0
    %1588 = vmatprep.subr.mxu0 0.0
    %1589 = vmatpush1.msra.mxu0 0.0
    %1590 = vmatprep.subr.mxu0 0.0
    %1591 = vmatpush1.msra.mxu0 0.0
    %1592 = vmatprep.subr.mxu0 0.0
    %1593 = vmatpush1.msra.mxu0 0.0
    %1594 = vmatprep.subr.mxu0 0.0
    %1595 = vmatpush1.msra.mxu0 0.0
    %1596 = vmatprep.subr.mxu0 0.0
    %1597 = vmatpush1.msra.mxu0 0.0
    %1598 = vmatprep.subr.mxu0 0.0
    %1599 = vmatpush1.msra.mxu0 0.0
    %1600 = vmatprep.subr.mxu0 0.0
    %1601 = vmatpush1.msra.mxu0 0.0
    %1602 = vmatprep.subr.mxu0 0.0
    %1603 = vmatpush1.msra.mxu0 0.0
    %1604 = vmatprep.subr.mxu0 0.0
    %1605 = vmatpush1.msra.mxu0 0.0
    %1606 = vmatprep.subr.mxu0 0.0
    %1607 = vmatpush1.msra.mxu0 0.0
    %1608 = vmatprep.subr.mxu0 0.0
    %1609 = vmatpush1.msra.mxu0 0.0
    %1610 = vmatprep.subr.mxu0 0.0
    %1611 = vmatpush1.msra.mxu0 0.0
    %1612 = vmatprep.subr.mxu0 0.0
    %1613 = vmatpush1.msra.mxu0 0.0
    %1614 = vmatprep.subr.mxu0 0.0
    %1615 = vmatpush1.msra.mxu0 0.0
    %1616 = vmatprep.subr.mxu0 0.0
    %1617 = vmatpush1.msra.mxu0 0.0
    %1618 = vmatprep.subr.mxu0 0.0
    %1619 = vmatpush1.msra.mxu0 0.0
    %1620 = vmatprep.subr.mxu0 0.0
    %1621 = vmatpush1.msra.mxu0 0.0
    %1622 = vmatprep.subr.mxu0 0.0
    %1623 = vmatpush1.msra.mxu0 0.0
    %1624 = vmatprep.subr.mxu0 0.0
    %1625 = vmatpush1.msra.mxu0 0.0
    %1626 = vmatprep.subr.mxu0 0.0
    %1627 = vmatpush1.msra.mxu0 0.0
    %1628 = vmatprep.subr.mxu0 0.0
    %1629 = vmatpush1.msra.mxu0 0.0
    %1630 = vmatprep.mubr.f32.mxu0 0.0
    %1631 = vmatmul.mubr.f32.gmra.mrb[0].mxu0 %v1564
    %v1632 = vpop.f32.mrb[0].mxu0
    %v1633 = vadd.f32 0.0, %v1632
    %v1634 = vpop.f32.mrb[0].mxu0
    %1635 = vdwg.mxu0
    %1637 = vrot.lane.b32.xlu0 %v1557, 96
    %v1638 = vpop.permute.xlu0 %1637
    %v1639 = vsel %vm106, %v1638, 0
    %1641 = vmatprep.subr.mxu0 0.0
    %1642 = vmatpush1.msra.mxu0 %v283
    %1643 = vmatprep.subr.mxu0 0.0
    %1644 = vmatpush1.msra.mxu0 %v284
    %1645 = vmatprep.subr.mxu0 0.0
    %1646 = vmatpush1.msra.mxu0 %v285
    %1647 = vmatprep.subr.mxu0 0.0
    %1648 = vmatpush1.msra.mxu0 %v286
    %1649 = vmatprep.subr.mxu0 0.0
    %1650 = vmatpush1.msra.mxu0 0.0
    %1651 = vmatprep.subr.mxu0 0.0
    %1652 = vmatpush1.msra.mxu0 0.0
    %1653 = vmatprep.subr.mxu0 0.0
    %1654 = vmatpush1.msra.mxu0 0.0
    %1655 = vmatprep.subr.mxu0 0.0
    %1656 = vmatpush1.msra.mxu0 0.0
    %1657 = vmatprep.subr.mxu0 0.0
    %1658 = vmatpush1.msra.mxu0 0.0
    %1659 = vmatprep.subr.mxu0 0.0
    %1660 = vmatpush1.msra.mxu0 0.0
    %1661 = vmatprep.subr.mxu0 0.0
    %1662 = vmatpush1.msra.mxu0 0.0
    %1663 = vmatprep.subr.mxu0 0.0
    %1664 = vmatpush1.msra.mxu0 0.0
    %1665 = vmatprep.subr.mxu0 0.0
    %1666 = vmatpush1.msra.mxu0 0.0
    %1667 = vmatprep.subr.mxu0 0.0
    %1668 = vmatpush1.msra.mxu0 0.0
    %1669 = vmatprep.subr.mxu0 0.0
    %1670 = vmatpush1.msra.mxu0 0.0
    %1671 = vmatprep.subr.mxu0 0.0
    %1672 = vmatpush1.msra.mxu0 0.0
    %1673 = vmatprep.subr.mxu0 0.0
    %1674 = vmatpush1.msra.mxu0 0.0
    %1675 = vmatprep.subr.mxu0 0.0
    %1676 = vmatpush1.msra.mxu0 0.0
    %1677 = vmatprep.subr.mxu0 0.0
    %1678 = vmatpush1.msra.mxu0 0.0
    %1679 = vmatprep.subr.mxu0 0.0
    %1680 = vmatpush1.msra.mxu0 0.0
    %1681 = vmatprep.subr.mxu0 0.0
    %1682 = vmatpush1.msra.mxu0 0.0
    %1683 = vmatprep.subr.mxu0 0.0
    %1684 = vmatpush1.msra.mxu0 0.0
    %1685 = vmatprep.subr.mxu0 0.0
    %1686 = vmatpush1.msra.mxu0 0.0
    %1687 = vmatprep.subr.mxu0 0.0
    %1688 = vmatpush1.msra.mxu0 0.0
    %1689 = vmatprep.subr.mxu0 0.0
    %1690 = vmatpush1.msra.mxu0 0.0
    %1691 = vmatprep.subr.mxu0 0.0
    %1692 = vmatpush1.msra.mxu0 0.0
    %1693 = vmatprep.subr.mxu0 0.0
    %1694 = vmatpush1.msra.mxu0 0.0
    %1695 = vmatprep.subr.mxu0 0.0
    %1696 = vmatpush1.msra.mxu0 0.0
    %1697 = vmatprep.subr.mxu0 0.0
    %1698 = vmatpush1.msra.mxu0 0.0
    %1699 = vmatprep.subr.mxu0 0.0
    %1700 = vmatpush1.msra.mxu0 0.0
    %1701 = vmatprep.subr.mxu0 0.0
    %1702 = vmatpush1.msra.mxu0 0.0
    %1703 = vmatprep.subr.mxu0 0.0
    %1704 = vmatpush1.msra.mxu0 0.0
    %1705 = vmatprep.mubr.f32.mxu0 0.0
    %1706 = vmatmul.mubr.f32.gmra.mrb[0].mxu0 %v1639
    %v1707 = vpop.f32.mrb[0].mxu0
    %v1708 = vadd.f32 0.0, %v1707
    %v1709 = vpop.f32.mrb[0].mxu0
    %1710 = vdwg.mxu0
    %v1711 = vld [vmem:[#allocation2 + $0xc] sm:$0x3]
    %v1712 = vld [vmem:[#allocation3 + $0x2] sm:$0x3]
    %v1713 = vadd.f32 %v1711, %v1633
    %v1714 = vxor.u32 %v1713, 2147483648
    %v1715 = vmul.f32 %v1714, 1.442695
    %v1716 = vpow.pop %v1715
    %v1717 = vadd.f32 %v1716, 1.0
    %v1718 = vrcp.pop %v1717
    %v1719 = vmul.f32 1.0, %v1718
    %v1720 = vadd.f32 %v1633, %v447
    %1722 = vrot.lane.b32.xlu0 %v1720, 64
    %v1723 = vpop.permute.xlu0 %1722
    %v1725 = vmul.f32 %v1719, %v1723
    %1727 = vrot.lane.b32.xlu0 %v1725, 64
    %v1728 = vpop.permute.xlu0 %1727
    %v1730 = vadd.f32 %v1711, %v1728
    %v1731 = vtanh.pop %v1730
    %v1732 = vsub.f32 1.0, %v1719
    %1734 = vrot.lane.b32.xlu0 %v1731, 96
    %v1735 = vpop.permute.xlu0 %1734
    %v1737 = vmul.f32 %v1732, %v1735
    %v1738 = vmul.f32 %v1719, %v1530
    %v1739 = vadd.f32 %v1737, %v1738
    %v1740 = vadd.f32 %v1712, %v1708
    %v1741 = vxor.u32 %v1740, 2147483648
    %v1742 = vmul.f32 %v1741, 1.442695
    %v1743 = vpow.pop %v1742
    %v1744 = vadd.f32 %v1743, 1.0
    %v1745 = vrcp.pop %v1744
    %v1746 = vmul.f32 1.0, %v1745
    %v1747 = vadd.f32 %v1708, %v482
    %1749 = vrot.lane.b32.xlu0 %v1747, 64
    %v1750 = vpop.permute.xlu0 %1749
    %v1752 = vmul.f32 %v1746, %v1750
    %1754 = vrot.lane.b32.xlu0 %v1752, 64
    %v1755 = vpop.permute.xlu0 %1754
    %v1757 = vadd.f32 %v1712, %v1755
    %v1758 = vtanh.pop %v1757
    %v1759 = vsub.f32 1.0, %v1746
    %1761 = vrot.lane.b32.xlu0 %v1758, 96
    %v1762 = vpop.permute.xlu0 %1761
    %v1764 = vmul.f32 %v1759, %v1762
    %v1765 = vmul.f32 %v1746, %v1557
    %v1766 = vadd.f32 %v1764, %v1765
    %1768 = vrot.lane.b32.xlu0 %v1739, 96
    %v1769 = vpop.permute.xlu0 %1768
    %1771 = vst.msk [vmem:[%s722] sm:$0x3] %vm508, %v1769
    %1772 = vst.msk [vmem:[%s720] sm:$0x3] %vm511, %v1766
    %v1773 = vsel %vm106, %v1769, 0
    %1775 = vmatprep.subr.mxu0 0.0
    %1776 = vmatpush1.msra.mxu0 %v279
    %1777 = vmatprep.subr.mxu0 0.0
    %1778 = vmatpush1.msra.mxu0 %v280
    %1779 = vmatprep.subr.mxu0 0.0
    %1780 = vmatpush1.msra.mxu0 %v281
    %1781 = vmatprep.subr.mxu0 0.0
    %1782 = vmatpush1.msra.mxu0 %v282
    %1783 = vmatprep.subr.mxu0 0.0
    %1784 = vmatpush1.msra.mxu0 0.0
    %1785 = vmatprep.subr.mxu0 0.0
    %1786 = vmatpush1.msra.mxu0 0.0
    %1787 = vmatprep.subr.mxu0 0.0
    %1788 = vmatpush1.msra.mxu0 0.0
    %1789 = vmatprep.subr.mxu0 0.0
    %1790 = vmatpush1.msra.mxu0 0.0
    %1791 = vmatprep.subr.mxu0 0.0
    %1792 = vmatpush1.msra.mxu0 0.0
    %1793 = vmatprep.subr.mxu0 0.0
    %1794 = vmatpush1.msra.mxu0 0.0
    %1795 = vmatprep.subr.mxu0 0.0
    %1796 = vmatpush1.msra.mxu0 0.0
    %1797 = vmatprep.subr.mxu0 0.0
    %1798 = vmatpush1.msra.mxu0 0.0
    %1799 = vmatprep.subr.mxu0 0.0
    %1800 = vmatpush1.msra.mxu0 0.0
    %1801 = vmatprep.subr.mxu0 0.0
    %1802 = vmatpush1.msra.mxu0 0.0
    %1803 = vmatprep.subr.mxu0 0.0
    %1804 = vmatpush1.msra.mxu0 0.0
    %1805 = vmatprep.subr.mxu0 0.0
    %1806 = vmatpush1.msra.mxu0 0.0
    %1807 = vmatprep.subr.mxu0 0.0
    %1808 = vmatpush1.msra.mxu0 0.0
    %1809 = vmatprep.subr.mxu0 0.0
    %1810 = vmatpush1.msra.mxu0 0.0
    %1811 = vmatprep.subr.mxu0 0.0
    %1812 = vmatpush1.msra.mxu0 0.0
    %1813 = vmatprep.subr.mxu0 0.0
    %1814 = vmatpush1.msra.mxu0 0.0
    %1815 = vmatprep.subr.mxu0 0.0
    %1816 = vmatpush1.msra.mxu0 0.0
    %1817 = vmatprep.subr.mxu0 0.0
    %1818 = vmatpush1.msra.mxu0 0.0
    %1819 = vmatprep.subr.mxu0 0.0
    %1820 = vmatpush1.msra.mxu0 0.0
    %1821 = vmatprep.subr.mxu0 0.0
    %1822 = vmatpush1.msra.mxu0 0.0
    %1823 = vmatprep.subr.mxu0 0.0
    %1824 = vmatpush1.msra.mxu0 0.0
    %1825 = vmatprep.subr.mxu0 0.0
    %1826 = vmatpush1.msra.mxu0 0.0
    %1827 = vmatprep.subr.mxu0 0.0
    %1828 = vmatpush1.msra.mxu0 0.0
    %1829 = vmatprep.subr.mxu0 0.0
    %1830 = vmatpush1.msra.mxu0 0.0
    %1831 = vmatprep.subr.mxu0 0.0
    %1832 = vmatpush1.msra.mxu0 0.0
    %1833 = vmatprep.subr.mxu0 0.0
    %1834 = vmatpush1.msra.mxu0 0.0
    %1835 = vmatprep.subr.mxu0 0.0
    %1836 = vmatpush1.msra.mxu0 0.0
    %1837 = vmatprep.subr.mxu0 0.0
    %1838 = vmatpush1.msra.mxu0 0.0
    %1839 = vmatprep.mubr.f32.mxu0 0.0
    %1840 = vmatmul.mubr.f32.gmra.mrb[0].mxu0 %v1773
    %v1841 = vpop.f32.mrb[0].mxu0
    %v1842 = vadd.f32 0.0, %v1841
    %v1843 = vpop.f32.mrb[0].mxu0
    %1844 = vdwg.mxu0
    %1846 = vrot.lane.b32.xlu0 %v1766, 96
    %v1847 = vpop.permute.xlu0 %1846
    %v1848 = vsel %vm106, %v1847, 0
    %1850 = vmatprep.subr.mxu0 0.0
    %1851 = vmatpush1.msra.mxu0 %v283
    %1852 = vmatprep.subr.mxu0 0.0
    %1853 = vmatpush1.msra.mxu0 %v284
    %1854 = vmatprep.subr.mxu0 0.0
    %1855 = vmatpush1.msra.mxu0 %v285
    %1856 = vmatprep.subr.mxu0 0.0
    %1857 = vmatpush1.msra.mxu0 %v286
    %1858 = vmatprep.subr.mxu0 0.0
    %1859 = vmatpush1.msra.mxu0 0.0
    %1860 = vmatprep.subr.mxu0 0.0
    %1861 = vmatpush1.msra.mxu0 0.0
    %1862 = vmatprep.subr.mxu0 0.0
    %1863 = vmatpush1.msra.mxu0 0.0
    %1864 = vmatprep.subr.mxu0 0.0
    %1865 = vmatpush1.msra.mxu0 0.0
    %1866 = vmatprep.subr.mxu0 0.0
    %1867 = vmatpush1.msra.mxu0 0.0
    %1868 = vmatprep.subr.mxu0 0.0
    %1869 = vmatpush1.msra.mxu0 0.0
    %1870 = vmatprep.subr.mxu0 0.0
    %1871 = vmatpush1.msra.mxu0 0.0
    %1872 = vmatprep.subr.mxu0 0.0
    %1873 = vmatpush1.msra.mxu0 0.0
    %1874 = vmatprep.subr.mxu0 0.0
    %1875 = vmatpush1.msra.mxu0 0.0
    %1876 = vmatprep.subr.mxu0 0.0
    %1877 = vmatpush1.msra.mxu0 0.0
    %1878 = vmatprep.subr.mxu0 0.0
    %1879 = vmatpush1.msra.mxu0 0.0
    %1880 = vmatprep.subr.mxu0 0.0
    %1881 = vmatpush1.msra.mxu0 0.0
    %1882 = vmatprep.subr.mxu0 0.0
    %1883 = vmatpush1.msra.mxu0 0.0
    %1884 = vmatprep.subr.mxu0 0.0
    %1885 = vmatpush1.msra.mxu0 0.0
    %1886 = vmatprep.subr.mxu0 0.0
    %1887 = vmatpush1.msra.mxu0 0.0
    %1888 = vmatprep.subr.mxu0 0.0
    %1889 = vmatpush1.msra.mxu0 0.0
    %1890 = vmatprep.subr.mxu0 0.0
    %1891 = vmatpush1.msra.mxu0 0.0
    %1892 = vmatprep.subr.mxu0 0.0
    %1893 = vmatpush1.msra.mxu0 0.0
    %1894 = vmatprep.subr.mxu0 0.0
    %1895 = vmatpush1.msra.mxu0 0.0
    %1896 = vmatprep.subr.mxu0 0.0
    %1897 = vmatpush1.msra.mxu0 0.0
    %1898 = vmatprep.subr.mxu0 0.0
    %1899 = vmatpush1.msra.mxu0 0.0
    %1900 = vmatprep.subr.mxu0 0.0
    %1901 = vmatpush1.msra.mxu0 0.0
    %1902 = vmatprep.subr.mxu0 0.0
    %1903 = vmatpush1.msra.mxu0 0.0
    %1904 = vmatprep.subr.mxu0 0.0
    %1905 = vmatpush1.msra.mxu0 0.0
    %1906 = vmatprep.subr.mxu0 0.0
    %1907 = vmatpush1.msra.mxu0 0.0
    %1908 = vmatprep.subr.mxu0 0.0
    %1909 = vmatpush1.msra.mxu0 0.0
    %1910 = vmatprep.subr.mxu0 0.0
    %1911 = vmatpush1.msra.mxu0 0.0
    %1912 = vmatprep.subr.mxu0 0.0
    %1913 = vmatpush1.msra.mxu0 0.0
    %1914 = vmatprep.mubr.f32.mxu0 0.0
    %1915 = vmatmul.mubr.f32.gmra.mrb[0].mxu0 %v1848
    %v1916 = vpop.f32.mrb[0].mxu0
    %v1917 = vadd.f32 0.0, %v1916
    %v1918 = vpop.f32.mrb[0].mxu0
    %1919 = vdwg.mxu0
    %v1920 = vld [vmem:[#allocation2 + $0xe] sm:$0x3]
    %v1921 = vld [vmem:[#allocation3] sm:$0x3]
    %v1922 = vadd.f32 %v1920, %v1842
    %v1923 = vxor.u32 %v1922, 2147483648
    %v1924 = vmul.f32 %v1923, 1.442695
    %v1925 = vpow.pop %v1924
    %v1926 = vadd.f32 %v1925, 1.0
    %v1927 = vrcp.pop %v1926
    %v1928 = vmul.f32 1.0, %v1927
    %v1929 = vadd.f32 %v1842, %v447
    %1931 = vrot.lane.b32.xlu0 %v1929, 64
    %v1932 = vpop.permute.xlu0 %1931
    %v1934 = vmul.f32 %v1928, %v1932
    %1936 = vrot.lane.b32.xlu0 %v1934, 64
    %v1937 = vpop.permute.xlu0 %1936
    %v1939 = vadd.f32 %v1920, %v1937
    %v1940 = vtanh.pop %v1939
    %v1941 = vsub.f32 1.0, %v1928
    %1943 = vrot.lane.b32.xlu0 %v1940, 96
    %v1944 = vpop.permute.xlu0 %1943
    %v1946 = vmul.f32 %v1941, %v1944
    %v1947 = vmul.f32 %v1928, %v1739
    %v1948 = vadd.f32 %v1946, %v1947
    %v1949 = vadd.f32 %v1921, %v1917
    %v1950 = vxor.u32 %v1949, 2147483648
    %v1951 = vmul.f32 %v1950, 1.442695
    %v1952 = vpow.pop %v1951
    %v1953 = vadd.f32 %v1952, 1.0
    %v1954 = vrcp.pop %v1953
    %v1955 = vmul.f32 1.0, %v1954
    %v1956 = vadd.f32 %v1917, %v482
    %1958 = vrot.lane.b32.xlu0 %v1956, 64
    %v1959 = vpop.permute.xlu0 %1958
    %v1961 = vmul.f32 %v1955, %v1959
    %1963 = vrot.lane.b32.xlu0 %v1961, 64
    %v1964 = vpop.permute.xlu0 %1963
    %v1966 = vadd.f32 %v1921, %v1964
    %v1967 = vtanh.pop %v1966
    %v1968 = vsub.f32 1.0, %v1955
    %1970 = vrot.lane.b32.xlu0 %v1967, 96
    %v1971 = vpop.permute.xlu0 %1970
    %v1973 = vmul.f32 %v1968, %v1971
    %v1974 = vmul.f32 %v1955, %v1766
    %v1975 = vadd.f32 %v1973, %v1974
    %1977 = vrot.lane.b32.xlu0 %v1948, 96
    %v1978 = vpop.permute.xlu0 %1977
    %1980 = vst.msk [vmem:[%s510] sm:$0x3] %vm508, %v1978
    %1981 = vst.msk [vmem:[#allocation12] sm:$0x3] %vm511, %v1975
    %v1982 = vld [vmem:[%s9] sm:$0xff]
    %v1983 = vld [vmem:[%s9 + $0x8] sm:$0xff]
    %v1984 = vld [vmem:[%s9 + $0x10] sm:$0xff]
    %v1985 = vld [vmem:[%s9 + $0x18] sm:$0xff]
    %v1986 = vld [vmem:[%s9 + $0x20] sm:$0xff]
    %v1987 = vld [vmem:[%s9 + $0x28] sm:$0xff]
    %v1988 = vld [vmem:[%s9 + $0x30] sm:$0xff]
    %v1989 = vld [vmem:[%s9 + $0x38] sm:$0xff]
    %1991 = vrot.lane.b32.xlu0 %v1975, 96
    %v1992 = vpop.permute.xlu0 %1991
    %v1993 = vsel %vm106, %v1992, 0
    %1995 = vmatprep.subr.mxu0 0.0
    %1996 = vmatpush1.msra.mxu0 %v1986
    %1997 = vmatprep.subr.mxu0 0.0
    %1998 = vmatpush1.msra.mxu0 %v1987
    %1999 = vmatprep.subr.mxu0 0.0
    %2000 = vmatpush1.msra.mxu0 %v1988
    %2001 = vmatprep.subr.mxu0 0.0
    %2002 = vmatpush1.msra.mxu0 %v1989
    %2003 = vmatprep.subr.mxu0 0.0
    %2004 = vmatpush1.msra.mxu0 0.0
    %2005 = vmatprep.subr.mxu0 0.0
    %2006 = vmatpush1.msra.mxu0 0.0
    %2007 = vmatprep.subr.mxu0 0.0
    %2008 = vmatpush1.msra.mxu0 0.0
    %2009 = vmatprep.subr.mxu0 0.0
    %2010 = vmatpush1.msra.mxu0 0.0
    %2011 = vmatprep.subr.mxu0 0.0
    %2012 = vmatpush1.msra.mxu0 0.0
    %2013 = vmatprep.subr.mxu0 0.0
    %2014 = vmatpush1.msra.mxu0 0.0
    %2015 = vmatprep.subr.mxu0 0.0
    %2016 = vmatpush1.msra.mxu0 0.0
    %2017 = vmatprep.subr.mxu0 0.0
    %2018 = vmatpush1.msra.mxu0 0.0
    %2019 = vmatprep.subr.mxu0 0.0
    %2020 = vmatpush1.msra.mxu0 0.0
    %2021 = vmatprep.subr.mxu0 0.0
    %2022 = vmatpush1.msra.mxu0 0.0
    %2023 = vmatprep.subr.mxu0 0.0
    %2024 = vmatpush1.msra.mxu0 0.0
    %2025 = vmatprep.subr.mxu0 0.0
    %2026 = vmatpush1.msra.mxu0 0.0
    %2027 = vmatprep.subr.mxu0 0.0
    %2028 = vmatpush1.msra.mxu0 0.0
    %2029 = vmatprep.subr.mxu0 0.0
    %2030 = vmatpush1.msra.mxu0 0.0
    %2031 = vmatprep.subr.mxu0 0.0
    %2032 = vmatpush1.msra.mxu0 0.0
    %2033 = vmatprep.subr.mxu0 0.0
    %2034 = vmatpush1.msra.mxu0 0.0
    %2035 = vmatprep.subr.mxu0 0.0
    %2036 = vmatpush1.msra.mxu0 0.0
    %2037 = vmatprep.subr.mxu0 0.0
    %2038 = vmatpush1.msra.mxu0 0.0
    %2039 = vmatprep.subr.mxu0 0.0
    %2040 = vmatpush1.msra.mxu0 0.0
    %2041 = vmatprep.subr.mxu0 0.0
    %2042 = vmatpush1.msra.mxu0 0.0
    %2043 = vmatprep.subr.mxu0 0.0
    %2044 = vmatpush1.msra.mxu0 0.0
    %2045 = vmatprep.subr.mxu0 0.0
    %2046 = vmatpush1.msra.mxu0 0.0
    %2047 = vmatprep.subr.mxu0 0.0
    %2048 = vmatpush1.msra.mxu0 0.0
    %2049 = vmatprep.subr.mxu0 0.0
    %2050 = vmatpush1.msra.mxu0 0.0
    %2051 = vmatprep.subr.mxu0 0.0
    %2052 = vmatpush1.msra.mxu0 0.0
    %2053 = vmatprep.subr.mxu0 0.0
    %2054 = vmatpush1.msra.mxu0 0.0
    %2055 = vmatprep.subr.mxu0 0.0
    %2056 = vmatpush1.msra.mxu0 0.0
    %2057 = vmatprep.subr.mxu0 0.0
    %2058 = vmatpush1.msra.mxu0 0.0
    %2059 = vmatprep.mubr.f32.mxu0 0.0
    %2060 = vmatmul.mubr.f32.gmra.mrb[0].mxu0 %v1993
    %v2061 = vpop.f32.mrb[0].mxu0
    %v2062 = vadd.f32 0.0, %v2061
    %v2063 = vpop.f32.mrb[0].mxu0
    %2064 = vdwg.mxu0
    %v2065 = vsel %vm106, %v1978, 0
    %2067 = vmatprep.subr.mxu0 0.0
    %2068 = vmatpush1.msra.mxu0 %v1982
    %2069 = vmatprep.subr.mxu0 0.0
    %2070 = vmatpush1.msra.mxu0 %v1983
    %2071 = vmatprep.subr.mxu0 0.0
    %2072 = vmatpush1.msra.mxu0 %v1984
    %2073 = vmatprep.subr.mxu0 0.0
    %2074 = vmatpush1.msra.mxu0 %v1985
    %2075 = vmatprep.subr.mxu0 0.0
    %2076 = vmatpush1.msra.mxu0 0.0
    %2077 = vmatprep.subr.mxu0 0.0
    %2078 = vmatpush1.msra.mxu0 0.0
    %2079 = vmatprep.subr.mxu0 0.0
    %2080 = vmatpush1.msra.mxu0 0.0
    %2081 = vmatprep.subr.mxu0 0.0
    %2082 = vmatpush1.msra.mxu0 0.0
    %2083 = vmatprep.subr.mxu0 0.0
    %2084 = vmatpush1.msra.mxu0 0.0
    %2085 = vmatprep.subr.mxu0 0.0
    %2086 = vmatpush1.msra.mxu0 0.0
    %2087 = vmatprep.subr.mxu0 0.0
    %2088 = vmatpush1.msra.mxu0 0.0
    %2089 = vmatprep.subr.mxu0 0.0
    %2090 = vmatpush1.msra.mxu0 0.0
    %2091 = vmatprep.subr.mxu0 0.0
    %2092 = vmatpush1.msra.mxu0 0.0
    %2093 = vmatprep.subr.mxu0 0.0
    %2094 = vmatpush1.msra.mxu0 0.0
    %2095 = vmatprep.subr.mxu0 0.0
    %2096 = vmatpush1.msra.mxu0 0.0
    %2097 = vmatprep.subr.mxu0 0.0
    %2098 = vmatpush1.msra.mxu0 0.0
    %2099 = vmatprep.subr.mxu0 0.0
    %2100 = vmatpush1.msra.mxu0 0.0
    %2101 = vmatprep.subr.mxu0 0.0
    %2102 = vmatpush1.msra.mxu0 0.0
    %2103 = vmatprep.subr.mxu0 0.0
    %2104 = vmatpush1.msra.mxu0 0.0
    %2105 = vmatprep.subr.mxu0 0.0
    %2106 = vmatpush1.msra.mxu0 0.0
    %2107 = vmatprep.subr.mxu0 0.0
    %2108 = vmatpush1.msra.mxu0 0.0
    %2109 = vmatprep.subr.mxu0 0.0
    %2110 = vmatpush1.msra.mxu0 0.0
    %2111 = vmatprep.subr.mxu0 0.0
    %2112 = vmatpush1.msra.mxu0 0.0
    %2113 = vmatprep.subr.mxu0 0.0
    %2114 = vmatpush1.msra.mxu0 0.0
    %2115 = vmatprep.subr.mxu0 0.0
    %2116 = vmatpush1.msra.mxu0 0.0
    %2117 = vmatprep.subr.mxu0 0.0
    %2118 = vmatpush1.msra.mxu0 0.0
    %2119 = vmatprep.subr.mxu0 0.0
    %2120 = vmatpush1.msra.mxu0 0.0
    %2121 = vmatprep.subr.mxu0 0.0
    %2122 = vmatpush1.msra.mxu0 0.0
    %2123 = vmatprep.subr.mxu0 0.0
    %2124 = vmatpush1.msra.mxu0 0.0
    %2125 = vmatprep.subr.mxu0 0.0
    %2126 = vmatpush1.msra.mxu0 0.0
    %2127 = vmatprep.subr.mxu0 0.0
    %2128 = vmatpush1.msra.mxu0 0.0
    %2129 = vmatprep.subr.mxu0 0.0
    %2130 = vmatpush1.msra.mxu0 0.0
    %2131 = vmatprep.mubr.f32.mxu0 0.0
    %2132 = vmatmul.mubr.f32.gmra.mrb[0].mxu0 %v2065
    %v2133 = vpop.f32.mrb[0].mxu0
    %v2134 = vadd.f32 %v2062, %v2133
    %v2135 = vpop.f32.mrb[0].mxu0
    %2136 = vdwg.mxu0
    %v2137 = vld [vmem:[%s10] sm:$0x1]
    %v2139 = vlaneseq
    %v2140 = vshrl.u32 %v2139, 7
    %v2141 = vsub.s32 0, %v2140
    %v2142 = vrot.slane %v2137, %v2141
    %v2144 = vadd.f32 %v2134, %v2142
    %v2145 = vtanh.pop %v2144
    %2146 = vst.msk [vmem:[#allocation13] sm:$0x3] %vm508, %v2145
    // Predicated region
    $region62: #{tpu_custom_call.1} parent=1 // pred_check
      _
    $region63: #{tpu_custom_call.1} parent=1 // pred_check_branch
      %2148 = sbr.rel (0) target = $region65
    $region64: #{tpu_custom_call.1} parent=1 // pred_region
      %s2150 = ssub.s32 256, 256
      %2151 = vsyncadd [#allocation6], %s2150
      %s2152 = sshll.u32 [#allocation12], 4
      %s2153 = int_to_ptr.vmem [resolvable:$true] %s2152
      %2158 = dma.vmem_to_hbm [thread:$0]  %s2153, 256, %s11, [#allocation6], 32, 32, 2
    $region65: #{tpu_custom_call.1} parent=1 // pred_fallthru
      _
    // Predicated region
    $region66: #{tpu_custom_call.1} parent=1 // pred_check
      _
    $region67: #{tpu_custom_call.1} parent=1 // pred_check_branch
      %2160 = sbr.rel (0) target = $region69
    $region68: #{tpu_custom_call.1} parent=1 // pred_region
      %s2162 = ssub.s32 32, 32
      %2163 = vsyncadd [#allocation14], %s2162
      %s2165 = sshll.u32 [#allocation13], 4
      %s2166 = int_to_ptr.vmem [resolvable:$true] %s2165
      %2168 = dma.vmem_to_hbm [thread:$0]  %s2166, 32, %s12, [#allocation14]
    $region69: #{tpu_custom_call.1} parent=1 // pred_fallthru
      _
    // Predicated region
    $region70: #{tpu_custom_call.1} parent=1 // pred_check
      _
    $region71: #{tpu_custom_call.1} parent=1 // pred_check_branch
      %2170 = sbr.rel (0) target = $region73
    $region72: #{tpu_custom_call.1} parent=1 // pred_region
      %2171 = dma.done [#allocation6], 256
    $region73: #{tpu_custom_call.1} parent=1 // pred_fallthru
      _
    // Predicated region
    $region74: #{tpu_custom_call.1} parent=1 // pred_check
      _
    $region75: #{tpu_custom_call.1} parent=1 // pred_check_branch
      %2173 = sbr.rel (0) target = $region77
    $region76: #{tpu_custom_call.1} parent=1 // pred_region
      %2174 = dma.done [#allocation14], 32
    $region77: #{tpu_custom_call.1} parent=1 // pred_fallthru
      _
    %2175 = vsyncpa [#allocation5], 1
    %2176 = vsyncpa [#allocation8], 1
    %2177 = vsyncpa [#allocation11], 1
    %2178 = vsyncpa [#allocation6], 1
    %2179 = vsyncpa [#allocation14], 1

</llo_original>
